<compile_context>
chip_gen: v7x
topology: tpu7x:2x2x1
jax: 0.10.0
libtpu: 0.0.40
codegen_flags: <defaults>
</compile_context>

<pallas_src>
import functools

import jax
import jax.numpy as jnp
from jax.experimental import pallas as pl
from jax.experimental.pallas import tpu as pltpu


# ------------------------------ Pallas kernels ------------------------------ #

def _shift_cat(x, width, colmask):
    """Lane-concat [x | x_r | x_d | x_dr] for a flat (H*W, C) channels-last block.

    x       : (M, C)  activations, flat row-major over (row, col), `width` cols per row.
    colmask : (M, 1)  1 everywhere except 0 at flat positions whose col == width-1.
    returns : (M, 4*C)
      x_r [i] = x[row, col+1]   (0 past the right edge)
      x_d [i] = x[row+1, col]   (0 past the bottom edge)
      x_dr[i] = x[row+1, col+1]
    """
    m, c = x.shape
    z1 = jnp.zeros((1, c), x.dtype)
    zw = jnp.zeros((width, c), x.dtype)
    # col+1  ==  flat shift by 1, then zero the wrapped column.
    xr = jnp.concatenate([x[1:], z1], axis=0) * colmask
    # row+1  ==  flat shift by `width` (last `width` rows become zeros: bottom edge).
    xd = jnp.concatenate([x[width:], zw], axis=0)
    # row+1, col+1.
    xdr = jnp.concatenate([xr[width:], zw], axis=0)
    return jnp.concatenate([x, xr, xd, xdr], axis=1)


def _neck_up1_kernel(x_ref, mask_ref, w1_ref, b1_ref, w2_ref, b2_ref, o_ref, *, width):
    """Fused [1x1 conv + BN + ReLU] + [deconv(3,s2,p1,op1) + BN + ReLU] for one batch elem.

    x_ref  : (1, M, Cin)     flat channels-last input rows (M = H*W), bf16
    mask   : (M, 1)          column-boundary mask
    w1_ref : (Cin, Cmid)     1x1 conv weight, BN1 scale folded
    b1_ref : (1, Cmid)       BN1 shift (f32)
    w2_ref : (4*Cmid, 4*C)   packed deconv taps (K blocks [x00,xr,xd,xdr], N blocks [ee,eo,oe,oo])
    b2_ref : (1, 4*C)        BN2 shift tiled over the 4 sub-pixels (f32)
    o_ref  : (1, 2, M, 2*C)  [even output rows | odd output rows], dc packed in lanes
    """
    x = x_ref[0]
    h = jnp.dot(x, w1_ref[...], preferred_element_type=jnp.float32)
    h = jnp.maximum(h + b1_ref[...], 0.0).astype(x.dtype)          # (M, Cmid) bf16
    xo = _shift_cat(h, width, mask_ref[...])                       # (M, 4*Cmid)
    p = jnp.dot(xo, w2_ref[...], preferred_element_type=jnp.float32)  # (M, 4*C) f32
    y = jnp.maximum(p + b2_ref[...], 0.0)
    c2 = o_ref.shape[3]
    o_ref[0, 0, :, :] = y[:, :c2].astype(o_ref.dtype)              # even rows  [ee|eo]
    o_ref[0, 1, :, :] = y[:, c2:].astype(o_ref.dtype)              # odd  rows  [oe|oo]


def _up2_kernel(x_ref, mask_ref, w_ref, b_ref, o_ref, *, width):
    """deconv(3,s2,p1,op1) + BN + ReLU for one batch element (same packing as above)."""
    x = x_ref[0]
    xo = _shift_cat(x, width, mask_ref[...])                       # (M, 4*C)
    p = jnp.dot(xo, w_ref[...], preferred_element_type=jnp.float32)
    y = jnp.maximum(p + b_ref[...], 0.0)
    c2 = o_ref.shape[3]
    o_ref[0, 0, :, :] = y[:, :c2].astype(o_ref.dtype)
    o_ref[0, 1, :, :] = y[:, c2:].astype(o_ref.dtype)


# ------------------------------- module glue -------------------------------- #

def bn_fold(gamma, beta, mean, var, eps=1e-5):
    scale = gamma / jnp.sqrt(var + eps)
    shift = beta - mean * scale
    return scale, shift


def _pack_deconv_weight(wt, scale, dtype):
    """Pack ConvTranspose2d(k=3,s=2,p=1,op=1) taps into one (4*Cin, 4*Cout) matrix.

    Sub-pixel decomposition (output y at (2m+dr, 2n+dc), W[kh,kw] = wt[:,:,kh,kw]):
      ee = x00@W11
      eo = x00@W12 + x_r@W10
      oe = x00@W21 + x_d@W01
      oo = x00@W22 + x_r@W20 + x_d@W02 + x_dr@W00
    K blocks (rows)   : [x00, x_r, x_d, x_dr]
    N blocks (columns): [ee, eo, oe, oo]
    BN scale is folded into every tap.
    """
    cin, cout = wt.shape[:2]
    wf = wt.astype(jnp.float32) * scale[None, :, None, None]
    t = lambda kh, kw: wf[:, :, kh, kw]
    z = jnp.zeros((cin, cout), jnp.float32)
    rows = [
        jnp.concatenate([t(1, 1), t(1, 2), t(2, 1), t(2, 2)], axis=1),  # x00
        jnp.concatenate([z,       t(1, 0), z,       t(2, 0)], axis=1),  # x_r
        jnp.concatenate([z,       z,       t(0, 1), t(0, 2)], axis=1),  # x_d
        jnp.concatenate([z,       z,       z,       t(0, 0)], axis=1),  # x_dr
    ]
    return jnp.concatenate(rows, axis=0).astype(dtype)


def _col_mask(m, width, dtype):
    """(m, 1) mask: 0 at flat positions on the last column of each row, else 1."""
    return ((jnp.arange(m) % width) != (width - 1)).astype(dtype).reshape(m, 1)


def init_params(key, in_channels=256, out_channels=64, mid_channels=128):
    """Deterministic Kaiming-normal-style init; BN at default stats (eval mode)."""
    k1, k2, k3 = jax.random.split(key, 3)
    w_neck = jax.random.normal(k1, (mid_channels, in_channels), jnp.float32) * jnp.sqrt(
        2.0 / mid_channels)
    w_up1 = jax.random.normal(k2, (mid_channels, out_channels, 3, 3), jnp.float32) * jnp.sqrt(
        2.0 / (mid_channels * 9))
    w_up2 = jax.random.normal(k3, (out_channels, out_channels, 3, 3), jnp.float32) * jnp.sqrt(
        2.0 / (out_channels * 9))

    def bn(c):
        return dict(gamma=jnp.ones((c,), jnp.float32), beta=jnp.zeros((c,), jnp.float32),
                    mean=jnp.zeros((c,), jnp.float32), var=jnp.ones((c,), jnp.float32))

    return dict(w_neck=w_neck, bn_neck=bn(mid_channels),
                w_up1=w_up1, bn_up1=bn(out_channels),
                w_up2=w_up2, bn_up2=bn(out_channels))


def upconv_neck_forward(params, x_nchw, *, compute_dtype=jnp.bfloat16):
    """Forward pass. x: (B, Cin, H, W) f32 -> (B, Cout, 4H, 4W) f32 NCHW."""
    B, Cin, H1, W1 = x_nchw.shape
    Cmid = params['w_neck'].shape[0]
    C = params['w_up1'].shape[1]
    M1 = H1 * W1
    H2, W2 = 2 * H1, 2 * W1
    M2 = H2 * W2

    # ---- fold BatchNorm (eval mode) into weights / shifts (tiny, constant-folded) ----
    s1, t1 = bn_fold(**params['bn_neck'])
    w1 = (params['w_neck'].astype(jnp.float32) * s1[:, None]).T.astype(compute_dtype)
    b1 = t1.reshape(1, Cmid).astype(jnp.float32)

    s2, t2 = bn_fold(**params['bn_up1'])
    wp2 = _pack_deconv_weight(params['w_up1'], s2, compute_dtype)       # (4*Cmid, 4*C)
    b2 = jnp.tile(t2, 4).reshape(1, 4 * C).astype(jnp.float32)

    s3, t3 = bn_fold(**params['bn_up2'])
    wp3 = _pack_deconv_weight(params['w_up2'], s3, compute_dtype)       # (4*C, 4*C)
    b3 = jnp.tile(t3, 4).reshape(1, 4 * C).astype(jnp.float32)

    # ---- NCHW -> flat channels-last bf16 (one small fused transpose+cast in XLA) ----
    x_l = jnp.transpose(x_nchw.reshape(B, Cin, M1), (0, 2, 1)).astype(compute_dtype)
    mask1 = _col_mask(M1, W1, compute_dtype)
    mask2 = _col_mask(M2, W2, compute_dtype)

    # ---- call 1: fused 1x1 conv + BN + ReLU + deconv1 + BN + ReLU ----
    out1 = pl.pallas_call(
        functools.partial(_neck_up1_kernel, width=W1),
        out_shape=jax.ShapeDtypeStruct((B, 2, M1, 2 * C), compute_dtype),
        grid=(B,),
        in_specs=[
            pl.BlockSpec((1, M1, Cin), lambda b: (b, 0, 0)),
            pl.BlockSpec((M1, 1), lambda b: (0, 0)),
            pl.BlockSpec((Cin, Cmid), lambda b: (0, 0)),
            pl.BlockSpec((1, Cmid), lambda b: (0, 0)),
            pl.BlockSpec((4 * Cmid, 4 * C), lambda b: (0, 0)),
            pl.BlockSpec((1, 4 * C), lambda b: (0, 0)),
        ],
        out_specs=pl.BlockSpec((1, 2, M1, 2 * C), lambda b: (b, 0, 0, 0)),
        compiler_params=pltpu.CompilerParams(dimension_semantics=("parallel",)),
    )(x_l, mask1, w1, b1, wp2, b2)

    # Pixel-shuffle the row parity between the two deconv stages (~0.4 MB XLA copy):
    # (B, 2, H1, W1, 2, C) -> (B, H1, 2, W1, 2, C) -> (B, 2H1*2W1, C) flat row-major.
    y2 = (out1.reshape(B, 2, H1, W1, 2, C)
               .transpose(0, 2, 1, 3, 4, 5)
               .reshape(B, M2, C))

    # ---- call 2: deconv2 + BN + ReLU ----
    out2 = pl.pallas_call(
        functools.partial(_up2_kernel, width=W2),
        out_shape=jax.ShapeDtypeStruct((B, 2, M2, 2 * C), jnp.float32),
        grid=(B,),
        in_specs=[
            pl.BlockSpec((1, M2, C), lambda b: (b, 0, 0)),
            pl.BlockSpec((M2, 1), lambda b: (0, 0)),
            pl.BlockSpec((4 * C, 4 * C), lambda b: (0, 0)),
            pl.BlockSpec((1, 4 * C), lambda b: (0, 0)),
        ],
        out_specs=pl.BlockSpec((1, 2, M2, 2 * C), lambda b: (b, 0, 0, 0)),
        compiler_params=pltpu.CompilerParams(dimension_semantics=("parallel",)),
    )(y2, mask2, wp3, b3)

    # Final pixel-shuffle folded into the NCHW output transpose (single XLA copy):
    # (B, 2, H2, W2, 2, C) -> (B, C, H2, 2, W2, 2) -> (B, C, 2H2, 2W2).
    y = (out2.reshape(B, 2, H2, W2, 2, C)
             .transpose(0, 5, 2, 1, 3, 4)
             .reshape(B, C, 2 * H2, 2 * W2))
    return y


# ---------------------------- pure-JAX reference ----------------------------- #

def reference_forward(params, x_nchw, compute_dtype=jnp.float32, eps=1e-5):
    """lax-conv reference with the same precision policy (BN folded, f32 accumulation)."""

    def fold(bn):
        scale = bn['gamma'] / jnp.sqrt(bn['var'] + eps)
        shift = bn['beta'] - bn['mean'] * scale
        return scale, shift

    def conv1x1(x, w_oi, bn):
        scale, shift = fold(bn)
        w = (w_oi * scale[:, None])[:, :, None, None].astype(compute_dtype)
        y = jax.lax.conv_general_dilated(
            x.astype(compute_dtype), w, (1, 1), 'VALID',
            dimension_numbers=('NCHW', 'OIHW', 'NCHW'),
            precision=jax.lax.Precision.HIGHEST,
            preferred_element_type=jnp.float32)
        return jnp.maximum(y + shift[None, :, None, None], 0.0)

    def deconv(x, wt, bn):
        scale, shift = fold(bn)
        wt_f = wt * scale[None, :, None, None]
        w_conv = jnp.flip(wt_f, (2, 3)).transpose(1, 0, 2, 3).astype(compute_dtype)
        y = jax.lax.conv_general_dilated(
            x.astype(compute_dtype), w_conv, window_strides=(1, 1),
            padding=((1, 2), (1, 2)), lhs_dilation=(2, 2),
            dimension_numbers=('NCHW', 'OIHW', 'NCHW'),
            precision=jax.lax.Precision.HIGHEST,
            preferred_element_type=jnp.float32)
        return jnp.maximum(y + shift[None, :, None, None], 0.0)

    y = conv1x1(x_nchw, params['w_neck'], params['bn_neck'])
    y = deconv(y, params['w_up1'], params['bn_up1'])
    y = deconv(y, params['w_up2'], params['bn_up2'])
    return y


# ----------------------------------- main ------------------------------------ #

if __name__ == "__main__":
    key = jax.random.PRNGKey(0)
    kp, kx = jax.random.split(key)

    # Module docstring scale: input [B, 256, 10, 20] -> output [B, 64, 40, 80]
    B, Cin, H, W = 2, 256, 10, 20
    Cout = 64
    params = init_params(kp, in_channels=Cin, out_channels=Cout, mid_channels=128)
    x = jax.random.normal(kx, (B, Cin, H, W), jnp.float32)

    fwd = jax.jit(functools.partial(upconv_neck_forward, params))
    out = jax.block_until_ready(fwd(x))
    assert out.shape == (B, Cout, 4 * H, 4 * W), out.shape

    # Tight check vs a reference using the identical bf16 precision policy.
    ref_bf16 = reference_forward(params, x, compute_dtype=jnp.bfloat16)
    err_bf16 = float(jnp.max(jnp.abs(out - ref_bf16)))
    assert jnp.allclose(out, ref_bf16, rtol=2e-2, atol=2e-2), f"max abs err = {err_bf16}"

    # Loose sanity check vs the full-f32 reference (bf16 quantization noise only).
    ref_f32 = reference_forward(params, x, compute_dtype=jnp.float32)
    err_f32 = float(jnp.max(jnp.abs(out - ref_f32)))
    assert jnp.allclose(out, ref_f32, rtol=2e-1, atol=2e-1), f"max abs err = {err_f32}"

    print("KERNEL_OK")
</pallas_src>

<mosaic_0001>
module attributes {stable_mosaic.version = 11 : i64} {
  func.func @_neck_up1_kernel(%arg0: i32, %arg1: memref<1x200x256xbf16, #tpu.memory_space<vmem>>, %arg2: memref<200x1xbf16, #tpu.memory_space<vmem>>, %arg3: memref<256x128xbf16, #tpu.memory_space<vmem>>, %arg4: memref<1x128xf32, #tpu.memory_space<vmem>>, %arg5: memref<512x256xbf16, #tpu.memory_space<vmem>>, %arg6: memref<1x256xf32, #tpu.memory_space<vmem>>, %arg7: memref<1x2x200x128xbf16, #tpu.memory_space<vmem>>) attributes {dimension_semantics = [#tpu.dimension_semantics<parallel>], iteration_bounds = array<i64: 2>, scalar_prefetch = 0 : i64, scratch_operands = 0 : i64, tpu.core_type = #tpu.core_type<tc>, window_params = [{transform_indices = @transform_0, window_bounds = array<i64: 1, 200, 256>}, {pipeline_mode = #tpu.pipeline_mode<synchronous>, transform_indices = @transform_1, window_bounds = array<i64: 200, 1>}, {pipeline_mode = #tpu.pipeline_mode<synchronous>, transform_indices = @transform_2, window_bounds = array<i64: 256, 128>}, {pipeline_mode = #tpu.pipeline_mode<synchronous>, transform_indices = @transform_3, window_bounds = array<i64: 1, 128>}, {pipeline_mode = #tpu.pipeline_mode<synchronous>, transform_indices = @transform_4, window_bounds = array<i64: 512, 256>}, {pipeline_mode = #tpu.pipeline_mode<synchronous>, transform_indices = @transform_5, window_bounds = array<i64: 1, 256>}, {transform_indices = @transform_6, window_bounds = array<i64: 1, 2, 200, 128>}]} {
    %c0 = arith.constant 0 : index
    %c0_0 = arith.constant 0 : index
    %c0_1 = arith.constant 0 : index
    %0 = vector.load %arg1[%c0, %c0_0, %c0_1] : memref<1x200x256xbf16, #tpu.memory_space<vmem>>, vector<1x200x256xbf16>
    %1 = vector.shape_cast %0 : vector<1x200x256xbf16> to vector<200x256xbf16>
    %c0_2 = arith.constant 0 : index
    %c0_3 = arith.constant 0 : index
    %2 = vector.load %arg3[%c0_2, %c0_3] : memref<256x128xbf16, #tpu.memory_space<vmem>>, vector<256x128xbf16>
    %cst = arith.constant dense<0.000000e+00> : vector<200x128xf32>
    %3 = tpu.matmul %1, %2, %cst {dimension_numbers = #tpu.dot_dimension_numbers<[1], [0], [0], [1], [0, 0, 1, 1], [], []>} : vector<200x256xbf16>, vector<256x128xbf16>, vector<200x128xf32> -> vector<200x128xf32>
    %c0_4 = arith.constant 0 : index
    %c0_5 = arith.constant 0 : index
    %4 = vector.load %arg4[%c0_4, %c0_5] : memref<1x128xf32, #tpu.memory_space<vmem>>, vector<1x128xf32>
    %5 = vector.broadcast %4 : vector<1x128xf32> to vector<200x128xf32>
    %6 = arith.addf %3, %5 : vector<200x128xf32>
    %cst_6 = arith.constant 0.000000e+00 : f32
    %7 = vector.broadcast %cst_6 : f32 to vector<200x128xf32>
    %8 = arith.maximumf %6, %7 : vector<200x128xf32>
    %9 = arith.truncf %8 : vector<200x128xf32> to vector<200x128xbf16>
    %c0_7 = arith.constant 0 : index
    %c0_8 = arith.constant 0 : index
    %10 = vector.load %arg2[%c0_7, %c0_8] : memref<200x1xbf16, #tpu.memory_space<vmem>>, vector<200x1xbf16>
    %cst_9 = arith.constant 0.000000e+00 : bf16
    %11 = vector.broadcast %cst_9 : bf16 to vector<1x128xbf16>
    %cst_10 = arith.constant 0.000000e+00 : bf16
    %12 = vector.broadcast %cst_10 : bf16 to vector<20x128xbf16>
    %13 = vector.extract_strided_slice %9 {offsets = [1, 0], sizes = [199, 128], strides = [1, 1]} : vector<200x128xbf16> to vector<199x128xbf16>
    %14 = tpu.concatenate %13, %11 in 0 : vector<199x128xbf16>, vector<1x128xbf16> -> vector<200x128xbf16>
    %15 = vector.broadcast %10 : vector<200x1xbf16> to vector<200x128xbf16>
    %16 = arith.mulf %14, %15 : vector<200x128xbf16>
    %17 = vector.extract_strided_slice %9 {offsets = [20, 0], sizes = [180, 128], strides = [1, 1]} : vector<200x128xbf16> to vector<180x128xbf16>
    %18 = tpu.concatenate %17, %12 in 0 : vector<180x128xbf16>, vector<20x128xbf16> -> vector<200x128xbf16>
    %19 = vector.extract_strided_slice %16 {offsets = [20, 0], sizes = [180, 128], strides = [1, 1]} : vector<200x128xbf16> to vector<180x128xbf16>
    %20 = tpu.concatenate %19, %12 in 0 : vector<180x128xbf16>, vector<20x128xbf16> -> vector<200x128xbf16>
    %21 = tpu.concatenate %9, %16, %18, %20 in 1 : vector<200x128xbf16>, vector<200x128xbf16>, vector<200x128xbf16>, vector<200x128xbf16> -> vector<200x512xbf16>
    %c0_11 = arith.constant 0 : index
    %c0_12 = arith.constant 0 : index
    %22 = vector.load %arg5[%c0_11, %c0_12] : memref<512x256xbf16, #tpu.memory_space<vmem>>, vector<512x256xbf16>
    %cst_13 = arith.constant dense<0.000000e+00> : vector<200x256xf32>
    %23 = tpu.matmul %21, %22, %cst_13 {dimension_numbers = #tpu.dot_dimension_numbers<[1], [0], [0], [1], [0, 0, 1, 1], [], []>} : vector<200x512xbf16>, vector<512x256xbf16>, vector<200x256xf32> -> vector<200x256xf32>
    %c0_14 = arith.constant 0 : index
    %c0_15 = arith.constant 0 : index
    %24 = vector.load %arg6[%c0_14, %c0_15] : memref<1x256xf32, #tpu.memory_space<vmem>>, vector<1x256xf32>
    %25 = vector.broadcast %24 : vector<1x256xf32> to vector<200x256xf32>
    %26 = arith.addf %23, %25 : vector<200x256xf32>
    %cst_16 = arith.constant 0.000000e+00 : f32
    %27 = vector.broadcast %cst_16 : f32 to vector<200x256xf32>
    %28 = arith.maximumf %26, %27 : vector<200x256xf32>
    %29 = vector.extract_strided_slice %28 {offsets = [0, 0], sizes = [200, 128], strides = [1, 1]} : vector<200x256xf32> to vector<200x128xf32>
    %30 = arith.truncf %29 : vector<200x128xf32> to vector<200x128xbf16>
    %c0_17 = arith.constant 0 : index
    %c0_18 = arith.constant 0 : index
    %c0_19 = arith.constant 0 : index
    %c0_20 = arith.constant 0 : index
    %31 = vector.load %arg7[%c0_17, %c0_18, %c0_19, %c0_20] : memref<1x2x200x128xbf16, #tpu.memory_space<vmem>>, vector<1x1x200x128xbf16>
    %32 = vector.shape_cast %31 : vector<1x1x200x128xbf16> to vector<200x128xbf16>
    %33 = vector.shape_cast %30 : vector<200x128xbf16> to vector<1x1x200x128xbf16>
    tpu.vector_store %arg7[%c0_17, %c0_18, %c0_19, %c0_20], %33 {strides = array<i32>} : memref<1x2x200x128xbf16, #tpu.memory_space<vmem>>, vector<1x1x200x128xbf16>,
    %34 = vector.extract_strided_slice %28 {offsets = [0, 128], sizes = [200, 128], strides = [1, 1]} : vector<200x256xf32> to vector<200x128xf32>
    %35 = arith.truncf %34 : vector<200x128xf32> to vector<200x128xbf16>
    %c0_21 = arith.constant 0 : index
    %c1 = arith.constant 1 : index
    %c0_22 = arith.constant 0 : index
    %c0_23 = arith.constant 0 : index
    %36 = vector.load %arg7[%c0_21, %c1, %c0_22, %c0_23] : memref<1x2x200x128xbf16, #tpu.memory_space<vmem>>, vector<1x1x200x128xbf16>
    %37 = vector.shape_cast %36 : vector<1x1x200x128xbf16> to vector<200x128xbf16>
    %38 = vector.shape_cast %35 : vector<200x128xbf16> to vector<1x1x200x128xbf16>
    tpu.vector_store %arg7[%c0_21, %c1, %c0_22, %c0_23], %38 {strides = array<i32>} : memref<1x2x200x128xbf16, #tpu.memory_space<vmem>>, vector<1x1x200x128xbf16>,
    return
  }
  func.func @transform_0(%arg0: i32) -> (i32, i32, i32) {
    %c0_i32 = arith.constant 0 : i32
    %c0_i32_0 = arith.constant 0 : i32
    %c0_i32_1 = arith.constant 0 : i32
    return %arg0, %c0_i32, %c0_i32_0 : i32, i32, i32
  }
  func.func @transform_1(%arg0: i32) -> (i32, i32) {
    %c0_i32 = arith.constant 0 : i32
    %c0_i32_0 = arith.constant 0 : i32
    %c0_i32_1 = arith.constant 0 : i32
    return %c0_i32, %c0_i32_0 : i32, i32
  }
  func.func @transform_2(%arg0: i32) -> (i32, i32) {
    %c0_i32 = arith.constant 0 : i32
    %c0_i32_0 = arith.constant 0 : i32
    %c0_i32_1 = arith.constant 0 : i32
    return %c0_i32, %c0_i32_0 : i32, i32
  }
  func.func @transform_3(%arg0: i32) -> (i32, i32) {
    %c0_i32 = arith.constant 0 : i32
    %c0_i32_0 = arith.constant 0 : i32
    %c0_i32_1 = arith.constant 0 : i32
    return %c0_i32, %c0_i32_0 : i32, i32
  }
  func.func @transform_4(%arg0: i32) -> (i32, i32) {
    %c0_i32 = arith.constant 0 : i32
    %c0_i32_0 = arith.constant 0 : i32
    %c0_i32_1 = arith.constant 0 : i32
    return %c0_i32, %c0_i32_0 : i32, i32
  }
  func.func @transform_5(%arg0: i32) -> (i32, i32) {
    %c0_i32 = arith.constant 0 : i32
    %c0_i32_0 = arith.constant 0 : i32
    %c0_i32_1 = arith.constant 0 : i32
    return %c0_i32, %c0_i32_0 : i32, i32
  }
  func.func @transform_6(%arg0: i32) -> (i32, i32, i32, i32) {
    %c0_i32 = arith.constant 0 : i32
    %c0_i32_0 = arith.constant 0 : i32
    %c0_i32_1 = arith.constant 0 : i32
    %c0_i32_2 = arith.constant 0 : i32
    return %arg0, %c0_i32, %c0_i32_0, %c0_i32_1 : i32, i32, i32, i32
  }
}

module attributes {stable_mosaic.version = 11 : i64} {
  func.func @_up2_kernel(%arg0: i32, %arg1: memref<1x800x64xbf16, #tpu.memory_space<vmem>>, %arg2: memref<800x1xbf16, #tpu.memory_space<vmem>>, %arg3: memref<256x256xbf16, #tpu.memory_space<vmem>>, %arg4: memref<1x256xf32, #tpu.memory_space<vmem>>, %arg5: memref<1x2x800x128xf32, #tpu.memory_space<vmem>>) attributes {dimension_semantics = [#tpu.dimension_semantics<parallel>], iteration_bounds = array<i64: 2>, scalar_prefetch = 0 : i64, scratch_operands = 0 : i64, tpu.core_type = #tpu.core_type<tc>, window_params = [{transform_indices = @transform_0, window_bounds = array<i64: 1, 800, 64>}, {pipeline_mode = #tpu.pipeline_mode<synchronous>, transform_indices = @transform_1, window_bounds = array<i64: 800, 1>}, {pipeline_mode = #tpu.pipeline_mode<synchronous>, transform_indices = @transform_2, window_bounds = array<i64: 256, 256>}, {pipeline_mode = #tpu.pipeline_mode<synchronous>, transform_indices = @transform_3, window_bounds = array<i64: 1, 256>}, {transform_indices = @transform_4, window_bounds = array<i64: 1, 2, 800, 128>}]} {
    %c0 = arith.constant 0 : index
    %c0_0 = arith.constant 0 : index
    %c0_1 = arith.constant 0 : index
    %0 = vector.load %arg1[%c0, %c0_0, %c0_1] : memref<1x800x64xbf16, #tpu.memory_space<vmem>>, vector<1x800x64xbf16>
    %1 = vector.shape_cast %0 : vector<1x800x64xbf16> to vector<800x64xbf16>
    %c0_2 = arith.constant 0 : index
    %c0_3 = arith.constant 0 : index
    %2 = vector.load %arg2[%c0_2, %c0_3] : memref<800x1xbf16, #tpu.memory_space<vmem>>, vector<800x1xbf16>
    %cst = arith.constant 0.000000e+00 : bf16
    %3 = vector.broadcast %cst : bf16 to vector<1x64xbf16>
    %cst_4 = arith.constant 0.000000e+00 : bf16
    %4 = vector.broadcast %cst_4 : bf16 to vector<40x64xbf16>
    %5 = vector.extract_strided_slice %1 {offsets = [1, 0], sizes = [799, 64], strides = [1, 1]} : vector<800x64xbf16> to vector<799x64xbf16>
    %6 = tpu.concatenate %5, %3 in 0 : vector<799x64xbf16>, vector<1x64xbf16> -> vector<800x64xbf16>
    %7 = vector.broadcast %2 : vector<800x1xbf16> to vector<800x64xbf16>
    %8 = arith.mulf %6, %7 : vector<800x64xbf16>
    %9 = vector.extract_strided_slice %1 {offsets = [40, 0], sizes = [760, 64], strides = [1, 1]} : vector<800x64xbf16> to vector<760x64xbf16>
    %10 = tpu.concatenate %9, %4 in 0 : vector<760x64xbf16>, vector<40x64xbf16> -> vector<800x64xbf16>
    %11 = vector.extract_strided_slice %8 {offsets = [40, 0], sizes = [760, 64], strides = [1, 1]} : vector<800x64xbf16> to vector<760x64xbf16>
    %12 = tpu.concatenate %11, %4 in 0 : vector<760x64xbf16>, vector<40x64xbf16> -> vector<800x64xbf16>
    %13 = tpu.concatenate %1, %8, %10, %12 in 1 : vector<800x64xbf16>, vector<800x64xbf16>, vector<800x64xbf16>, vector<800x64xbf16> -> vector<800x256xbf16>
    %c0_5 = arith.constant 0 : index
    %c0_6 = arith.constant 0 : index
    %14 = vector.load %arg3[%c0_5, %c0_6] : memref<256x256xbf16, #tpu.memory_space<vmem>>, vector<256x256xbf16>
    %cst_7 = arith.constant dense<0.000000e+00> : vector<800x256xf32>
    %15 = tpu.matmul %13, %14, %cst_7 {dimension_numbers = #tpu.dot_dimension_numbers<[1], [0], [0], [1], [0, 0, 1, 1], [], []>} : vector<800x256xbf16>, vector<256x256xbf16>, vector<800x256xf32> -> vector<800x256xf32>
    %c0_8 = arith.constant 0 : index
    %c0_9 = arith.constant 0 : index
    %16 = vector.load %arg4[%c0_8, %c0_9] : memref<1x256xf32, #tpu.memory_space<vmem>>, vector<1x256xf32>
    %17 = vector.broadcast %16 : vector<1x256xf32> to vector<800x256xf32>
    %18 = arith.addf %15, %17 : vector<800x256xf32>
    %cst_10 = arith.constant 0.000000e+00 : f32
    %19 = vector.broadcast %cst_10 : f32 to vector<800x256xf32>
    %20 = arith.maximumf %18, %19 : vector<800x256xf32>
    %21 = vector.extract_strided_slice %20 {offsets = [0, 0], sizes = [800, 128], strides = [1, 1]} : vector<800x256xf32> to vector<800x128xf32>
    %c0_11 = arith.constant 0 : index
    %c0_12 = arith.constant 0 : index
    %c0_13 = arith.constant 0 : index
    %c0_14 = arith.constant 0 : index
    %22 = vector.load %arg5[%c0_11, %c0_12, %c0_13, %c0_14] : memref<1x2x800x128xf32, #tpu.memory_space<vmem>>, vector<1x1x800x128xf32>
    %23 = vector.shape_cast %22 : vector<1x1x800x128xf32> to vector<800x128xf32>
    %24 = vector.shape_cast %21 : vector<800x128xf32> to vector<1x1x800x128xf32>
    tpu.vector_store %arg5[%c0_11, %c0_12, %c0_13, %c0_14], %24 {strides = array<i32>} : memref<1x2x800x128xf32, #tpu.memory_space<vmem>>, vector<1x1x800x128xf32>,
    %25 = vector.extract_strided_slice %20 {offsets = [0, 128], sizes = [800, 128], strides = [1, 1]} : vector<800x256xf32> to vector<800x128xf32>
    %c0_15 = arith.constant 0 : index
    %c1 = arith.constant 1 : index
    %c0_16 = arith.constant 0 : index
    %c0_17 = arith.constant 0 : index
    %26 = vector.load %arg5[%c0_15, %c1, %c0_16, %c0_17] : memref<1x2x800x128xf32, #tpu.memory_space<vmem>>, vector<1x1x800x128xf32>
    %27 = vector.shape_cast %26 : vector<1x1x800x128xf32> to vector<800x128xf32>
    %28 = vector.shape_cast %25 : vector<800x128xf32> to vector<1x1x800x128xf32>
    tpu.vector_store %arg5[%c0_15, %c1, %c0_16, %c0_17], %28 {strides = array<i32>} : memref<1x2x800x128xf32, #tpu.memory_space<vmem>>, vector<1x1x800x128xf32>,
    return
  }
  func.func @transform_0(%arg0: i32) -> (i32, i32, i32) {
    %c0_i32 = arith.constant 0 : i32
    %c0_i32_0 = arith.constant 0 : i32
    %c0_i32_1 = arith.constant 0 : i32
    return %arg0, %c0_i32, %c0_i32_0 : i32, i32, i32
  }
  func.func @transform_1(%arg0: i32) -> (i32, i32) {
    %c0_i32 = arith.constant 0 : i32
    %c0_i32_0 = arith.constant 0 : i32
    %c0_i32_1 = arith.constant 0 : i32
    return %c0_i32, %c0_i32_0 : i32, i32
  }
  func.func @transform_2(%arg0: i32) -> (i32, i32) {
    %c0_i32 = arith.constant 0 : i32
    %c0_i32_0 = arith.constant 0 : i32
    %c0_i32_1 = arith.constant 0 : i32
    return %c0_i32, %c0_i32_0 : i32, i32
  }
  func.func @transform_3(%arg0: i32) -> (i32, i32) {
    %c0_i32 = arith.constant 0 : i32
    %c0_i32_0 = arith.constant 0 : i32
    %c0_i32_1 = arith.constant 0 : i32
    return %c0_i32, %c0_i32_0 : i32, i32
  }
  func.func @transform_4(%arg0: i32) -> (i32, i32, i32, i32) {
    %c0_i32 = arith.constant 0 : i32
    %c0_i32_0 = arith.constant 0 : i32
    %c0_i32_1 = arith.constant 0 : i32
    %c0_i32_2 = arith.constant 0 : i32
    return %arg0, %c0_i32, %c0_i32_0, %c0_i32_1 : i32, i32, i32, i32
  }
}

</mosaic_0001>

<llo_original>
// kernel: upconv_neck_forward.2
$region0: #{upconv_neck_forward.2}
  #allocation0 [shape = 'u32[]', space=smem, size = 0x4, offset = 0x4, fixed_abs, tag = 'smem constant byte address 0x4 - core index']
  #allocation1 [shape = 'u32[144,128]{1,0:T(1,128)}', space=vmem, size = 0x12000, scoped, tag = 'internal scratch']
  %s0 = inlined_call_operand.vmem [shape: bf16[2,200,256], index: 0, kind: input, shape index: {}]
  %s1 = inlined_call_operand.vmem [shape: bf16[200,1], index: 1, kind: input, shape index: {}]
  %s2 = inlined_call_operand.hbm [shape: bf16[256,128], index: 2, kind: input, shape index: {}]
  %s3 = inlined_call_operand.vmem [shape: f32[1,128], index: 3, kind: input, shape index: {}]
  %s4 = inlined_call_operand.vmem [shape: bf16[512,256], index: 4, kind: input, shape index: {}]
  %s5 = inlined_call_operand.vmem [shape: f32[1,256], index: 5, kind: input, shape index: {}]
  %s6 = inlined_call_operand.vmem [shape: bf16[2,2,200,128], index: 6, kind: output, shape index: {}]
  %s7 = sld [smem:[#allocation0]]
  $region61: #{upconv_neck_forward.2} parent=0
    _
  %s9 = ssub.s32 1, %s7
  %s10 = scalar_select 0, %s9, %s7
  $region1: #{upconv_neck_forward.2} parent=0
    #allocation2 [shape = 'u8[65536]{0}', space=vmem, size = 0x10000, scoped, tag = 'input window, operand 2, single buffered']
    #allocation3 [shape = 's32[2]{0}', space=sflag, size = 0x8, scoped, tag = 'scoped memory for upconv_neck_forward.2']
    %11 = vsyncpa [#allocation3], 0
    loop: start=0, step=1, limit=4
    $region2: #{upconv_neck_forward.2} parent=1 // loop_pre_header
      _
    $region3: #{upconv_neck_forward.2} parent=1 // loop_header
      %s13 = sphi 0, %s17
      %p14 = scmp.ge.s32.totalorder %s13, 4
      %s23 = sphi 0, %s25
      %s26 = sphi 0, %s23
      %s27 = sphi 0, %s26
      %s43 = sphi 0, %s27
      %s47 = sphi 0, %s47
      %s49 = sphi 0, %s47
      %s50 = sphi 0, %s49
      %s64 = sphi 0, %s50
      %s68 = sphi 0, %s68
      %s70 = sphi 0, %s68
      %s71 = sphi 0, %s70
      %s85 = sphi 0, %s71
      %s89 = sphi 0, %s89
      %s91 = sphi 0, %s89
      %s92 = sphi 0, %s91
      %s106 = sphi 0, %s92
      %s110 = sphi 0, %s110
      %s112 = sphi 0, %s110
      %s113 = sphi 0, %s112
      %s127 = sphi 0, %s113
      %s131 = sphi 0, %s131
      %s133 = sphi 0, %s131
      %s134 = sphi 0, %s133
      %s148 = sphi 0, %s134
      %s154 = sphi 0, %s156
      %s157 = sphi 0, %s154
      %s158 = sphi 0, %s157
      %s174 = sphi 0, %s158
    $region4: #{upconv_neck_forward.2} parent=1 // loop_header_branch
      %16 = sbr.rel (%p14) target = $region8
    $region5: #{upconv_neck_forward.2} parent=1 // loop_body
      %s18 = ssub.s32 %s13, 1
      %s19 = ssub.s32 %s13, 2
      %s20 = sadd.s32 %s13, 1
      %s21 = ssub.s32 %s13, %s20
      %p22 = scmp.eq.s32.totalorder %s21, 0
      %s24 = sadd.s32 %s23, 1
      %s25 = scalar_select %p22, %s23, %s24
      %p28 = pneg %p22
      %p29 = scmp.eq.s32.totalorder %s13, 1
      %p30 = por %p28, %p29
      %p31 = scmp.ne.s32.totalorder %s23, %s26
      %p32 = scmp.eq.s32.totalorder %s13, 0
      %p33 = por %p31, %p32
      %p34 = scmp.ne.s32.totalorder %s23, %s26
      %p35 = scmp.eq.s32.totalorder %s18, 1
      %p36 = por %p34, %p35
      %p37 = scmp.ne.s32.totalorder %s26, %s27
      %p38 = scmp.eq.s32.totalorder %s18, 0
      %p39 = por %p37, %p38
      %p40 = scmp.ne.s32.totalorder %s26, %s27
      %p41 = scmp.eq.s32.totalorder %s19, 1
      %p42 = por %p40, %p41
      %p44 = scmp.ne.s32.totalorder %s27, %s43
      %p45 = scmp.eq.s32.totalorder %s19, 0
      %p46 = por %p44, %p45
      %s48 = sadd.s32 %s47, 1
      %p51 = scmp.eq.s32.totalorder %s13, 1
      %p52 = scmp.ne.s32.totalorder %s47, %s49
      %p53 = scmp.eq.s32.totalorder %s13, 0
      %p54 = por %p52, %p53
      %p55 = scmp.ne.s32.totalorder %s47, %s49
      %p56 = scmp.eq.s32.totalorder %s18, 1
      %p57 = por %p55, %p56
      %p58 = scmp.ne.s32.totalorder %s49, %s50
      %p59 = scmp.eq.s32.totalorder %s18, 0
      %p60 = por %p58, %p59
      %p61 = scmp.ne.s32.totalorder %s49, %s50
      %p62 = scmp.eq.s32.totalorder %s19, 1
      %p63 = por %p61, %p62
      %p65 = scmp.ne.s32.totalorder %s50, %s64
      %p66 = scmp.eq.s32.totalorder %s19, 0
      %p67 = por %p65, %p66
      %s69 = sadd.s32 %s68, 1
      %p72 = scmp.eq.s32.totalorder %s13, 1
      %p73 = scmp.ne.s32.totalorder %s68, %s70
      %p74 = scmp.eq.s32.totalorder %s13, 0
      %p75 = por %p73, %p74
      %p76 = scmp.ne.s32.totalorder %s68, %s70
      %p77 = scmp.eq.s32.totalorder %s18, 1
      %p78 = por %p76, %p77
      %p79 = scmp.ne.s32.totalorder %s70, %s71
      %p80 = scmp.eq.s32.totalorder %s18, 0
      %p81 = por %p79, %p80
      %p82 = scmp.ne.s32.totalorder %s70, %s71
      %p83 = scmp.eq.s32.totalorder %s19, 1
      %p84 = por %p82, %p83
      %p86 = scmp.ne.s32.totalorder %s71, %s85
      %p87 = scmp.eq.s32.totalorder %s19, 0
      %p88 = por %p86, %p87
      %s90 = sadd.s32 %s89, 1
      %p93 = scmp.eq.s32.totalorder %s13, 1
      %p94 = scmp.ne.s32.totalorder %s89, %s91
      %p95 = scmp.eq.s32.totalorder %s13, 0
      %p96 = por %p94, %p95
      %p97 = scmp.ne.s32.totalorder %s89, %s91
      %p98 = scmp.eq.s32.totalorder %s18, 1
      %p99 = por %p97, %p98
      %p100 = scmp.ne.s32.totalorder %s91, %s92
      %p101 = scmp.eq.s32.totalorder %s18, 0
      %p102 = por %p100, %p101
      %p103 = scmp.ne.s32.totalorder %s91, %s92
      %p104 = scmp.eq.s32.totalorder %s19, 1
      %p105 = por %p103, %p104
      %p107 = scmp.ne.s32.totalorder %s92, %s106
      %p108 = scmp.eq.s32.totalorder %s19, 0
      %p109 = por %p107, %p108
      %s111 = sadd.s32 %s110, 1
      %p114 = scmp.eq.s32.totalorder %s13, 1
      %p115 = scmp.ne.s32.totalorder %s110, %s112
      %p116 = scmp.eq.s32.totalorder %s13, 0
      %p117 = por %p115, %p116
      %p118 = scmp.ne.s32.totalorder %s110, %s112
      %p119 = scmp.eq.s32.totalorder %s18, 1
      %p120 = por %p118, %p119
      %p121 = scmp.ne.s32.totalorder %s112, %s113
      %p122 = scmp.eq.s32.totalorder %s18, 0
      %p123 = por %p121, %p122
      %p124 = scmp.ne.s32.totalorder %s112, %s113
      %p125 = scmp.eq.s32.totalorder %s19, 1
      %p126 = por %p124, %p125
      %p128 = scmp.ne.s32.totalorder %s113, %s127
      %p129 = scmp.eq.s32.totalorder %s19, 0
      %p130 = por %p128, %p129
      %s132 = sadd.s32 %s131, 1
      %p135 = scmp.eq.s32.totalorder %s13, 1
      %p136 = scmp.ne.s32.totalorder %s131, %s133
      %p137 = scmp.eq.s32.totalorder %s13, 0
      %p138 = por %p136, %p137
      %p139 = scmp.ne.s32.totalorder %s131, %s133
      %p140 = scmp.eq.s32.totalorder %s18, 1
      %p141 = por %p139, %p140
      %p142 = scmp.ne.s32.totalorder %s133, %s134
      %p143 = scmp.eq.s32.totalorder %s18, 0
      %p144 = por %p142, %p143
      %p145 = scmp.ne.s32.totalorder %s133, %s134
      %p146 = scmp.eq.s32.totalorder %s19, 1
      %p147 = por %p145, %p146
      %p149 = scmp.ne.s32.totalorder %s134, %s148
      %p150 = scmp.eq.s32.totalorder %s19, 0
      %p151 = por %p149, %p150
      %s152 = ssub.s32 %s13, %s20
      %p153 = scmp.eq.s32.totalorder %s152, 0
      %s155 = sadd.s32 %s154, 1
      %s156 = scalar_select %p153, %s154, %s155
      %p159 = pneg %p153
      %p160 = scmp.eq.s32.totalorder %s13, 1
      %p161 = por %p159, %p160
      %p162 = scmp.ne.s32.totalorder %s154, %s157
      %p163 = scmp.eq.s32.totalorder %s13, 0
      %p164 = por %p162, %p163
      %p165 = scmp.ne.s32.totalorder %s154, %s157
      %p166 = scmp.eq.s32.totalorder %s18, 1
      %p167 = por %p165, %p166
      %p168 = scmp.ne.s32.totalorder %s157, %s158
      %p169 = scmp.eq.s32.totalorder %s18, 0
      %p170 = por %p168, %p169
      %p171 = scmp.ne.s32.totalorder %s157, %s158
      %p172 = scmp.eq.s32.totalorder %s19, 1
      %p173 = por %p171, %p172
      %p175 = scmp.ne.s32.totalorder %s158, %s174
      %p176 = scmp.eq.s32.totalorder %s19, 0
      %p177 = por %p175, %p176
      %p178 = scmp.le.s32.totalorder 1, %s13
      %p179 = scmp.lt.s32.totalorder %s13, 3
      %p180 = pnand %p178, %p179
      %p181 = pneg %p180
      // Predicated region
      $region9: #{upconv_neck_forward.2} parent=5 // pred_check
        _
      $region10: #{upconv_neck_forward.2} parent=5 // pred_check_branch
        %183 = sbr.rel (%p180) target = $region12
      $region11: #{upconv_neck_forward.2} parent=5 // pred_region
        %s184 = ssub.s32 %s13, 1
        // Predicated region
        $region13: #{upconv_neck_forward.2} parent=11 // pred_check
          %p185 = pneg %p60
        $region14: #{upconv_neck_forward.2} parent=11 // pred_check_branch
          %187 = sbr.rel (%p185) target = $region16
        $region15: #{upconv_neck_forward.2} parent=11 // pred_region
          _
        $region16: #{upconv_neck_forward.2} parent=11 // pred_fallthru
          _
        // Predicated region
        $region17: #{upconv_neck_forward.2} parent=11 // pred_check
          %p188 = pneg %p81
        $region18: #{upconv_neck_forward.2} parent=11 // pred_check_branch
          %190 = sbr.rel (%p188) target = $region20
        $region19: #{upconv_neck_forward.2} parent=11 // pred_region
          %s192 = ssub.s32 2048, 2048
          %193 = vsyncadd [#allocation3], %s192
          %s194 = sshll.u32 [#allocation2], 4
          %s195 = int_to_ptr.vmem [resolvable:$true] %s194
          %200 = dma.hbm_to_vmem [thread:$0]  %s2, 2048, %s195, [#allocation3], 64, 64, 4
        $region20: #{upconv_neck_forward.2} parent=11 // pred_fallthru
          _
        // Predicated region
        $region21: #{upconv_neck_forward.2} parent=11 // pred_check
          %p201 = pneg %p102
        $region22: #{upconv_neck_forward.2} parent=11 // pred_check_branch
          %203 = sbr.rel (%p201) target = $region24
        $region23: #{upconv_neck_forward.2} parent=11 // pred_region
          _
        $region24: #{upconv_neck_forward.2} parent=11 // pred_fallthru
          _
        // Predicated region
        $region25: #{upconv_neck_forward.2} parent=11 // pred_check
          %p204 = pneg %p123
        $region26: #{upconv_neck_forward.2} parent=11 // pred_check_branch
          %206 = sbr.rel (%p204) target = $region28
        $region27: #{upconv_neck_forward.2} parent=11 // pred_region
          _
        $region28: #{upconv_neck_forward.2} parent=11 // pred_fallthru
          _
        // Predicated region
        $region29: #{upconv_neck_forward.2} parent=11 // pred_check
          %p207 = pneg %p144
        $region30: #{upconv_neck_forward.2} parent=11 // pred_check_branch
          %209 = sbr.rel (%p207) target = $region32
        $region31: #{upconv_neck_forward.2} parent=11 // pred_region
          _
        $region32: #{upconv_neck_forward.2} parent=11 // pred_fallthru
          _
      $region12: #{upconv_neck_forward.2} parent=5 // pred_fallthru
        _
      %p210 = scmp.lt.s32.totalorder %s13, 2
      // Predicated region
      $region33: #{upconv_neck_forward.2} parent=5 // pred_check
        %p211 = pneg %p210
      $region34: #{upconv_neck_forward.2} parent=5 // pred_check_branch
        %213 = sbr.rel (%p211) target = $region36
      $region35: #{upconv_neck_forward.2} parent=5 // pred_region
        // Predicated region
        $region37: #{upconv_neck_forward.2} parent=35 // pred_check
          %p214 = pneg %p33
        $region38: #{upconv_neck_forward.2} parent=35 // pred_check_branch
          %216 = sbr.rel (%p214) target = $region40
        $region39: #{upconv_neck_forward.2} parent=35 // pred_region
          %p217 = scmp.lt.s32.totalorder %s13, 1
          %s218 = scalar_select %p217, %s13, 1
          %s219 = smul.addr %s218, 50
          %s220 = smul.addr %s219, 4
          %s221 = scalar_lea.vmem %s0, %s220
        $region40: #{upconv_neck_forward.2} parent=35 // pred_fallthru
          _
      $region36: #{upconv_neck_forward.2} parent=5 // pred_fallthru
        _
      %p222 = scmp.le.s32.totalorder 1, %s13
      %p223 = scmp.lt.s32.totalorder %s13, 3
      %p224 = pnand %p222, %p223
      %p225 = pneg %p224
      // Predicated region
      $region41: #{upconv_neck_forward.2} parent=5 // pred_check
        _
      $region42: #{upconv_neck_forward.2} parent=5 // pred_check_branch
        %227 = sbr.rel (%p224) target = $region44
      $region43: #{upconv_neck_forward.2} parent=5 // pred_region
        %s228 = ssub.s32 %s13, 1
        // Predicated region
        $region45: #{upconv_neck_forward.2} parent=43 // pred_check
          %p229 = pneg %p81
        $region46: #{upconv_neck_forward.2} parent=43 // pred_check_branch
          %231 = sbr.rel (%p229) target = $region48
        $region47: #{upconv_neck_forward.2} parent=43 // pred_region
          %232 = dma.done [#allocation3], 2048
        $region48: #{upconv_neck_forward.2} parent=43 // pred_fallthru
          _
        %p233 = scmp.lt.s32.totalorder %s18, 1
        %s234 = scalar_select %p233, %s18, 1
        %s235 = smul.addr %s234, 50
        %s236 = smul.addr %s235, 4
        %s237 = scalar_lea.vmem %s0, %s236
        %p238 = pneg %p39
        %p239 = pneg %p36
        %p240 = pneg %p60
        %p241 = pneg %p57
        %p242 = pneg %p81
        %p243 = pneg %p78
        %p244 = pneg %p102
        %p245 = pneg %p99
        %p246 = pneg %p123
        %p247 = pneg %p120
        %p248 = pneg %p144
        %p249 = pneg %p141
        %p250 = pneg %p170
        %p251 = pneg %p167
        %p252 = scmp.lt.s32.totalorder %s18, 1
        %s253 = scalar_select %p252, %s18, 1
        %s254 = smul.addr %s253, 50
        %s255 = smul.addr %s254, 4
        %s256 = scalar_lea.vmem %s6, %s255
        %p257 = scmp.lt.s32.totalorder %s18, 1
        %s258 = scalar_select %p257, %s18, 1
        %s259 = smul.addr %s258, 50
        %s260 = smul.addr %s259, 4
        %s261 = scalar_lea.vmem %s0, %s260
        %p262 = scmp.lt.s32.totalorder %s18, 1
        %s263 = scalar_select %p262, %s18, 1
        %s264 = smul.addr %s263, 50
        %s265 = smul.addr %s264, 4
        %s266 = scalar_lea.vmem %s6, %s265
        %v268 = vld [vmem:[%s261] sm:$0xff]
        %v269 = vld [vmem:[%s261 + $0x8] sm:$0xff]
        %v270 = vld [vmem:[%s261 + $0x10] sm:$0xff]
        %v271 = vld [vmem:[%s261 + $0x18] sm:$0xff]
        %v272 = vld [vmem:[%s261 + $0x20] sm:$0xff]
        %v273 = vld [vmem:[%s261 + $0x28] sm:$0xff]
        %v274 = vld [vmem:[%s261 + $0x30] sm:$0xff]
        %v275 = vld [vmem:[%s261 + $0x38] sm:$0xff]
        %v276 = vld [vmem:[%s261 + $0x40] sm:$0xff]
        %v277 = vld [vmem:[%s261 + $0x48] sm:$0xff]
        %v278 = vld [vmem:[%s261 + $0x50] sm:$0xff]
        %v279 = vld [vmem:[%s261 + $0x58] sm:$0xff]
        %v280 = vld [vmem:[%s261 + $0x60] sm:$0xff]
        %v281 = vld [vmem:[%s261 + $0x68] sm:$0xff]
        %v282 = vld [vmem:[%s261 + $0x70] sm:$0xff]
        %v283 = vld [vmem:[%s261 + $0x78] sm:$0xff]
        %v284 = vld [vmem:[%s261 + $0x80] sm:$0xff]
        %v285 = vld [vmem:[%s261 + $0x88] sm:$0xff]
        %v286 = vld [vmem:[%s261 + $0x90] sm:$0xff]
        %v287 = vld [vmem:[%s261 + $0x98] sm:$0xff]
        %v288 = vld [vmem:[%s261 + $0xa0] sm:$0xff]
        %v289 = vld [vmem:[%s261 + $0xa8] sm:$0xff]
        %v290 = vld [vmem:[%s261 + $0xb0] sm:$0xff]
        %v291 = vld [vmem:[%s261 + $0xb8] sm:$0xff]
        %v292 = vld [vmem:[%s261 + $0xc0] sm:$0xff]
        %v293 = vld [vmem:[#allocation2] sm:$0xf]
        %v294 = vld [vmem:[#allocation2 + $0x4] sm:$0xf]
        %v295 = vld [vmem:[#allocation2 + $0x8] sm:$0xf]
        %v296 = vld [vmem:[#allocation2 + $0xc] sm:$0xf]
        %v297 = vld [vmem:[#allocation2 + $0x10] sm:$0xf]
        %v298 = vld [vmem:[#allocation2 + $0x14] sm:$0xf]
        %v299 = vld [vmem:[#allocation2 + $0x18] sm:$0xf]
        %v300 = vld [vmem:[#allocation2 + $0x1c] sm:$0xf]
        %v301 = vld [vmem:[#allocation2 + $0x20] sm:$0xf]
        %v302 = vld [vmem:[#allocation2 + $0x24] sm:$0xf]
        %v303 = vld [vmem:[#allocation2 + $0x28] sm:$0xf]
        %v304 = vld [vmem:[#allocation2 + $0x2c] sm:$0xf]
        %v305 = vld [vmem:[#allocation2 + $0x30] sm:$0xf]
        %v306 = vld [vmem:[#allocation2 + $0x34] sm:$0xf]
        %v307 = vld [vmem:[#allocation2 + $0x38] sm:$0xf]
        %v308 = vld [vmem:[#allocation2 + $0x3c] sm:$0xf]
        %v309 = vld [vmem:[#allocation2 + $0x40] sm:$0xf]
        %v310 = vld [vmem:[#allocation2 + $0x44] sm:$0xf]
        %v311 = vld [vmem:[#allocation2 + $0x48] sm:$0xf]
        %v312 = vld [vmem:[#allocation2 + $0x4c] sm:$0xf]
        %v313 = vld [vmem:[#allocation2 + $0x50] sm:$0xf]
        %v314 = vld [vmem:[#allocation2 + $0x54] sm:$0xf]
        %v315 = vld [vmem:[#allocation2 + $0x58] sm:$0xf]
        %v316 = vld [vmem:[#allocation2 + $0x5c] sm:$0xf]
        %v317 = vld [vmem:[#allocation2 + $0x60] sm:$0xf]
        %v318 = vld [vmem:[#allocation2 + $0x64] sm:$0xf]
        %v319 = vld [vmem:[#allocation2 + $0x68] sm:$0xf]
        %v320 = vld [vmem:[#allocation2 + $0x6c] sm:$0xf]
        %v321 = vld [vmem:[#allocation2 + $0x70] sm:$0xf]
        %v322 = vld [vmem:[#allocation2 + $0x74] sm:$0xf]
        %v323 = vld [vmem:[#allocation2 + $0x78] sm:$0xf]
        %v324 = vld [vmem:[#allocation2 + $0x7c] sm:$0xf]
        %v325 = vld [vmem:[%s3] sm:$0x1]
        %v327 = vlaneseq
        %v328 = vshrl.u32 %v327, 7
        %v329 = vsub.s32 0, %v328
        %v330 = vrot.slane %v325, %v329
        %v357 = vunpack.c.l.b16 %v268
        %v358 = vunpack.c.h.b16 %v268
        %v359 = vunpack.c.l.b16 %v269
        %v360 = vunpack.c.h.b16 %v269
        %v361 = vunpack.c.l.b16 %v270
        %v362 = vunpack.c.h.b16 %v270
        %v363 = vunpack.c.l.b16 %v271
        %v364 = vunpack.c.h.b16 %v271
        %v365 = vunpack.c.l.b16 %v272
        %v366 = vunpack.c.h.b16 %v272
        %v367 = vunpack.c.l.b16 %v273
        %v368 = vunpack.c.h.b16 %v273
        %v369 = vunpack.c.l.b16 %v274
        %v370 = vunpack.c.h.b16 %v274
        %v371 = vunpack.c.l.b16 %v275
        %v372 = vunpack.c.h.b16 %v275
        %v373 = vunpack.c.l.b16 %v276
        %v374 = vunpack.c.h.b16 %v276
        %v375 = vunpack.c.l.b16 %v277
        %v376 = vunpack.c.h.b16 %v277
        %v377 = vunpack.c.l.b16 %v278
        %v378 = vunpack.c.h.b16 %v278
        %v379 = vunpack.c.l.b16 %v279
        %v380 = vunpack.c.h.b16 %v279
        %v381 = vunpack.c.l.b16 %v280
        %v382 = vunpack.c.h.b16 %v280
        %v383 = vunpack.c.l.b16 %v281
        %v384 = vunpack.c.h.b16 %v281
        %v385 = vunpack.c.l.b16 %v282
        %v386 = vunpack.c.h.b16 %v282
        %v387 = vunpack.c.l.b16 %v283
        %v388 = vunpack.c.h.b16 %v283
        %v389 = vunpack.c.l.b16 %v284
        %v390 = vunpack.c.h.b16 %v284
        %v391 = vunpack.c.l.b16 %v285
        %v392 = vunpack.c.h.b16 %v285
        %v393 = vunpack.c.l.b16 %v286
        %v394 = vunpack.c.h.b16 %v286
        %v395 = vunpack.c.l.b16 %v287
        %v396 = vunpack.c.h.b16 %v287
        %v397 = vunpack.c.l.b16 %v288
        %v398 = vunpack.c.h.b16 %v288
        %v399 = vunpack.c.l.b16 %v289
        %v400 = vunpack.c.h.b16 %v289
        %v401 = vunpack.c.l.b16 %v290
        %v402 = vunpack.c.h.b16 %v290
        %v403 = vunpack.c.l.b16 %v291
        %v404 = vunpack.c.h.b16 %v291
        %v405 = vunpack.c.l.b16 %v292
        %v406 = vunpack.c.h.b16 %v292
        %v407 = vpack.c.b16 %v359, %v357
        %v408 = vpack.c.b16 %v360, %v358
        %v409 = vpack.c.b16 %v363, %v361
        %v410 = vpack.c.b16 %v364, %v362
        %v411 = vpack.c.b16 %v367, %v365
        %v412 = vpack.c.b16 %v368, %v366
        %v413 = vpack.c.b16 %v371, %v369
        %v414 = vpack.c.b16 %v372, %v370
        %v415 = vpack.c.b16 %v375, %v373
        %v416 = vpack.c.b16 %v376, %v374
        %v417 = vpack.c.b16 %v379, %v377
        %v418 = vpack.c.b16 %v380, %v378
        %v419 = vpack.c.b16 %v383, %v381
        %v420 = vpack.c.b16 %v384, %v382
        %v421 = vpack.c.b16 %v387, %v385
        %v422 = vpack.c.b16 %v388, %v386
        %v423 = vpack.c.b16 %v391, %v389
        %v424 = vpack.c.b16 %v392, %v390
        %v425 = vpack.c.b16 %v395, %v393
        %v426 = vpack.c.b16 %v396, %v394
        %v427 = vpack.c.b16 %v399, %v397
        %v428 = vpack.c.b16 %v400, %v398
        %v429 = vpack.c.b16 %v403, %v401
        %v430 = vpack.c.b16 %v404, %v402
        %v431 = vpack.c.b16 %v405, %v405
        %v432 = vpack.c.b16 %v406, %v406
        %v491 = vunpack.c.l.b16 %v293
        %v492 = vunpack.c.l.b16 %v294
        %v493 = vunpack.c.l.b16 %v295
        %v494 = vunpack.c.l.b16 %v296
        %v495 = vunpack.c.l.b16 %v297
        %v496 = vunpack.c.l.b16 %v298
        %v497 = vunpack.c.l.b16 %v299
        %v498 = vunpack.c.l.b16 %v300
        %v499 = vunpack.c.l.b16 %v301
        %v500 = vunpack.c.l.b16 %v302
        %v501 = vunpack.c.l.b16 %v303
        %v502 = vunpack.c.l.b16 %v304
        %v503 = vunpack.c.l.b16 %v305
        %v504 = vunpack.c.l.b16 %v306
        %v505 = vunpack.c.l.b16 %v307
        %v506 = vunpack.c.l.b16 %v308
        %v507 = vunpack.c.l.b16 %v309
        %v508 = vunpack.c.l.b16 %v310
        %v509 = vunpack.c.l.b16 %v311
        %v510 = vunpack.c.l.b16 %v312
        %v511 = vunpack.c.l.b16 %v313
        %v512 = vunpack.c.l.b16 %v314
        %v513 = vunpack.c.l.b16 %v315
        %v514 = vunpack.c.l.b16 %v316
        %v515 = vunpack.c.l.b16 %v317
        %v516 = vunpack.c.l.b16 %v318
        %v517 = vunpack.c.l.b16 %v319
        %v518 = vunpack.c.l.b16 %v320
        %v519 = vunpack.c.l.b16 %v321
        %v520 = vunpack.c.l.b16 %v322
        %v521 = vunpack.c.l.b16 %v323
        %v522 = vunpack.c.l.b16 %v324
        %v523 = vpack.c.b16 %v492, %v491
        %v524 = vpack.c.b16 %v494, %v493
        %v525 = vpack.c.b16 %v496, %v495
        %v526 = vpack.c.b16 %v498, %v497
        %v527 = vpack.c.b16 %v500, %v499
        %v528 = vpack.c.b16 %v502, %v501
        %v529 = vpack.c.b16 %v504, %v503
        %v530 = vpack.c.b16 %v506, %v505
        %v531 = vpack.c.b16 %v508, %v507
        %v532 = vpack.c.b16 %v510, %v509
        %v533 = vpack.c.b16 %v512, %v511
        %v534 = vpack.c.b16 %v514, %v513
        %v535 = vpack.c.b16 %v516, %v515
        %v536 = vpack.c.b16 %v518, %v517
        %v537 = vpack.c.b16 %v520, %v519
        %v538 = vpack.c.b16 %v522, %v521
        %555 = vmatprep.subr.bf16.mxu0 0
        %556 = vmatpush1.bf16.msra.mxu0 %v523
        %557 = vmatprep.subr.bf16.mxu0 0
        %558 = vmatpush1.bf16.msra.mxu0 %v524
        %559 = vmatprep.subr.bf16.mxu0 0
        %560 = vmatpush1.bf16.msra.mxu0 %v525
        %561 = vmatprep.subr.bf16.mxu0 0
        %562 = vmatpush1.bf16.msra.mxu0 %v526
        %563 = vmatprep.subr.bf16.mxu0 0
        %564 = vmatpush1.bf16.msra.mxu0 %v527
        %565 = vmatprep.subr.bf16.mxu0 0
        %566 = vmatpush1.bf16.msra.mxu0 %v528
        %567 = vmatprep.subr.bf16.mxu0 0
        %568 = vmatpush1.bf16.msra.mxu0 %v529
        %569 = vmatprep.subr.bf16.mxu0 0
        %570 = vmatpush1.bf16.msra.mxu0 %v530
        %571 = vmatprep.subr.bf16.mxu0 0
        %572 = vmatpush1.bf16.msra.mxu0 %v531
        %573 = vmatprep.subr.bf16.mxu0 0
        %574 = vmatpush1.bf16.msra.mxu0 %v532
        %575 = vmatprep.subr.bf16.mxu0 0
        %576 = vmatpush1.bf16.msra.mxu0 %v533
        %577 = vmatprep.subr.bf16.mxu0 0
        %578 = vmatpush1.bf16.msra.mxu0 %v534
        %579 = vmatprep.subr.bf16.mxu0 0
        %580 = vmatpush1.bf16.msra.mxu0 %v535
        %581 = vmatprep.subr.bf16.mxu0 0
        %582 = vmatpush1.bf16.msra.mxu0 %v536
        %583 = vmatprep.subr.bf16.mxu0 0
        %584 = vmatpush1.bf16.msra.mxu0 %v537
        %585 = vmatprep.subr.bf16.mxu0 0
        %586 = vmatpush1.bf16.msra.mxu0 %v538
        %587 = vmatprep.mubr.bf16.mxu0 %v408
        %588 = vmatmul.mubr.bf16.gmra.mrb[0].mxu0 %v407
        %v589 = vpop.f32.mrb[0].mxu0
        %v590 = vadd.f32 %v330, %v589
        %v591 = vpop.f32.mrb[0].mxu0
        %v592 = vpop.f32.mrb[0].mxu0
        %v593 = vadd.f32 %v330, %v592
        %v594 = vpop.f32.mrb[0].mxu0
        %595 = vmatprep.mubr.bf16.mxu0 %v410
        %596 = vmatmul.mubr.bf16.gmra.mrb[0].mxu0 %v409
        %v597 = vpop.f32.mrb[0].mxu0
        %v598 = vadd.f32 %v330, %v597
        %v599 = vpop.f32.mrb[0].mxu0
        %v600 = vpop.f32.mrb[0].mxu0
        %v601 = vadd.f32 %v330, %v600
        %v602 = vpop.f32.mrb[0].mxu0
        %603 = vmatprep.mubr.bf16.mxu0 %v412
        %604 = vmatmul.mubr.bf16.gmra.mrb[0].mxu0 %v411
        %v605 = vpop.f32.mrb[0].mxu0
        %v606 = vadd.f32 %v330, %v605
        %v607 = vpop.f32.mrb[0].mxu0
        %v608 = vpop.f32.mrb[0].mxu0
        %v609 = vadd.f32 %v330, %v608
        %v610 = vpop.f32.mrb[0].mxu0
        %611 = vmatprep.mubr.bf16.mxu0 %v414
        %612 = vmatmul.mubr.bf16.gmra.mrb[0].mxu0 %v413
        %v613 = vpop.f32.mrb[0].mxu0
        %v614 = vadd.f32 %v330, %v613
        %v615 = vpop.f32.mrb[0].mxu0
        %v616 = vpop.f32.mrb[0].mxu0
        %v617 = vadd.f32 %v330, %v616
        %v618 = vpop.f32.mrb[0].mxu0
        %619 = vmatprep.mubr.bf16.mxu0 %v416
        %620 = vmatmul.mubr.bf16.gmra.mrb[0].mxu0 %v415
        %v621 = vpop.f32.mrb[0].mxu0
        %v622 = vadd.f32 %v330, %v621
        %v623 = vpop.f32.mrb[0].mxu0
        %v624 = vpop.f32.mrb[0].mxu0
        %v625 = vadd.f32 %v330, %v624
        %v626 = vpop.f32.mrb[0].mxu0
        %627 = vmatprep.mubr.bf16.mxu0 %v418
        %628 = vmatmul.mubr.bf16.gmra.mrb[0].mxu0 %v417
        %v629 = vpop.f32.mrb[0].mxu0
        %v630 = vadd.f32 %v330, %v629
        %v631 = vpop.f32.mrb[0].mxu0
        %v632 = vpop.f32.mrb[0].mxu0
        %v633 = vadd.f32 %v330, %v632
        %v634 = vpop.f32.mrb[0].mxu0
        %635 = vmatprep.mubr.bf16.mxu0 %v420
        %636 = vmatmul.mubr.bf16.gmra.mrb[0].mxu0 %v419
        %v637 = vpop.f32.mrb[0].mxu0
        %v638 = vadd.f32 %v330, %v637
        %v639 = vpop.f32.mrb[0].mxu0
        %v640 = vpop.f32.mrb[0].mxu0
        %v641 = vadd.f32 %v330, %v640
        %v642 = vpop.f32.mrb[0].mxu0
        %643 = vmatprep.mubr.bf16.mxu0 %v422
        %644 = vmatmul.mubr.bf16.gmra.mrb[0].mxu0 %v421
        %v645 = vpop.f32.mrb[0].mxu0
        %v646 = vadd.f32 %v330, %v645
        %v647 = vpop.f32.mrb[0].mxu0
        %v648 = vpop.f32.mrb[0].mxu0
        %v649 = vadd.f32 %v330, %v648
        %v650 = vpop.f32.mrb[0].mxu0
        %651 = vmatprep.mubr.bf16.mxu0 %v424
        %652 = vmatmul.mubr.bf16.gmra.mrb[0].mxu0 %v423
        %v653 = vpop.f32.mrb[0].mxu0
        %v654 = vadd.f32 %v330, %v653
        %v655 = vpop.f32.mrb[0].mxu0
        %v656 = vpop.f32.mrb[0].mxu0
        %v657 = vadd.f32 %v330, %v656
        %v658 = vpop.f32.mrb[0].mxu0
        %659 = vmatprep.mubr.bf16.mxu0 %v426
        %660 = vmatmul.mubr.bf16.gmra.mrb[0].mxu0 %v425
        %v661 = vpop.f32.mrb[0].mxu0
        %v662 = vadd.f32 %v330, %v661
        %v663 = vpop.f32.mrb[0].mxu0
        %v664 = vpop.f32.mrb[0].mxu0
        %v665 = vadd.f32 %v330, %v664
        %v666 = vpop.f32.mrb[0].mxu0
        %667 = vmatprep.mubr.bf16.mxu0 %v428
        %668 = vmatmul.mubr.bf16.gmra.mrb[0].mxu0 %v427
        %v669 = vpop.f32.mrb[0].mxu0
        %v670 = vadd.f32 %v330, %v669
        %v671 = vpop.f32.mrb[0].mxu0
        %v672 = vpop.f32.mrb[0].mxu0
        %v673 = vadd.f32 %v330, %v672
        %v674 = vpop.f32.mrb[0].mxu0
        %675 = vmatprep.mubr.bf16.mxu0 %v430
        %676 = vmatmul.mubr.bf16.gmra.mrb[0].mxu0 %v429
        %v677 = vpop.f32.mrb[0].mxu0
        %v678 = vadd.f32 %v330, %v677
        %v679 = vpop.f32.mrb[0].mxu0
        %v680 = vpop.f32.mrb[0].mxu0
        %v681 = vadd.f32 %v330, %v680
        %v682 = vpop.f32.mrb[0].mxu0
        %683 = vmatprep.mubr.bf16.mxu0 %v432
        %684 = vmatmul.mubr.bf16.gmra.mrb[0].mxu0 %v431
        %v685 = vpop.f32.mrb[0].mxu0
        %v686 = vadd.f32 %v330, %v685
        %v687 = vpop.f32.mrb[0].mxu0
        %v688 = vpop.f32.mrb[0].mxu0
        %v689 = vpop.f32.mrb[0].mxu0
        %690 = vdwg.mxu0
        %v691 = vmax.f32 %v590, 0.0
        %v692 = vmax.f32 %v593, 0.0
        %v693 = vmax.f32 %v598, 0.0
        %v694 = vmax.f32 %v601, 0.0
        %v695 = vmax.f32 %v606, 0.0
        %v696 = vmax.f32 %v609, 0.0
        %v697 = vmax.f32 %v614, 0.0
        %v698 = vmax.f32 %v617, 0.0
        %v699 = vmax.f32 %v622, 0.0
        %v700 = vmax.f32 %v625, 0.0
        %v701 = vmax.f32 %v630, 0.0
        %v702 = vmax.f32 %v633, 0.0
        %v703 = vmax.f32 %v638, 0.0
        %v704 = vmax.f32 %v641, 0.0
        %v705 = vmax.f32 %v646, 0.0
        %v706 = vmax.f32 %v649, 0.0
        %v707 = vmax.f32 %v654, 0.0
        %v708 = vmax.f32 %v657, 0.0
        %v709 = vmax.f32 %v662, 0.0
        %v710 = vmax.f32 %v665, 0.0
        %v711 = vmax.f32 %v670, 0.0
        %v712 = vmax.f32 %v673, 0.0
        %v713 = vmax.f32 %v678, 0.0
        %v714 = vmax.f32 %v681, 0.0
        %v715 = vmax.f32 %v686, 0.0
        %v716 = vpack.c.bf16 %v692, %v691
        %v717 = vpack.c.bf16 %v694, %v693
        %v718 = vpack.c.bf16 %v696, %v695
        %v719 = vpack.c.bf16 %v698, %v697
        %v720 = vpack.c.bf16 %v700, %v699
        %v721 = vpack.c.bf16 %v702, %v701
        %v722 = vpack.c.bf16 %v704, %v703
        %v723 = vpack.c.bf16 %v706, %v705
        %v724 = vpack.c.bf16 %v708, %v707
        %v725 = vpack.c.bf16 %v710, %v709
        %v726 = vpack.c.bf16 %v712, %v711
        %v727 = vpack.c.bf16 %v714, %v713
        %v728 = vpack.c.bf16 %v715, %v715
        %v729 = vld [vmem:[%s1] sm:$0xf]
        %v730 = vld [vmem:[%s1 + $0x4] sm:$0xf]
        %v731 = vld [vmem:[%s1 + $0x8] sm:$0xf]
        %v732 = vld [vmem:[%s1 + $0xc] sm:$0xf]
        %v733 = vld [vmem:[%s1 + $0x10] sm:$0xf]
        %v734 = vld [vmem:[%s1 + $0x14] sm:$0xf]
        %v735 = vld [vmem:[%s1 + $0x18] sm:$0xf]
        %v736 = vld [vmem:[%s1 + $0x1c] sm:$0xf]
        %v737 = vld [vmem:[%s1 + $0x20] sm:$0xf]
        %v738 = vld [vmem:[%s1 + $0x24] sm:$0xf]
        %v739 = vld [vmem:[%s1 + $0x28] sm:$0xf]
        %v740 = vld [vmem:[%s1 + $0x2c] sm:$0xf]
        %v741 = vld [vmem:[%s1 + $0x30] sm:$0xf]
        %v742 = vld [vmem:[%s1 + $0x34] sm:$0xf]
        %v743 = vld [vmem:[%s1 + $0x38] sm:$0xf]
        %v744 = vld [vmem:[%s1 + $0x3c] sm:$0xf]
        %v745 = vld [vmem:[%s1 + $0x40] sm:$0xf]
        %v746 = vld [vmem:[%s1 + $0x44] sm:$0xf]
        %v747 = vld [vmem:[%s1 + $0x48] sm:$0xf]
        %v748 = vld [vmem:[%s1 + $0x4c] sm:$0xf]
        %v749 = vld [vmem:[%s1 + $0x50] sm:$0xf]
        %v750 = vld [vmem:[%s1 + $0x54] sm:$0xf]
        %v751 = vld [vmem:[%s1 + $0x58] sm:$0xf]
        %v752 = vld [vmem:[%s1 + $0x5c] sm:$0xf]
        %v753 = vld [vmem:[%s1 + $0x60] sm:$0xf]
        %vm754 = vsmask.f32 7424
        %v756 = vshrl.u32 %v716, 16
        %v758 = vshll.u32 %v716, 16
        %v760 = vrot.slane %v758, 1
        %v761 = vor.u32 %v756, %v760
        %v763 = vshll.u32 %v717, 16
        %v765 = vrot.slane %v763, 1
        %v766 = vsel %vm754, %v761, %v765
        %v767 = vshrl.u32 %v717, 16
        %v769 = vor.u32 %v767, %v765
        %v771 = vshll.u32 %v718, 16
        %v773 = vrot.slane %v771, 1
        %v774 = vsel %vm754, %v769, %v773
        %v775 = vshrl.u32 %v718, 16
        %v777 = vor.u32 %v775, %v773
        %v779 = vshll.u32 %v719, 16
        %v781 = vrot.slane %v779, 1
        %v782 = vsel %vm754, %v777, %v781
        %v783 = vshrl.u32 %v719, 16
        %v785 = vor.u32 %v783, %v781
        %v787 = vshll.u32 %v720, 16
        %v789 = vrot.slane %v787, 1
        %v790 = vsel %vm754, %v785, %v789
        %v791 = vshrl.u32 %v720, 16
        %v793 = vor.u32 %v791, %v789
        %v795 = vshll.u32 %v721, 16
        %v797 = vrot.slane %v795, 1
        %v798 = vsel %vm754, %v793, %v797
        %v799 = vshrl.u32 %v721, 16
        %v801 = vor.u32 %v799, %v797
        %v803 = vshll.u32 %v722, 16
        %v805 = vrot.slane %v803, 1
        %v806 = vsel %vm754, %v801, %v805
        %v807 = vshrl.u32 %v722, 16
        %v809 = vor.u32 %v807, %v805
        %v811 = vshll.u32 %v723, 16
        %v813 = vrot.slane %v811, 1
        %v814 = vsel %vm754, %v809, %v813
        %v815 = vshrl.u32 %v723, 16
        %v817 = vor.u32 %v815, %v813
        %v819 = vshll.u32 %v724, 16
        %v821 = vrot.slane %v819, 1
        %v822 = vsel %vm754, %v817, %v821
        %v823 = vshrl.u32 %v724, 16
        %v825 = vor.u32 %v823, %v821
        %v827 = vshll.u32 %v725, 16
        %v829 = vrot.slane %v827, 1
        %v830 = vsel %vm754, %v825, %v829
        %v831 = vshrl.u32 %v725, 16
        %v833 = vor.u32 %v831, %v829
        %v835 = vshll.u32 %v726, 16
        %v837 = vrot.slane %v835, 1
        %v838 = vsel %vm754, %v833, %v837
        %v839 = vshrl.u32 %v726, 16
        %v841 = vor.u32 %v839, %v837
        %v843 = vshll.u32 %v727, 16
        %v845 = vrot.slane %v843, 1
        %v846 = vsel %vm754, %v841, %v845
        %v847 = vshrl.u32 %v727, 16
        %v849 = vor.u32 %v847, %v845
        %v851 = vshll.u32 %v728, 16
        %v853 = vrot.slane %v851, 1
        %v854 = vsel %vm754, %v849, %v853
        %v855 = vshrl.u32 %v728, 16
        %v857 = vor.u32 %v855, %v853
        %vm871 = vcmask 1043456
        %vm872 = vsmask.f32 3328
        %vm873 = vmand %vm871, %vm872
        %v874 = vsel %vm873, %v857, 0
        %876 = vset.pattern.permute.xlu0 0
        %877 = vperm.xlu0 %876, %v729
        %v878 = vpop.permute.xlu0 %877
        %v881 = vunpack.c.l.s4 839922192
        %v882 = vunpack.c.0.s8 %v881
        %v883 = vlaneseq
        %v884 = vshrl.u32 %v883, 7
        %v885 = vsub.s32 %v882, %v884
        %v886 = vrot.slane %v878, %v885
        %888 = vset.pattern.permute.xlu0 0
        %889 = vperm.xlu0 %888, %v730
        %v890 = vpop.permute.xlu0 %889
        %v893 = vunpack.c.l.s4 839922192
        %v894 = vunpack.c.0.s8 %v893
        %v895 = vlaneseq
        %v896 = vshrl.u32 %v895, 7
        %v897 = vsub.s32 %v894, %v896
        %v898 = vrot.slane %v890, %v897
        %900 = vset.pattern.permute.xlu0 0
        %901 = vperm.xlu0 %900, %v731
        %v902 = vpop.permute.xlu0 %901
        %v905 = vunpack.c.l.s4 839922192
        %v906 = vunpack.c.0.s8 %v905
        %v907 = vlaneseq
        %v908 = vshrl.u32 %v907, 7
        %v909 = vsub.s32 %v906, %v908
        %v910 = vrot.slane %v902, %v909
        %912 = vset.pattern.permute.xlu0 0
        %913 = vperm.xlu0 %912, %v732
        %v914 = vpop.permute.xlu0 %913
        %v917 = vunpack.c.l.s4 839922192
        %v918 = vunpack.c.0.s8 %v917
        %v919 = vlaneseq
        %v920 = vshrl.u32 %v919, 7
        %v921 = vsub.s32 %v918, %v920
        %v922 = vrot.slane %v914, %v921
        %924 = vset.pattern.permute.xlu0 0
        %925 = vperm.xlu0 %924, %v733
        %v926 = vpop.permute.xlu0 %925
        %v929 = vunpack.c.l.s4 839922192
        %v930 = vunpack.c.0.s8 %v929
        %v931 = vlaneseq
        %v932 = vshrl.u32 %v931, 7
        %v933 = vsub.s32 %v930, %v932
        %v934 = vrot.slane %v926, %v933
        %936 = vset.pattern.permute.xlu0 0
        %937 = vperm.xlu0 %936, %v734
        %v938 = vpop.permute.xlu0 %937
        %v941 = vunpack.c.l.s4 839922192
        %v942 = vunpack.c.0.s8 %v941
        %v943 = vlaneseq
        %v944 = vshrl.u32 %v943, 7
        %v945 = vsub.s32 %v942, %v944
        %v946 = vrot.slane %v938, %v945
        %948 = vset.pattern.permute.xlu0 0
        %949 = vperm.xlu0 %948, %v735
        %v950 = vpop.permute.xlu0 %949
        %v953 = vunpack.c.l.s4 839922192
        %v954 = vunpack.c.0.s8 %v953
        %v955 = vlaneseq
        %v956 = vshrl.u32 %v955, 7
        %v957 = vsub.s32 %v954, %v956
        %v958 = vrot.slane %v950, %v957
        %960 = vset.pattern.permute.xlu0 0
        %961 = vperm.xlu0 %960, %v736
        %v962 = vpop.permute.xlu0 %961
        %v965 = vunpack.c.l.s4 839922192
        %v966 = vunpack.c.0.s8 %v965
        %v967 = vlaneseq
        %v968 = vshrl.u32 %v967, 7
        %v969 = vsub.s32 %v966, %v968
        %v970 = vrot.slane %v962, %v969
        %972 = vset.pattern.permute.xlu0 0
        %973 = vperm.xlu0 %972, %v737
        %v974 = vpop.permute.xlu0 %973
        %v977 = vunpack.c.l.s4 839922192
        %v978 = vunpack.c.0.s8 %v977
        %v979 = vlaneseq
        %v980 = vshrl.u32 %v979, 7
        %v981 = vsub.s32 %v978, %v980
        %v982 = vrot.slane %v974, %v981
        %984 = vset.pattern.permute.xlu0 0
        %985 = vperm.xlu0 %984, %v738
        %v986 = vpop.permute.xlu0 %985
        %v989 = vunpack.c.l.s4 839922192
        %v990 = vunpack.c.0.s8 %v989
        %v991 = vlaneseq
        %v992 = vshrl.u32 %v991, 7
        %v993 = vsub.s32 %v990, %v992
        %v994 = vrot.slane %v986, %v993
        %996 = vset.pattern.permute.xlu0 0
        %997 = vperm.xlu0 %996, %v739
        %v998 = vpop.permute.xlu0 %997
        %v1001 = vunpack.c.l.s4 839922192
        %v1002 = vunpack.c.0.s8 %v1001
        %v1003 = vlaneseq
        %v1004 = vshrl.u32 %v1003, 7
        %v1005 = vsub.s32 %v1002, %v1004
        %v1006 = vrot.slane %v998, %v1005
        %1008 = vset.pattern.permute.xlu0 0
        %1009 = vperm.xlu0 %1008, %v740
        %v1010 = vpop.permute.xlu0 %1009
        %v1013 = vunpack.c.l.s4 839922192
        %v1014 = vunpack.c.0.s8 %v1013
        %v1015 = vlaneseq
        %v1016 = vshrl.u32 %v1015, 7
        %v1017 = vsub.s32 %v1014, %v1016
        %v1018 = vrot.slane %v1010, %v1017
        %1020 = vset.pattern.permute.xlu0 0
        %1021 = vperm.xlu0 %1020, %v741
        %v1022 = vpop.permute.xlu0 %1021
        %v1025 = vunpack.c.l.s4 839922192
        %v1026 = vunpack.c.0.s8 %v1025
        %v1027 = vlaneseq
        %v1028 = vshrl.u32 %v1027, 7
        %v1029 = vsub.s32 %v1026, %v1028
        %v1030 = vrot.slane %v1022, %v1029
        %1032 = vset.pattern.permute.xlu0 0
        %1033 = vperm.xlu0 %1032, %v742
        %v1034 = vpop.permute.xlu0 %1033
        %v1037 = vunpack.c.l.s4 839922192
        %v1038 = vunpack.c.0.s8 %v1037
        %v1039 = vlaneseq
        %v1040 = vshrl.u32 %v1039, 7
        %v1041 = vsub.s32 %v1038, %v1040
        %v1042 = vrot.slane %v1034, %v1041
        %1044 = vset.pattern.permute.xlu0 0
        %1045 = vperm.xlu0 %1044, %v743
        %v1046 = vpop.permute.xlu0 %1045
        %v1049 = vunpack.c.l.s4 839922192
        %v1050 = vunpack.c.0.s8 %v1049
        %v1051 = vlaneseq
        %v1052 = vshrl.u32 %v1051, 7
        %v1053 = vsub.s32 %v1050, %v1052
        %v1054 = vrot.slane %v1046, %v1053
        %1056 = vset.pattern.permute.xlu0 0
        %1057 = vperm.xlu0 %1056, %v744
        %v1058 = vpop.permute.xlu0 %1057
        %v1061 = vunpack.c.l.s4 839922192
        %v1062 = vunpack.c.0.s8 %v1061
        %v1063 = vlaneseq
        %v1064 = vshrl.u32 %v1063, 7
        %v1065 = vsub.s32 %v1062, %v1064
        %v1066 = vrot.slane %v1058, %v1065
        %1068 = vset.pattern.permute.xlu0 0
        %1069 = vperm.xlu0 %1068, %v745
        %v1070 = vpop.permute.xlu0 %1069
        %v1073 = vunpack.c.l.s4 839922192
        %v1074 = vunpack.c.0.s8 %v1073
        %v1075 = vlaneseq
        %v1076 = vshrl.u32 %v1075, 7
        %v1077 = vsub.s32 %v1074, %v1076
        %v1078 = vrot.slane %v1070, %v1077
        %1080 = vset.pattern.permute.xlu0 0
        %1081 = vperm.xlu0 %1080, %v746
        %v1082 = vpop.permute.xlu0 %1081
        %v1085 = vunpack.c.l.s4 839922192
        %v1086 = vunpack.c.0.s8 %v1085
        %v1087 = vlaneseq
        %v1088 = vshrl.u32 %v1087, 7
        %v1089 = vsub.s32 %v1086, %v1088
        %v1090 = vrot.slane %v1082, %v1089
        %1092 = vset.pattern.permute.xlu0 0
        %1093 = vperm.xlu0 %1092, %v747
        %v1094 = vpop.permute.xlu0 %1093
        %v1097 = vunpack.c.l.s4 839922192
        %v1098 = vunpack.c.0.s8 %v1097
        %v1099 = vlaneseq
        %v1100 = vshrl.u32 %v1099, 7
        %v1101 = vsub.s32 %v1098, %v1100
        %v1102 = vrot.slane %v1094, %v1101
        %1104 = vset.pattern.permute.xlu0 0
        %1105 = vperm.xlu0 %1104, %v748
        %v1106 = vpop.permute.xlu0 %1105
        %v1109 = vunpack.c.l.s4 839922192
        %v1110 = vunpack.c.0.s8 %v1109
        %v1111 = vlaneseq
        %v1112 = vshrl.u32 %v1111, 7
        %v1113 = vsub.s32 %v1110, %v1112
        %v1114 = vrot.slane %v1106, %v1113
        %1116 = vset.pattern.permute.xlu0 0
        %1117 = vperm.xlu0 %1116, %v749
        %v1118 = vpop.permute.xlu0 %1117
        %v1121 = vunpack.c.l.s4 839922192
        %v1122 = vunpack.c.0.s8 %v1121
        %v1123 = vlaneseq
        %v1124 = vshrl.u32 %v1123, 7
        %v1125 = vsub.s32 %v1122, %v1124
        %v1126 = vrot.slane %v1118, %v1125
        %1128 = vset.pattern.permute.xlu0 0
        %1129 = vperm.xlu0 %1128, %v750
        %v1130 = vpop.permute.xlu0 %1129
        %v1133 = vunpack.c.l.s4 839922192
        %v1134 = vunpack.c.0.s8 %v1133
        %v1135 = vlaneseq
        %v1136 = vshrl.u32 %v1135, 7
        %v1137 = vsub.s32 %v1134, %v1136
        %v1138 = vrot.slane %v1130, %v1137
        %1140 = vset.pattern.permute.xlu0 0
        %1141 = vperm.xlu0 %1140, %v751
        %v1142 = vpop.permute.xlu0 %1141
        %v1145 = vunpack.c.l.s4 839922192
        %v1146 = vunpack.c.0.s8 %v1145
        %v1147 = vlaneseq
        %v1148 = vshrl.u32 %v1147, 7
        %v1149 = vsub.s32 %v1146, %v1148
        %v1150 = vrot.slane %v1142, %v1149
        %1152 = vset.pattern.permute.xlu0 0
        %1153 = vperm.xlu0 %1152, %v752
        %v1154 = vpop.permute.xlu0 %1153
        %v1157 = vunpack.c.l.s4 839922192
        %v1158 = vunpack.c.0.s8 %v1157
        %v1159 = vlaneseq
        %v1160 = vshrl.u32 %v1159, 7
        %v1161 = vsub.s32 %v1158, %v1160
        %v1162 = vrot.slane %v1154, %v1161
        %1164 = vset.pattern.permute.xlu0 0
        %1165 = vperm.xlu0 %1164, %v753
        %v1166 = vpop.permute.xlu0 %1165
        %v1169 = vunpack.c.l.s4 839922192
        %v1170 = vunpack.c.0.s8 %v1169
        %v1171 = vlaneseq
        %v1172 = vshrl.u32 %v1171, 7
        %v1173 = vsub.s32 %v1170, %v1172
        %v1174 = vrot.slane %v1166, %v1173
        %v1200 = vunpack.c.l.b16 %v886
        %v1201 = vunpack.c.l.b16 %v898
        %v1202 = vunpack.c.l.b16 %v910
        %v1203 = vunpack.c.l.b16 %v922
        %v1204 = vunpack.c.l.b16 %v934
        %v1205 = vunpack.c.l.b16 %v946
        %v1206 = vunpack.c.l.b16 %v958
        %v1207 = vunpack.c.l.b16 %v970
        %v1208 = vunpack.c.l.b16 %v982
        %v1209 = vunpack.c.l.b16 %v994
        %v1210 = vunpack.c.l.b16 %v1006
        %v1211 = vunpack.c.l.b16 %v1018
        %v1212 = vunpack.c.l.b16 %v1030
        %v1213 = vunpack.c.l.b16 %v1042
        %v1214 = vunpack.c.l.b16 %v1054
        %v1215 = vunpack.c.l.b16 %v1066
        %v1216 = vunpack.c.l.b16 %v1078
        %v1217 = vunpack.c.l.b16 %v1090
        %v1218 = vunpack.c.l.b16 %v1102
        %v1219 = vunpack.c.l.b16 %v1114
        %v1220 = vunpack.c.l.b16 %v1126
        %v1221 = vunpack.c.l.b16 %v1138
        %v1222 = vunpack.c.l.b16 %v1150
        %v1223 = vunpack.c.l.b16 %v1162
        %v1224 = vunpack.c.l.b16 %v1174
        %v1225 = vpack.c.b16 %v1201, %v1200
        %v1226 = vpack.c.b16 %v1203, %v1202
        %v1227 = vpack.c.b16 %v1205, %v1204
        %v1228 = vpack.c.b16 %v1207, %v1206
        %v1229 = vpack.c.b16 %v1209, %v1208
        %v1230 = vpack.c.b16 %v1211, %v1210
        %v1231 = vpack.c.b16 %v1213, %v1212
        %v1232 = vpack.c.b16 %v1215, %v1214
        %v1233 = vpack.c.b16 %v1217, %v1216
        %v1234 = vpack.c.b16 %v1219, %v1218
        %v1235 = vpack.c.b16 %v1221, %v1220
        %v1236 = vpack.c.b16 %v1223, %v1222
        %v1237 = vpack.c.b16 %v1224, %v1224
        %v1251 = vmul.bf16 %v766, %v1225
        %v1252 = vmul.bf16 %v774, %v1226
        %v1253 = vmul.bf16 %v782, %v1227
        %v1254 = vmul.bf16 %v790, %v1228
        %v1255 = vmul.bf16 %v798, %v1229
        %v1256 = vmul.bf16 %v806, %v1230
        %v1257 = vmul.bf16 %v814, %v1231
        %v1258 = vmul.bf16 %v822, %v1232
        %v1259 = vmul.bf16 %v830, %v1233
        %v1260 = vmul.bf16 %v838, %v1234
        %v1261 = vmul.bf16 %v846, %v1235
        %v1262 = vmul.bf16 %v854, %v1236
        %v1263 = vmul.bf16 %v874, %v1237
        %vm1276 = vcmask 1045504
        %v1277 = vrot.slane %v717, 2
        %v1278 = vrot.slane %v718, 2
        %v1279 = vsel %vm1276, %v1277, %v1278
        %v1280 = vrot.slane %v719, 2
        %v1281 = vsel %vm1276, %v1278, %v1280
        %v1282 = vrot.slane %v720, 2
        %v1283 = vsel %vm1276, %v1280, %v1282
        %v1284 = vrot.slane %v721, 2
        %v1285 = vsel %vm1276, %v1282, %v1284
        %v1286 = vrot.slane %v722, 2
        %v1287 = vsel %vm1276, %v1284, %v1286
        %v1288 = vrot.slane %v723, 2
        %v1289 = vsel %vm1276, %v1286, %v1288
        %v1290 = vrot.slane %v724, 2
        %v1291 = vsel %vm1276, %v1288, %v1290
        %v1292 = vrot.slane %v725, 2
        %v1293 = vsel %vm1276, %v1290, %v1292
        %v1294 = vrot.slane %v726, 2
        %v1295 = vsel %vm1276, %v1292, %v1294
        %v1296 = vrot.slane %v727, 2
        %v1297 = vsel %vm1276, %v1294, %v1296
        %v1298 = vrot.slane %v728, 2
        %v1299 = vsel %vm1276, %v1296, %v1298
        %vm1311 = vcmask 1041408
        %v1314 = vsel %vm1311, %v1298, 0
        %v1328 = vrot.slane %v1252, 2
        %v1329 = vrot.slane %v1253, 2
        %v1330 = vsel %vm1276, %v1328, %v1329
        %v1331 = vrot.slane %v1254, 2
        %v1332 = vsel %vm1276, %v1329, %v1331
        %v1333 = vrot.slane %v1255, 2
        %v1334 = vsel %vm1276, %v1331, %v1333
        %v1335 = vrot.slane %v1256, 2
        %v1336 = vsel %vm1276, %v1333, %v1335
        %v1337 = vrot.slane %v1257, 2
        %v1338 = vsel %vm1276, %v1335, %v1337
        %v1339 = vrot.slane %v1258, 2
        %v1340 = vsel %vm1276, %v1337, %v1339
        %v1341 = vrot.slane %v1259, 2
        %v1342 = vsel %vm1276, %v1339, %v1341
        %v1343 = vrot.slane %v1260, 2
        %v1344 = vsel %vm1276, %v1341, %v1343
        %v1345 = vrot.slane %v1261, 2
        %v1346 = vsel %vm1276, %v1343, %v1345
        %v1347 = vrot.slane %v1262, 2
        %v1348 = vsel %vm1276, %v1345, %v1347
        %v1349 = vrot.slane %v1263, 2
        %v1350 = vsel %vm1276, %v1347, %v1349
        %v1363 = vsel %vm1311, %v1349, 0
        %v1365 = vld [vmem:[%s4] sm:$0xff]
        %v1366 = vld [vmem:[%s4 + $0x8] sm:$0xff]
        %v1367 = vld [vmem:[%s4 + $0x10] sm:$0xff]
        %v1368 = vld [vmem:[%s4 + $0x18] sm:$0xff]
        %v1369 = vld [vmem:[%s4 + $0x20] sm:$0xff]
        %v1370 = vld [vmem:[%s4 + $0x28] sm:$0xff]
        %v1371 = vld [vmem:[%s4 + $0x30] sm:$0xff]
        %v1372 = vld [vmem:[%s4 + $0x38] sm:$0xff]
        %v1373 = vld [vmem:[%s4 + $0x40] sm:$0xff]
        %v1374 = vld [vmem:[%s4 + $0x48] sm:$0xff]
        %v1375 = vld [vmem:[%s4 + $0x50] sm:$0xff]
        %v1376 = vld [vmem:[%s4 + $0x58] sm:$0xff]
        %v1377 = vld [vmem:[%s4 + $0x60] sm:$0xff]
        %v1378 = vld [vmem:[%s4 + $0x68] sm:$0xff]
        %v1379 = vld [vmem:[%s4 + $0x70] sm:$0xff]
        %v1380 = vld [vmem:[%s4 + $0x78] sm:$0xff]
        %v1381 = vld [vmem:[%s4 + $0x80] sm:$0xff]
        %v1382 = vld [vmem:[%s4 + $0x88] sm:$0xff]
        %v1383 = vld [vmem:[%s4 + $0x90] sm:$0xff]
        %v1384 = vld [vmem:[%s4 + $0x98] sm:$0xff]
        %v1385 = vld [vmem:[%s4 + $0xa0] sm:$0xff]
        %v1386 = vld [vmem:[%s4 + $0xa8] sm:$0xff]
        %v1387 = vld [vmem:[%s4 + $0xb0] sm:$0xff]
        %v1388 = vld [vmem:[%s4 + $0xb8] sm:$0xff]
        %v1389 = vld [vmem:[%s4 + $0xc0] sm:$0xff]
        %v1390 = vld [vmem:[%s4 + $0xc8] sm:$0xff]
        %v1391 = vld [vmem:[%s4 + $0xd0] sm:$0xff]
        %v1392 = vld [vmem:[%s4 + $0xd8] sm:$0xff]
        %v1393 = vld [vmem:[%s4 + $0xe0] sm:$0xff]
        %v1394 = vld [vmem:[%s4 + $0xe8] sm:$0xff]
        %v1395 = vld [vmem:[%s4 + $0xf0] sm:$0xff]
        %v1396 = vld [vmem:[%s4 + $0xf8] sm:$0xff]
        %v1397 = vld [vmem:[%s4 + $0x100] sm:$0xff]
        %v1398 = vld [vmem:[%s4 + $0x108] sm:$0xff]
        %v1399 = vld [vmem:[%s4 + $0x110] sm:$0xff]
        %v1400 = vld [vmem:[%s4 + $0x118] sm:$0xff]
        %v1401 = vld [vmem:[%s4 + $0x120] sm:$0xff]
        %v1402 = vld [vmem:[%s4 + $0x128] sm:$0xff]
        %v1403 = vld [vmem:[%s4 + $0x130] sm:$0xff]
        %v1404 = vld [vmem:[%s4 + $0x138] sm:$0xff]
        %v1405 = vld [vmem:[%s4 + $0x140] sm:$0xff]
        %v1406 = vld [vmem:[%s4 + $0x148] sm:$0xff]
        %v1407 = vld [vmem:[%s4 + $0x150] sm:$0xff]
        %v1408 = vld [vmem:[%s4 + $0x158] sm:$0xff]
        %v1409 = vld [vmem:[%s4 + $0x160] sm:$0xff]
        %v1410 = vld [vmem:[%s4 + $0x168] sm:$0xff]
        %v1411 = vld [vmem:[%s4 + $0x170] sm:$0xff]
        %v1412 = vld [vmem:[%s4 + $0x178] sm:$0xff]
        %v1413 = vld [vmem:[%s4 + $0x180] sm:$0xff]
        %v1414 = vld [vmem:[%s4 + $0x188] sm:$0xff]
        %v1415 = vld [vmem:[%s4 + $0x190] sm:$0xff]
        %v1416 = vld [vmem:[%s4 + $0x198] sm:$0xff]
        %v1417 = vld [vmem:[%s4 + $0x1a0] sm:$0xff]
        %v1418 = vld [vmem:[%s4 + $0x1a8] sm:$0xff]
        %v1419 = vld [vmem:[%s4 + $0x1b0] sm:$0xff]
        %v1420 = vld [vmem:[%s4 + $0x1b8] sm:$0xff]
        %v1421 = vld [vmem:[%s4 + $0x1c0] sm:$0xff]
        %v1422 = vld [vmem:[%s4 + $0x1c8] sm:$0xff]
        %v1423 = vld [vmem:[%s4 + $0x1d0] sm:$0xff]
        %v1424 = vld [vmem:[%s4 + $0x1d8] sm:$0xff]
        %v1425 = vld [vmem:[%s4 + $0x1e0] sm:$0xff]
        %v1426 = vld [vmem:[%s4 + $0x1e8] sm:$0xff]
        %v1427 = vld [vmem:[%s4 + $0x1f0] sm:$0xff]
        %v1428 = vld [vmem:[%s4 + $0x1f8] sm:$0xff]
        %v1429 = vld [vmem:[%s5] sm:$0x3]
        %v1431 = vlaneseq
        %v1432 = vshrl.u32 %v1431, 7
        %v1433 = vsub.s32 0, %v1432
        %v1434 = vrot.slane %v1429, %v1433
        %v1435 = vlaneseq
        %v1436 = vshrl.u32 %v1435, 7
        %v1437 = vsub.s32 1, %v1436
        %v1438 = vrot.slane %v1429, %v1437
        %v1505 = vunpack.c.l.b16 %v1365
        %v1506 = vunpack.c.h.b16 %v1365
        %v1507 = vunpack.c.l.b16 %v1366
        %v1508 = vunpack.c.h.b16 %v1366
        %v1509 = vunpack.c.l.b16 %v1367
        %v1510 = vunpack.c.h.b16 %v1367
        %v1511 = vunpack.c.l.b16 %v1368
        %v1512 = vunpack.c.h.b16 %v1368
        %v1513 = vunpack.c.l.b16 %v1369
        %v1514 = vunpack.c.h.b16 %v1369
        %v1515 = vunpack.c.l.b16 %v1370
        %v1516 = vunpack.c.h.b16 %v1370
        %v1517 = vunpack.c.l.b16 %v1371
        %v1518 = vunpack.c.h.b16 %v1371
        %v1519 = vunpack.c.l.b16 %v1372
        %v1520 = vunpack.c.h.b16 %v1372
        %v1521 = vunpack.c.l.b16 %v1373
        %v1522 = vunpack.c.h.b16 %v1373
        %v1523 = vunpack.c.l.b16 %v1374
        %v1524 = vunpack.c.h.b16 %v1374
        %v1525 = vunpack.c.l.b16 %v1375
        %v1526 = vunpack.c.h.b16 %v1375
        %v1527 = vunpack.c.l.b16 %v1376
        %v1528 = vunpack.c.h.b16 %v1376
        %v1529 = vunpack.c.l.b16 %v1377
        %v1530 = vunpack.c.h.b16 %v1377
        %v1531 = vunpack.c.l.b16 %v1378
        %v1532 = vunpack.c.h.b16 %v1378
        %v1533 = vunpack.c.l.b16 %v1379
        %v1534 = vunpack.c.h.b16 %v1379
        %v1535 = vunpack.c.l.b16 %v1380
        %v1536 = vunpack.c.h.b16 %v1380
        %v1537 = vunpack.c.l.b16 %v1381
        %v1538 = vunpack.c.h.b16 %v1381
        %v1539 = vunpack.c.l.b16 %v1382
        %v1540 = vunpack.c.h.b16 %v1382
        %v1541 = vunpack.c.l.b16 %v1383
        %v1542 = vunpack.c.h.b16 %v1383
        %v1543 = vunpack.c.l.b16 %v1384
        %v1544 = vunpack.c.h.b16 %v1384
        %v1545 = vunpack.c.l.b16 %v1385
        %v1546 = vunpack.c.h.b16 %v1385
        %v1547 = vunpack.c.l.b16 %v1386
        %v1548 = vunpack.c.h.b16 %v1386
        %v1549 = vunpack.c.l.b16 %v1387
        %v1550 = vunpack.c.h.b16 %v1387
        %v1551 = vunpack.c.l.b16 %v1388
        %v1552 = vunpack.c.h.b16 %v1388
        %v1553 = vunpack.c.l.b16 %v1389
        %v1554 = vunpack.c.h.b16 %v1389
        %v1555 = vunpack.c.l.b16 %v1390
        %v1556 = vunpack.c.h.b16 %v1390
        %v1557 = vunpack.c.l.b16 %v1391
        %v1558 = vunpack.c.h.b16 %v1391
        %v1559 = vunpack.c.l.b16 %v1392
        %v1560 = vunpack.c.h.b16 %v1392
        %v1561 = vunpack.c.l.b16 %v1393
        %v1562 = vunpack.c.h.b16 %v1393
        %v1563 = vunpack.c.l.b16 %v1394
        %v1564 = vunpack.c.h.b16 %v1394
        %v1565 = vunpack.c.l.b16 %v1395
        %v1566 = vunpack.c.h.b16 %v1395
        %v1567 = vunpack.c.l.b16 %v1396
        %v1568 = vunpack.c.h.b16 %v1396
        %v1569 = vunpack.c.l.b16 %v1397
        %v1570 = vunpack.c.h.b16 %v1397
        %v1571 = vunpack.c.l.b16 %v1398
        %v1572 = vunpack.c.h.b16 %v1398
        %v1573 = vunpack.c.l.b16 %v1399
        %v1574 = vunpack.c.h.b16 %v1399
        %v1575 = vunpack.c.l.b16 %v1400
        %v1576 = vunpack.c.h.b16 %v1400
        %v1577 = vunpack.c.l.b16 %v1401
        %v1578 = vunpack.c.h.b16 %v1401
        %v1579 = vunpack.c.l.b16 %v1402
        %v1580 = vunpack.c.h.b16 %v1402
        %v1581 = vunpack.c.l.b16 %v1403
        %v1582 = vunpack.c.h.b16 %v1403
        %v1583 = vunpack.c.l.b16 %v1404
        %v1584 = vunpack.c.h.b16 %v1404
        %v1585 = vunpack.c.l.b16 %v1405
        %v1586 = vunpack.c.h.b16 %v1405
        %v1587 = vunpack.c.l.b16 %v1406
        %v1588 = vunpack.c.h.b16 %v1406
        %v1589 = vunpack.c.l.b16 %v1407
        %v1590 = vunpack.c.h.b16 %v1407
        %v1591 = vunpack.c.l.b16 %v1408
        %v1592 = vunpack.c.h.b16 %v1408
        %v1593 = vunpack.c.l.b16 %v1409
        %v1594 = vunpack.c.h.b16 %v1409
        %v1595 = vunpack.c.l.b16 %v1410
        %v1596 = vunpack.c.h.b16 %v1410
        %v1597 = vunpack.c.l.b16 %v1411
        %v1598 = vunpack.c.h.b16 %v1411
        %v1599 = vunpack.c.l.b16 %v1412
        %v1600 = vunpack.c.h.b16 %v1412
        %v1601 = vunpack.c.l.b16 %v1413
        %v1602 = vunpack.c.h.b16 %v1413
        %v1603 = vunpack.c.l.b16 %v1414
        %v1604 = vunpack.c.h.b16 %v1414
        %v1605 = vunpack.c.l.b16 %v1415
        %v1606 = vunpack.c.h.b16 %v1415
        %v1607 = vunpack.c.l.b16 %v1416
        %v1608 = vunpack.c.h.b16 %v1416
        %v1609 = vunpack.c.l.b16 %v1417
        %v1610 = vunpack.c.h.b16 %v1417
        %v1611 = vunpack.c.l.b16 %v1418
        %v1612 = vunpack.c.h.b16 %v1418
        %v1613 = vunpack.c.l.b16 %v1419
        %v1614 = vunpack.c.h.b16 %v1419
        %v1615 = vunpack.c.l.b16 %v1420
        %v1616 = vunpack.c.h.b16 %v1420
        %v1617 = vunpack.c.l.b16 %v1421
        %v1618 = vunpack.c.h.b16 %v1421
        %v1619 = vunpack.c.l.b16 %v1422
        %v1620 = vunpack.c.h.b16 %v1422
        %v1621 = vunpack.c.l.b16 %v1423
        %v1622 = vunpack.c.h.b16 %v1423
        %v1623 = vunpack.c.l.b16 %v1424
        %v1624 = vunpack.c.h.b16 %v1424
        %v1625 = vunpack.c.l.b16 %v1425
        %v1626 = vunpack.c.h.b16 %v1425
        %v1627 = vunpack.c.l.b16 %v1426
        %v1628 = vunpack.c.h.b16 %v1426
        %v1629 = vunpack.c.l.b16 %v1427
        %v1630 = vunpack.c.h.b16 %v1427
        %v1631 = vunpack.c.l.b16 %v1428
        %v1632 = vunpack.c.h.b16 %v1428
        %v1633 = vpack.c.b16 %v1507, %v1505
        %v1634 = vpack.c.b16 %v1508, %v1506
        %v1635 = vpack.c.b16 %v1511, %v1509
        %v1636 = vpack.c.b16 %v1512, %v1510
        %v1637 = vpack.c.b16 %v1515, %v1513
        %v1638 = vpack.c.b16 %v1516, %v1514
        %v1639 = vpack.c.b16 %v1519, %v1517
        %v1640 = vpack.c.b16 %v1520, %v1518
        %v1641 = vpack.c.b16 %v1523, %v1521
        %v1642 = vpack.c.b16 %v1524, %v1522
        %v1643 = vpack.c.b16 %v1527, %v1525
        %v1644 = vpack.c.b16 %v1528, %v1526
        %v1645 = vpack.c.b16 %v1531, %v1529
        %v1646 = vpack.c.b16 %v1532, %v1530
        %v1647 = vpack.c.b16 %v1535, %v1533
        %v1648 = vpack.c.b16 %v1536, %v1534
        %v1649 = vpack.c.b16 %v1539, %v1537
        %v1650 = vpack.c.b16 %v1540, %v1538
        %v1651 = vpack.c.b16 %v1543, %v1541
        %v1652 = vpack.c.b16 %v1544, %v1542
        %v1653 = vpack.c.b16 %v1547, %v1545
        %v1654 = vpack.c.b16 %v1548, %v1546
        %v1655 = vpack.c.b16 %v1551, %v1549
        %v1656 = vpack.c.b16 %v1552, %v1550
        %v1657 = vpack.c.b16 %v1555, %v1553
        %v1658 = vpack.c.b16 %v1556, %v1554
        %v1659 = vpack.c.b16 %v1559, %v1557
        %v1660 = vpack.c.b16 %v1560, %v1558
        %v1661 = vpack.c.b16 %v1563, %v1561
        %v1662 = vpack.c.b16 %v1564, %v1562
        %v1663 = vpack.c.b16 %v1567, %v1565
        %v1664 = vpack.c.b16 %v1568, %v1566
        %v1665 = vpack.c.b16 %v1571, %v1569
        %v1666 = vpack.c.b16 %v1572, %v1570
        %v1667 = vpack.c.b16 %v1575, %v1573
        %v1668 = vpack.c.b16 %v1576, %v1574
        %v1669 = vpack.c.b16 %v1579, %v1577
        %v1670 = vpack.c.b16 %v1580, %v1578
        %v1671 = vpack.c.b16 %v1583, %v1581
        %v1672 = vpack.c.b16 %v1584, %v1582
        %v1673 = vpack.c.b16 %v1587, %v1585
        %v1674 = vpack.c.b16 %v1588, %v1586
        %v1675 = vpack.c.b16 %v1591, %v1589
        %v1676 = vpack.c.b16 %v1592, %v1590
        %v1677 = vpack.c.b16 %v1595, %v1593
        %v1678 = vpack.c.b16 %v1596, %v1594
        %v1679 = vpack.c.b16 %v1599, %v1597
        %v1680 = vpack.c.b16 %v1600, %v1598
        %v1681 = vpack.c.b16 %v1603, %v1601
        %v1682 = vpack.c.b16 %v1604, %v1602
        %v1683 = vpack.c.b16 %v1607, %v1605
        %v1684 = vpack.c.b16 %v1608, %v1606
        %v1685 = vpack.c.b16 %v1611, %v1609
        %v1686 = vpack.c.b16 %v1612, %v1610
        %v1687 = vpack.c.b16 %v1615, %v1613
        %v1688 = vpack.c.b16 %v1616, %v1614
        %v1689 = vpack.c.b16 %v1619, %v1617
        %v1690 = vpack.c.b16 %v1620, %v1618
        %v1691 = vpack.c.b16 %v1623, %v1621
        %v1692 = vpack.c.b16 %v1624, %v1622
        %v1693 = vpack.c.b16 %v1627, %v1625
        %v1694 = vpack.c.b16 %v1628, %v1626
        %v1695 = vpack.c.b16 %v1631, %v1629
        %v1696 = vpack.c.b16 %v1632, %v1630
        %1761 = vmatprep.subr.bf16.mxu0 %v1634
        %1762 = vmatpush1.bf16.msra.mxu0 %v1633
        %1763 = vmatprep.subr.bf16.mxu0 %v1636
        %1764 = vmatpush1.bf16.msra.mxu0 %v1635
        %1765 = vmatprep.subr.bf16.mxu0 %v1638
        %1766 = vmatpush1.bf16.msra.mxu0 %v1637
        %1767 = vmatprep.subr.bf16.mxu0 %v1640
        %1768 = vmatpush1.bf16.msra.mxu0 %v1639
        %1769 = vmatprep.subr.bf16.mxu0 %v1642
        %1770 = vmatpush1.bf16.msra.mxu0 %v1641
        %1771 = vmatprep.subr.bf16.mxu0 %v1644
        %1772 = vmatpush1.bf16.msra.mxu0 %v1643
        %1773 = vmatprep.subr.bf16.mxu0 %v1646
        %1774 = vmatpush1.bf16.msra.mxu0 %v1645
        %1775 = vmatprep.subr.bf16.mxu0 %v1648
        %1776 = vmatpush1.bf16.msra.mxu0 %v1647
        %1777 = vmatprep.subr.bf16.mxu0 %v1650
        %1778 = vmatpush1.bf16.msra.mxu0 %v1649
        %1779 = vmatprep.subr.bf16.mxu0 %v1652
        %1780 = vmatpush1.bf16.msra.mxu0 %v1651
        %1781 = vmatprep.subr.bf16.mxu0 %v1654
        %1782 = vmatpush1.bf16.msra.mxu0 %v1653
        %1783 = vmatprep.subr.bf16.mxu0 %v1656
        %1784 = vmatpush1.bf16.msra.mxu0 %v1655
        %1785 = vmatprep.subr.bf16.mxu0 %v1658
        %1786 = vmatpush1.bf16.msra.mxu0 %v1657
        %1787 = vmatprep.subr.bf16.mxu0 %v1660
        %1788 = vmatpush1.bf16.msra.mxu0 %v1659
        %1789 = vmatprep.subr.bf16.mxu0 %v1662
        %1790 = vmatpush1.bf16.msra.mxu0 %v1661
        %1791 = vmatprep.subr.bf16.mxu0 %v1664
        %1792 = vmatpush1.bf16.msra.mxu0 %v1663
        %1793 = vmatprep.mubr.bf16.mxu0 %v1251
        %1794 = vmatmul.mubr.bf16.gmra.mrb[0].mxu0 %v716
        %v1795 = vpop.f32.mrb[0].mxu0
        %v1796 = vadd.f32 %v1434, %v1795
        %v1797 = vpop.f32.mrb[0].mxu0
        %v1798 = vadd.f32 %v1438, %v1797
        %v1799 = vpop.f32.mrb[0].mxu0
        %v1800 = vadd.f32 %v1434, %v1799
        %v1801 = vpop.f32.mrb[0].mxu0
        %v1802 = vadd.f32 %v1438, %v1801
        %1803 = vmatprep.mubr.bf16.mxu0 %v1252
        %1804 = vmatmul.mubr.bf16.gmra.mrb[0].mxu0 %v717
        %v1805 = vpop.f32.mrb[0].mxu0
        %v1806 = vadd.f32 %v1434, %v1805
        %v1807 = vpop.f32.mrb[0].mxu0
        %v1808 = vadd.f32 %v1438, %v1807
        %v1809 = vpop.f32.mrb[0].mxu0
        %v1810 = vadd.f32 %v1434, %v1809
        %v1811 = vpop.f32.mrb[0].mxu0
        %v1812 = vadd.f32 %v1438, %v1811
        %1813 = vmatprep.mubr.bf16.mxu0 %v1253
        %1814 = vmatmul.mubr.bf16.gmra.mrb[0].mxu0 %v718
        %v1815 = vpop.f32.mrb[0].mxu0
        %v1816 = vadd.f32 %v1434, %v1815
        %v1817 = vpop.f32.mrb[0].mxu0
        %v1818 = vadd.f32 %v1438, %v1817
        %v1819 = vpop.f32.mrb[0].mxu0
        %v1820 = vadd.f32 %v1434, %v1819
        %v1821 = vpop.f32.mrb[0].mxu0
        %v1822 = vadd.f32 %v1438, %v1821
        %1823 = vmatprep.mubr.bf16.mxu0 %v1254
        %1824 = vmatmul.mubr.bf16.gmra.mrb[0].mxu0 %v719
        %v1825 = vpop.f32.mrb[0].mxu0
        %v1826 = vadd.f32 %v1434, %v1825
        %v1827 = vpop.f32.mrb[0].mxu0
        %v1828 = vadd.f32 %v1438, %v1827
        %v1829 = vpop.f32.mrb[0].mxu0
        %v1830 = vadd.f32 %v1434, %v1829
        %v1831 = vpop.f32.mrb[0].mxu0
        %v1832 = vadd.f32 %v1438, %v1831
        %1833 = vmatprep.mubr.bf16.mxu0 %v1255
        %1834 = vmatmul.mubr.bf16.gmra.mrb[0].mxu0 %v720
        %v1835 = vpop.f32.mrb[0].mxu0
        %v1836 = vadd.f32 %v1434, %v1835
        %v1837 = vpop.f32.mrb[0].mxu0
        %v1838 = vadd.f32 %v1438, %v1837
        %v1839 = vpop.f32.mrb[0].mxu0
        %v1840 = vadd.f32 %v1434, %v1839
        %v1841 = vpop.f32.mrb[0].mxu0
        %v1842 = vadd.f32 %v1438, %v1841
        %1843 = vmatprep.mubr.bf16.mxu0 %v1256
        %1844 = vmatmul.mubr.bf16.gmra.mrb[0].mxu0 %v721
        %v1845 = vpop.f32.mrb[0].mxu0
        %v1846 = vadd.f32 %v1434, %v1845
        %v1847 = vpop.f32.mrb[0].mxu0
        %v1848 = vadd.f32 %v1438, %v1847
        %v1849 = vpop.f32.mrb[0].mxu0
        %v1850 = vadd.f32 %v1434, %v1849
        %v1851 = vpop.f32.mrb[0].mxu0
        %v1852 = vadd.f32 %v1438, %v1851
        %1853 = vmatprep.mubr.bf16.mxu0 %v1257
        %1854 = vmatmul.mubr.bf16.gmra.mrb[0].mxu0 %v722
        %v1855 = vpop.f32.mrb[0].mxu0
        %v1856 = vadd.f32 %v1434, %v1855
        %v1857 = vpop.f32.mrb[0].mxu0
        %v1858 = vadd.f32 %v1438, %v1857
        %v1859 = vpop.f32.mrb[0].mxu0
        %v1860 = vadd.f32 %v1434, %v1859
        %v1861 = vpop.f32.mrb[0].mxu0
        %v1862 = vadd.f32 %v1438, %v1861
        %1863 = vmatprep.mubr.bf16.mxu0 %v1258
        %1864 = vmatmul.mubr.bf16.gmra.mrb[0].mxu0 %v723
        %v1865 = vpop.f32.mrb[0].mxu0
        %v1866 = vadd.f32 %v1434, %v1865
        %v1867 = vpop.f32.mrb[0].mxu0
        %v1868 = vadd.f32 %v1438, %v1867
        %v1869 = vpop.f32.mrb[0].mxu0
        %v1870 = vadd.f32 %v1434, %v1869
        %v1871 = vpop.f32.mrb[0].mxu0
        %v1872 = vadd.f32 %v1438, %v1871
        %1873 = vmatprep.mubr.bf16.mxu0 %v1259
        %1874 = vmatmul.mubr.bf16.gmra.mrb[0].mxu0 %v724
        %v1875 = vpop.f32.mrb[0].mxu0
        %v1876 = vadd.f32 %v1434, %v1875
        %v1877 = vpop.f32.mrb[0].mxu0
        %v1878 = vadd.f32 %v1438, %v1877
        %v1879 = vpop.f32.mrb[0].mxu0
        %v1880 = vadd.f32 %v1434, %v1879
        %v1881 = vpop.f32.mrb[0].mxu0
        %v1882 = vadd.f32 %v1438, %v1881
        %1883 = vmatprep.mubr.bf16.mxu0 %v1260
        %1884 = vmatmul.mubr.bf16.gmra.mrb[0].mxu0 %v725
        %v1885 = vpop.f32.mrb[0].mxu0
        %v1886 = vadd.f32 %v1434, %v1885
        %v1887 = vpop.f32.mrb[0].mxu0
        %v1888 = vadd.f32 %v1438, %v1887
        %v1889 = vpop.f32.mrb[0].mxu0
        %v1890 = vadd.f32 %v1434, %v1889
        %v1891 = vpop.f32.mrb[0].mxu0
        %v1892 = vadd.f32 %v1438, %v1891
        %1893 = vmatprep.mubr.bf16.mxu0 %v1261
        %1894 = vmatmul.mubr.bf16.gmra.mrb[0].mxu0 %v726
        %v1895 = vpop.f32.mrb[0].mxu0
        %v1896 = vadd.f32 %v1434, %v1895
        %v1897 = vpop.f32.mrb[0].mxu0
        %v1898 = vadd.f32 %v1438, %v1897
        %v1899 = vpop.f32.mrb[0].mxu0
        %v1900 = vadd.f32 %v1434, %v1899
        %v1901 = vpop.f32.mrb[0].mxu0
        %v1902 = vadd.f32 %v1438, %v1901
        %1903 = vmatprep.mubr.bf16.mxu0 %v1262
        %1904 = vmatmul.mubr.bf16.gmra.mrb[0].mxu0 %v727
        %v1905 = vpop.f32.mrb[0].mxu0
        %v1906 = vadd.f32 %v1434, %v1905
        %v1907 = vpop.f32.mrb[0].mxu0
        %v1908 = vadd.f32 %v1438, %v1907
        %v1909 = vpop.f32.mrb[0].mxu0
        %v1910 = vadd.f32 %v1434, %v1909
        %v1911 = vpop.f32.mrb[0].mxu0
        %v1912 = vadd.f32 %v1438, %v1911
        %1913 = vmatprep.mubr.bf16.mxu0 %v1263
        %1914 = vmatmul.mubr.bf16.gmra.mrb[0].mxu0 %v728
        %v1915 = vpop.f32.mrb[0].mxu0
        %v1916 = vadd.f32 %v1434, %v1915
        %v1917 = vpop.f32.mrb[0].mxu0
        %v1918 = vadd.f32 %v1438, %v1917
        %v1919 = vpop.f32.mrb[0].mxu0
        %v1920 = vpop.f32.mrb[0].mxu0
        %1921 = vdwg.mxu0
        %1922 = vmatprep.subr.bf16.mxu0 %v1666
        %1923 = vmatpush1.bf16.msra.mxu0 %v1665
        %1924 = vmatprep.subr.bf16.mxu0 %v1668
        %1925 = vmatpush1.bf16.msra.mxu0 %v1667
        %1926 = vmatprep.subr.bf16.mxu0 %v1670
        %1927 = vmatpush1.bf16.msra.mxu0 %v1669
        %1928 = vmatprep.subr.bf16.mxu0 %v1672
        %1929 = vmatpush1.bf16.msra.mxu0 %v1671
        %1930 = vmatprep.subr.bf16.mxu0 %v1674
        %1931 = vmatpush1.bf16.msra.mxu0 %v1673
        %1932 = vmatprep.subr.bf16.mxu0 %v1676
        %1933 = vmatpush1.bf16.msra.mxu0 %v1675
        %1934 = vmatprep.subr.bf16.mxu0 %v1678
        %1935 = vmatpush1.bf16.msra.mxu0 %v1677
        %1936 = vmatprep.subr.bf16.mxu0 %v1680
        %1937 = vmatpush1.bf16.msra.mxu0 %v1679
        %1938 = vmatprep.subr.bf16.mxu0 %v1682
        %1939 = vmatpush1.bf16.msra.mxu0 %v1681
        %1940 = vmatprep.subr.bf16.mxu0 %v1684
        %1941 = vmatpush1.bf16.msra.mxu0 %v1683
        %1942 = vmatprep.subr.bf16.mxu0 %v1686
        %1943 = vmatpush1.bf16.msra.mxu0 %v1685
        %1944 = vmatprep.subr.bf16.mxu0 %v1688
        %1945 = vmatpush1.bf16.msra.mxu0 %v1687
        %1946 = vmatprep.subr.bf16.mxu0 %v1690
        %1947 = vmatpush1.bf16.msra.mxu0 %v1689
        %1948 = vmatprep.subr.bf16.mxu0 %v1692
        %1949 = vmatpush1.bf16.msra.mxu0 %v1691
        %1950 = vmatprep.subr.bf16.mxu0 %v1694
        %1951 = vmatpush1.bf16.msra.mxu0 %v1693
        %1952 = vmatprep.subr.bf16.mxu0 %v1696
        %1953 = vmatpush1.bf16.msra.mxu0 %v1695
        %1954 = vmatprep.mubr.bf16.mxu0 %v1330
        %1955 = vmatmul.mubr.bf16.gmra.mrb[0].mxu0 %v1279
        %v1956 = vpop.f32.mrb[0].mxu0
        %v1957 = vadd.f32 %v1796, %v1956
        %v1958 = vpop.f32.mrb[0].mxu0
        %v1959 = vadd.f32 %v1798, %v1958
        %v1960 = vpop.f32.mrb[0].mxu0
        %v1961 = vadd.f32 %v1800, %v1960
        %v1962 = vpop.f32.mrb[0].mxu0
        %v1963 = vadd.f32 %v1802, %v1962
        %1964 = vmatprep.mubr.bf16.mxu0 %v1332
        %1965 = vmatmul.mubr.bf16.gmra.mrb[0].mxu0 %v1281
        %v1966 = vpop.f32.mrb[0].mxu0
        %v1967 = vadd.f32 %v1806, %v1966
        %v1968 = vpop.f32.mrb[0].mxu0
        %v1969 = vadd.f32 %v1808, %v1968
        %v1970 = vpop.f32.mrb[0].mxu0
        %v1971 = vadd.f32 %v1810, %v1970
        %v1972 = vpop.f32.mrb[0].mxu0
        %v1973 = vadd.f32 %v1812, %v1972
        %1974 = vmatprep.mubr.bf16.mxu0 %v1334
        %1975 = vmatmul.mubr.bf16.gmra.mrb[0].mxu0 %v1283
        %v1976 = vpop.f32.mrb[0].mxu0
        %v1977 = vadd.f32 %v1816, %v1976
        %v1978 = vpop.f32.mrb[0].mxu0
        %v1979 = vadd.f32 %v1818, %v1978
        %v1980 = vpop.f32.mrb[0].mxu0
        %v1981 = vadd.f32 %v1820, %v1980
        %v1982 = vpop.f32.mrb[0].mxu0
        %v1983 = vadd.f32 %v1822, %v1982
        %1984 = vmatprep.mubr.bf16.mxu0 %v1336
        %1985 = vmatmul.mubr.bf16.gmra.mrb[0].mxu0 %v1285
        %v1986 = vpop.f32.mrb[0].mxu0
        %v1987 = vadd.f32 %v1826, %v1986
        %v1988 = vpop.f32.mrb[0].mxu0
        %v1989 = vadd.f32 %v1828, %v1988
        %v1990 = vpop.f32.mrb[0].mxu0
        %v1991 = vadd.f32 %v1830, %v1990
        %v1992 = vpop.f32.mrb[0].mxu0
        %v1993 = vadd.f32 %v1832, %v1992
        %1994 = vmatprep.mubr.bf16.mxu0 %v1338
        %1995 = vmatmul.mubr.bf16.gmra.mrb[0].mxu0 %v1287
        %v1996 = vpop.f32.mrb[0].mxu0
        %v1997 = vadd.f32 %v1836, %v1996
        %v1998 = vpop.f32.mrb[0].mxu0
        %v1999 = vadd.f32 %v1838, %v1998
        %v2000 = vpop.f32.mrb[0].mxu0
        %v2001 = vadd.f32 %v1840, %v2000
        %v2002 = vpop.f32.mrb[0].mxu0
        %v2003 = vadd.f32 %v1842, %v2002
        %2004 = vmatprep.mubr.bf16.mxu0 %v1340
        %2005 = vmatmul.mubr.bf16.gmra.mrb[0].mxu0 %v1289
        %v2006 = vpop.f32.mrb[0].mxu0
        %v2007 = vadd.f32 %v1846, %v2006
        %v2008 = vpop.f32.mrb[0].mxu0
        %v2009 = vadd.f32 %v1848, %v2008
        %v2010 = vpop.f32.mrb[0].mxu0
        %v2011 = vadd.f32 %v1850, %v2010
        %v2012 = vpop.f32.mrb[0].mxu0
        %v2013 = vadd.f32 %v1852, %v2012
        %2014 = vmatprep.mubr.bf16.mxu0 %v1342
        %2015 = vmatmul.mubr.bf16.gmra.mrb[0].mxu0 %v1291
        %v2016 = vpop.f32.mrb[0].mxu0
        %v2017 = vadd.f32 %v1856, %v2016
        %v2018 = vpop.f32.mrb[0].mxu0
        %v2019 = vadd.f32 %v1858, %v2018
        %v2020 = vpop.f32.mrb[0].mxu0
        %v2021 = vadd.f32 %v1860, %v2020
        %v2022 = vpop.f32.mrb[0].mxu0
        %v2023 = vadd.f32 %v1862, %v2022
        %2024 = vmatprep.mubr.bf16.mxu0 %v1344
        %2025 = vmatmul.mubr.bf16.gmra.mrb[0].mxu0 %v1293
        %v2026 = vpop.f32.mrb[0].mxu0
        %v2027 = vadd.f32 %v1866, %v2026
        %v2028 = vpop.f32.mrb[0].mxu0
        %v2029 = vadd.f32 %v1868, %v2028
        %v2030 = vpop.f32.mrb[0].mxu0
        %v2031 = vadd.f32 %v1870, %v2030
        %v2032 = vpop.f32.mrb[0].mxu0
        %v2033 = vadd.f32 %v1872, %v2032
        %2034 = vmatprep.mubr.bf16.mxu0 %v1346
        %2035 = vmatmul.mubr.bf16.gmra.mrb[0].mxu0 %v1295
        %v2036 = vpop.f32.mrb[0].mxu0
        %v2037 = vadd.f32 %v1876, %v2036
        %v2038 = vpop.f32.mrb[0].mxu0
        %v2039 = vadd.f32 %v1878, %v2038
        %v2040 = vpop.f32.mrb[0].mxu0
        %v2041 = vadd.f32 %v1880, %v2040
        %v2042 = vpop.f32.mrb[0].mxu0
        %v2043 = vadd.f32 %v1882, %v2042
        %2044 = vmatprep.mubr.bf16.mxu0 %v1348
        %2045 = vmatmul.mubr.bf16.gmra.mrb[0].mxu0 %v1297
        %v2046 = vpop.f32.mrb[0].mxu0
        %v2047 = vadd.f32 %v1886, %v2046
        %v2048 = vpop.f32.mrb[0].mxu0
        %v2049 = vadd.f32 %v1888, %v2048
        %v2050 = vpop.f32.mrb[0].mxu0
        %v2051 = vadd.f32 %v1890, %v2050
        %v2052 = vpop.f32.mrb[0].mxu0
        %v2053 = vadd.f32 %v1892, %v2052
        %2054 = vmatprep.mubr.bf16.mxu0 %v1350
        %2055 = vmatmul.mubr.bf16.gmra.mrb[0].mxu0 %v1299
        %v2056 = vpop.f32.mrb[0].mxu0
        %v2057 = vadd.f32 %v1896, %v2056
        %v2058 = vpop.f32.mrb[0].mxu0
        %v2059 = vadd.f32 %v1898, %v2058
        %v2060 = vpop.f32.mrb[0].mxu0
        %v2061 = vadd.f32 %v1900, %v2060
        %v2062 = vpop.f32.mrb[0].mxu0
        %v2063 = vadd.f32 %v1902, %v2062
        %2064 = vmatprep.mubr.bf16.mxu0 %v1363
        %2065 = vmatmul.mubr.bf16.gmra.mrb[0].mxu0 %v1314
        %v2066 = vpop.f32.mrb[0].mxu0
        %v2067 = vadd.f32 %v1906, %v2066
        %v2068 = vpop.f32.mrb[0].mxu0
        %v2069 = vadd.f32 %v1908, %v2068
        %v2070 = vpop.f32.mrb[0].mxu0
        %v2071 = vadd.f32 %v1910, %v2070
        %v2072 = vpop.f32.mrb[0].mxu0
        %v2073 = vadd.f32 %v1912, %v2072
        %2074 = vmatprep.mubr.bf16.mxu0 0
        %2075 = vmatmul.mubr.bf16.gmra.mrb[0].mxu0 0
        %v2076 = vpop.f32.mrb[0].mxu0
        %v2077 = vadd.f32 %v1916, %v2076
        %v2078 = vpop.f32.mrb[0].mxu0
        %v2079 = vadd.f32 %v1918, %v2078
        %v2080 = vpop.f32.mrb[0].mxu0
        %v2081 = vpop.f32.mrb[0].mxu0
        %2082 = vdwg.mxu0
        %v2083 = vmax.f32 %v1957, 0.0
        %v2084 = vmax.f32 %v1959, 0.0
        %v2085 = vmax.f32 %v1961, 0.0
        %v2086 = vmax.f32 %v1963, 0.0
        %v2087 = vmax.f32 %v1967, 0.0
        %v2088 = vmax.f32 %v1969, 0.0
        %v2089 = vmax.f32 %v1971, 0.0
        %v2090 = vmax.f32 %v1973, 0.0
        %v2091 = vmax.f32 %v1977, 0.0
        %v2092 = vmax.f32 %v1979, 0.0
        %v2093 = vmax.f32 %v1981, 0.0
        %v2094 = vmax.f32 %v1983, 0.0
        %v2095 = vmax.f32 %v1987, 0.0
        %v2096 = vmax.f32 %v1989, 0.0
        %v2097 = vmax.f32 %v1991, 0.0
        %v2098 = vmax.f32 %v1993, 0.0
        %v2099 = vmax.f32 %v1997, 0.0
        %v2100 = vmax.f32 %v1999, 0.0
        %v2101 = vmax.f32 %v2001, 0.0
        %v2102 = vmax.f32 %v2003, 0.0
        %v2103 = vmax.f32 %v2007, 0.0
        %v2104 = vmax.f32 %v2009, 0.0
        %v2105 = vmax.f32 %v2011, 0.0
        %v2106 = vmax.f32 %v2013, 0.0
        %v2107 = vmax.f32 %v2017, 0.0
        %v2108 = vmax.f32 %v2019, 0.0
        %v2109 = vmax.f32 %v2021, 0.0
        %v2110 = vmax.f32 %v2023, 0.0
        %v2111 = vmax.f32 %v2027, 0.0
        %v2112 = vmax.f32 %v2029, 0.0
        %v2113 = vmax.f32 %v2031, 0.0
        %v2114 = vmax.f32 %v2033, 0.0
        %v2115 = vmax.f32 %v2037, 0.0
        %v2116 = vmax.f32 %v2039, 0.0
        %v2117 = vmax.f32 %v2041, 0.0
        %v2118 = vmax.f32 %v2043, 0.0
        %v2119 = vmax.f32 %v2047, 0.0
        %v2120 = vmax.f32 %v2049, 0.0
        %v2121 = vmax.f32 %v2051, 0.0
        %v2122 = vmax.f32 %v2053, 0.0
        %v2123 = vmax.f32 %v2057, 0.0
        %v2124 = vmax.f32 %v2059, 0.0
        %v2125 = vmax.f32 %v2061, 0.0
        %v2126 = vmax.f32 %v2063, 0.0
        %v2127 = vmax.f32 %v2067, 0.0
        %v2128 = vmax.f32 %v2069, 0.0
        %v2129 = vmax.f32 %v2071, 0.0
        %v2130 = vmax.f32 %v2073, 0.0
        %v2131 = vmax.f32 %v2077, 0.0
        %v2132 = vmax.f32 %v2079, 0.0
        %v2133 = vpack.c.bf16 %v2085, %v2083
        %v2134 = vpack.c.bf16 %v2089, %v2087
        %v2135 = vpack.c.bf16 %v2093, %v2091
        %v2136 = vpack.c.bf16 %v2097, %v2095
        %v2137 = vpack.c.bf16 %v2101, %v2099
        %v2138 = vpack.c.bf16 %v2105, %v2103
        %v2139 = vpack.c.bf16 %v2109, %v2107
        %v2140 = vpack.c.bf16 %v2113, %v2111
        %v2141 = vpack.c.bf16 %v2117, %v2115
        %v2142 = vpack.c.bf16 %v2121, %v2119
        %v2143 = vpack.c.bf16 %v2125, %v2123
        %v2144 = vpack.c.bf16 %v2129, %v2127
        %v2145 = vpack.c.bf16 %v2131, %v2131
        %v2159 = vunpack.c.l.b16 %v2133
        %v2160 = vunpack.c.h.b16 %v2133
        %v2161 = vunpack.c.l.b16 %v2134
        %v2162 = vunpack.c.h.b16 %v2134
        %v2163 = vunpack.c.l.b16 %v2135
        %v2164 = vunpack.c.h.b16 %v2135
        %v2165 = vunpack.c.l.b16 %v2136
        %v2166 = vunpack.c.h.b16 %v2136
        %v2167 = vunpack.c.l.b16 %v2137
        %v2168 = vunpack.c.h.b16 %v2137
        %v2169 = vunpack.c.l.b16 %v2138
        %v2170 = vunpack.c.h.b16 %v2138
        %v2171 = vunpack.c.l.b16 %v2139
        %v2172 = vunpack.c.h.b16 %v2139
        %v2173 = vunpack.c.l.b16 %v2140
        %v2174 = vunpack.c.h.b16 %v2140
        %v2175 = vunpack.c.l.b16 %v2141
        %v2176 = vunpack.c.h.b16 %v2141
        %v2177 = vunpack.c.l.b16 %v2142
        %v2178 = vunpack.c.h.b16 %v2142
        %v2179 = vunpack.c.l.b16 %v2143
        %v2180 = vunpack.c.h.b16 %v2143
        %v2181 = vunpack.c.l.b16 %v2144
        %v2182 = vunpack.c.h.b16 %v2144
        %v2183 = vunpack.c.l.b16 %v2145
        %v2184 = vpack.c.b16 %v2159, %v2159
        %v2185 = vpack.c.b16 %v2160, %v2160
        %v2186 = vpack.c.b16 %v2161, %v2161
        %v2187 = vpack.c.b16 %v2162, %v2162
        %v2188 = vpack.c.b16 %v2163, %v2163
        %v2189 = vpack.c.b16 %v2164, %v2164
        %v2190 = vpack.c.b16 %v2165, %v2165
        %v2191 = vpack.c.b16 %v2166, %v2166
        %v2192 = vpack.c.b16 %v2167, %v2167
        %v2193 = vpack.c.b16 %v2168, %v2168
        %v2194 = vpack.c.b16 %v2169, %v2169
        %v2195 = vpack.c.b16 %v2170, %v2170
        %v2196 = vpack.c.b16 %v2171, %v2171
        %v2197 = vpack.c.b16 %v2172, %v2172
        %v2198 = vpack.c.b16 %v2173, %v2173
        %v2199 = vpack.c.b16 %v2174, %v2174
        %v2200 = vpack.c.b16 %v2175, %v2175
        %v2201 = vpack.c.b16 %v2176, %v2176
        %v2202 = vpack.c.b16 %v2177, %v2177
        %v2203 = vpack.c.b16 %v2178, %v2178
        %v2204 = vpack.c.b16 %v2179, %v2179
        %v2205 = vpack.c.b16 %v2180, %v2180
        %v2206 = vpack.c.b16 %v2181, %v2181
        %v2207 = vpack.c.b16 %v2182, %v2182
        %v2208 = vpack.c.b16 %v2183, %v2183
        %2234 = vst [vmem:[%s266] sm:$0xf] %v2184
        %2235 = vst [vmem:[%s266 + $0x4] sm:$0xf] %v2185
        %2236 = vst [vmem:[%s266 + $0x8] sm:$0xf] %v2186
        %2237 = vst [vmem:[%s266 + $0xc] sm:$0xf] %v2187
        %2238 = vst [vmem:[%s266 + $0x10] sm:$0xf] %v2188
        %2239 = vst [vmem:[%s266 + $0x14] sm:$0xf] %v2189
        %2240 = vst [vmem:[%s266 + $0x18] sm:$0xf] %v2190
        %2241 = vst [vmem:[%s266 + $0x1c] sm:$0xf] %v2191
        %2242 = vst [vmem:[%s266 + $0x20] sm:$0xf] %v2192
        %2243 = vst [vmem:[%s266 + $0x24] sm:$0xf] %v2193
        %2244 = vst [vmem:[%s266 + $0x28] sm:$0xf] %v2194
        %2245 = vst [vmem:[%s266 + $0x2c] sm:$0xf] %v2195
        %2246 = vst [vmem:[%s266 + $0x30] sm:$0xf] %v2196
        %2247 = vst [vmem:[%s266 + $0x34] sm:$0xf] %v2197
        %2248 = vst [vmem:[%s266 + $0x38] sm:$0xf] %v2198
        %2249 = vst [vmem:[%s266 + $0x3c] sm:$0xf] %v2199
        %2250 = vst [vmem:[%s266 + $0x40] sm:$0xf] %v2200
        %2251 = vst [vmem:[%s266 + $0x44] sm:$0xf] %v2201
        %2252 = vst [vmem:[%s266 + $0x48] sm:$0xf] %v2202
        %2253 = vst [vmem:[%s266 + $0x4c] sm:$0xf] %v2203
        %2254 = vst [vmem:[%s266 + $0x50] sm:$0xf] %v2204
        %2255 = vst [vmem:[%s266 + $0x54] sm:$0xf] %v2205
        %2256 = vst [vmem:[%s266 + $0x58] sm:$0xf] %v2206
        %2257 = vst [vmem:[%s266 + $0x5c] sm:$0xf] %v2207
        %2258 = vst [vmem:[%s266 + $0x60] sm:$0xf] %v2208
        %v2259 = vpack.c.bf16 %v2086, %v2084
        %v2260 = vpack.c.bf16 %v2090, %v2088
        %v2261 = vpack.c.bf16 %v2094, %v2092
        %v2262 = vpack.c.bf16 %v2098, %v2096
        %v2263 = vpack.c.bf16 %v2102, %v2100
        %v2264 = vpack.c.bf16 %v2106, %v2104
        %v2265 = vpack.c.bf16 %v2110, %v2108
        %v2266 = vpack.c.bf16 %v2114, %v2112
        %v2267 = vpack.c.bf16 %v2118, %v2116
        %v2268 = vpack.c.bf16 %v2122, %v2120
        %v2269 = vpack.c.bf16 %v2126, %v2124
        %v2270 = vpack.c.bf16 %v2130, %v2128
        %v2271 = vpack.c.bf16 %v2132, %v2132
        %v2285 = vunpack.c.l.b16 %v2259
        %v2286 = vunpack.c.h.b16 %v2259
        %v2287 = vunpack.c.l.b16 %v2260
        %v2288 = vunpack.c.h.b16 %v2260
        %v2289 = vunpack.c.l.b16 %v2261
        %v2290 = vunpack.c.h.b16 %v2261
        %v2291 = vunpack.c.l.b16 %v2262
        %v2292 = vunpack.c.h.b16 %v2262
        %v2293 = vunpack.c.l.b16 %v2263
        %v2294 = vunpack.c.h.b16 %v2263
        %v2295 = vunpack.c.l.b16 %v2264
        %v2296 = vunpack.c.h.b16 %v2264
        %v2297 = vunpack.c.l.b16 %v2265
        %v2298 = vunpack.c.h.b16 %v2265
        %v2299 = vunpack.c.l.b16 %v2266
        %v2300 = vunpack.c.h.b16 %v2266
        %v2301 = vunpack.c.l.b16 %v2267
        %v2302 = vunpack.c.h.b16 %v2267
        %v2303 = vunpack.c.l.b16 %v2268
        %v2304 = vunpack.c.h.b16 %v2268
        %v2305 = vunpack.c.l.b16 %v2269
        %v2306 = vunpack.c.h.b16 %v2269
        %v2307 = vunpack.c.l.b16 %v2270
        %v2308 = vunpack.c.h.b16 %v2270
        %v2309 = vunpack.c.l.b16 %v2271
        %v2310 = vpack.c.b16 %v2285, %v2285
        %v2311 = vpack.c.b16 %v2286, %v2286
        %v2312 = vpack.c.b16 %v2287, %v2287
        %v2313 = vpack.c.b16 %v2288, %v2288
        %v2314 = vpack.c.b16 %v2289, %v2289
        %v2315 = vpack.c.b16 %v2290, %v2290
        %v2316 = vpack.c.b16 %v2291, %v2291
        %v2317 = vpack.c.b16 %v2292, %v2292
        %v2318 = vpack.c.b16 %v2293, %v2293
        %v2319 = vpack.c.b16 %v2294, %v2294
        %v2320 = vpack.c.b16 %v2295, %v2295
        %v2321 = vpack.c.b16 %v2296, %v2296
        %v2322 = vpack.c.b16 %v2297, %v2297
        %v2323 = vpack.c.b16 %v2298, %v2298
        %v2324 = vpack.c.b16 %v2299, %v2299
        %v2325 = vpack.c.b16 %v2300, %v2300
        %v2326 = vpack.c.b16 %v2301, %v2301
        %v2327 = vpack.c.b16 %v2302, %v2302
        %v2328 = vpack.c.b16 %v2303, %v2303
        %v2329 = vpack.c.b16 %v2304, %v2304
        %v2330 = vpack.c.b16 %v2305, %v2305
        %v2331 = vpack.c.b16 %v2306, %v2306
        %v2332 = vpack.c.b16 %v2307, %v2307
        %v2333 = vpack.c.b16 %v2308, %v2308
        %v2334 = vpack.c.b16 %v2309, %v2309
        %s2360 = scalar_lea.vmem %s266, 100
        %2361 = vst [vmem:[%s2360] sm:$0xf] %v2310
        %2362 = vst [vmem:[%s2360 + $0x4] sm:$0xf] %v2311
        %2363 = vst [vmem:[%s2360 + $0x8] sm:$0xf] %v2312
        %2364 = vst [vmem:[%s2360 + $0xc] sm:$0xf] %v2313
        %2365 = vst [vmem:[%s2360 + $0x10] sm:$0xf] %v2314
        %2366 = vst [vmem:[%s2360 + $0x14] sm:$0xf] %v2315
        %2367 = vst [vmem:[%s2360 + $0x18] sm:$0xf] %v2316
        %2368 = vst [vmem:[%s2360 + $0x1c] sm:$0xf] %v2317
        %2369 = vst [vmem:[%s2360 + $0x20] sm:$0xf] %v2318
        %2370 = vst [vmem:[%s2360 + $0x24] sm:$0xf] %v2319
        %2371 = vst [vmem:[%s2360 + $0x28] sm:$0xf] %v2320
        %2372 = vst [vmem:[%s2360 + $0x2c] sm:$0xf] %v2321
        %2373 = vst [vmem:[%s2360 + $0x30] sm:$0xf] %v2322
        %2374 = vst [vmem:[%s2360 + $0x34] sm:$0xf] %v2323
        %2375 = vst [vmem:[%s2360 + $0x38] sm:$0xf] %v2324
        %2376 = vst [vmem:[%s2360 + $0x3c] sm:$0xf] %v2325
        %2377 = vst [vmem:[%s2360 + $0x40] sm:$0xf] %v2326
        %2378 = vst [vmem:[%s2360 + $0x44] sm:$0xf] %v2327
        %2379 = vst [vmem:[%s2360 + $0x48] sm:$0xf] %v2328
        %2380 = vst [vmem:[%s2360 + $0x4c] sm:$0xf] %v2329
        %2381 = vst [vmem:[%s2360 + $0x50] sm:$0xf] %v2330
        %2382 = vst [vmem:[%s2360 + $0x54] sm:$0xf] %v2331
        %2383 = vst [vmem:[%s2360 + $0x58] sm:$0xf] %v2332
        %2384 = vst [vmem:[%s2360 + $0x5c] sm:$0xf] %v2333
        %2385 = vst [vmem:[%s2360 + $0x60] sm:$0xf] %v2334
        %p2386 = scmp.lt.s32.totalorder %s18, 1
        %s2387 = scalar_select %p2386, %s18, 1
        %s2388 = smul.addr %s2387, 50
        %s2389 = smul.addr %s2388, 4
        %s2390 = scalar_lea.vmem %s6, %s2389
        // Predicated region
        $region49: #{upconv_neck_forward.2} parent=43 // pred_check
          %p2391 = pneg %p167
        $region50: #{upconv_neck_forward.2} parent=43 // pred_check_branch
          %2393 = sbr.rel (%p2391) target = $region52
        $region51: #{upconv_neck_forward.2} parent=43 // pred_region
          _
        $region52: #{upconv_neck_forward.2} parent=43 // pred_fallthru
          _
      $region44: #{upconv_neck_forward.2} parent=5 // pred_fallthru
        _
      %p2394 = scmp.le.s32.totalorder 2, %s13
      // Predicated region
      $region53: #{upconv_neck_forward.2} parent=5 // pred_check
        %p2395 = pneg %p2394
      $region54: #{upconv_neck_forward.2} parent=5 // pred_check_branch
        %2397 = sbr.rel (%p2395) target = $region56
      $region55: #{upconv_neck_forward.2} parent=5 // pred_region
        %s2398 = ssub.s32 %s13, 2
        // Predicated region
        $region57: #{upconv_neck_forward.2} parent=55 // pred_check
          %p2399 = pneg %p173
        $region58: #{upconv_neck_forward.2} parent=55 // pred_check_branch
          %2401 = sbr.rel (%p2399) target = $region60
        $region59: #{upconv_neck_forward.2} parent=55 // pred_region
          %p2402 = scmp.lt.s32.totalorder %s19, 1
          %s2403 = scalar_select %p2402, %s19, 1
          %s2404 = smul.addr %s2403, 50
          %s2405 = smul.addr %s2404, 4
          %s2406 = scalar_lea.vmem %s6, %s2405
        $region60: #{upconv_neck_forward.2} parent=55 // pred_fallthru
          _
      $region56: #{upconv_neck_forward.2} parent=5 // pred_fallthru
        _
    $region6: #{upconv_neck_forward.2} parent=1 // loop_footer
      %s17 = sadd.s32 1, %s13
    $region7: #{upconv_neck_forward.2} parent=1 // loop_footer_branch
      %12 = sbr.rel target = $region3
    $region8: #{upconv_neck_forward.2} parent=1 // loop_exit
      _
    %2407 = vsyncpa [#allocation3], 1
    %s2408 = scalar_lea.sflag [#allocation3], 1
    %2409 = vsyncpa %s2408, 1

// kernel: upconv_neck_forward.3
$region0: #{upconv_neck_forward.3}
  #allocation0 [shape = 'u32[]', space=smem, size = 0x4, offset = 0x4, fixed_abs, tag = 'smem constant byte address 0x4 - core index']
  #allocation1 [shape = 'u32[144,128]{1,0:T(1,128)}', space=vmem, size = 0x12000, scoped, tag = 'internal scratch']
  %s0 = inlined_call_operand.vmem [shape: bf16[2,800,64], index: 0, kind: input, shape index: {}]
  %s1 = inlined_call_operand.vmem [shape: bf16[800,1], index: 1, kind: input, shape index: {}]
  %s2 = inlined_call_operand.vmem [shape: bf16[256,256], index: 2, kind: input, shape index: {}]
  %s3 = inlined_call_operand.vmem [shape: f32[1,256], index: 3, kind: input, shape index: {}]
  %s4 = inlined_call_operand.vmem [shape: f32[2,2,800,128], index: 4, kind: output, shape index: {}]
  %s5 = sld [smem:[#allocation0]]
  $region49: #{upconv_neck_forward.3} parent=0
    _
  %s7 = ssub.s32 1, %s5
  %s8 = scalar_select 0, %s7, %s5
  loop: start=0, step=1, limit=4
  $region2: #{upconv_neck_forward.3} parent=0 // loop_pre_header
    _
  $region3: #{upconv_neck_forward.3} parent=0 // loop_header
    %s10 = sphi 0, %s14
    %p11 = scmp.ge.s32.totalorder %s10, 4
    %s20 = sphi 0, %s22
    %s23 = sphi 0, %s20
    %s24 = sphi 0, %s23
    %s40 = sphi 0, %s24
    %s44 = sphi 0, %s44
    %s46 = sphi 0, %s44
    %s47 = sphi 0, %s46
    %s61 = sphi 0, %s47
    %s65 = sphi 0, %s65
    %s67 = sphi 0, %s65
    %s68 = sphi 0, %s67
    %s82 = sphi 0, %s68
    %s86 = sphi 0, %s86
    %s88 = sphi 0, %s86
    %s89 = sphi 0, %s88
    %s103 = sphi 0, %s89
    %s109 = sphi 0, %s111
    %s112 = sphi 0, %s109
    %s113 = sphi 0, %s112
    %s129 = sphi 0, %s113
  $region4: #{upconv_neck_forward.3} parent=0 // loop_header_branch
    %13 = sbr.rel (%p11) target = $region8
  $region5: #{upconv_neck_forward.3} parent=0 // loop_body
    %s15 = ssub.s32 %s10, 1
    %s16 = ssub.s32 %s10, 2
    %s17 = sadd.s32 %s10, 1
    %s18 = ssub.s32 %s10, %s17
    %p19 = scmp.eq.s32.totalorder %s18, 0
    %s21 = sadd.s32 %s20, 1
    %s22 = scalar_select %p19, %s20, %s21
    %p25 = pneg %p19
    %p26 = scmp.eq.s32.totalorder %s10, 1
    %p27 = por %p25, %p26
    %p28 = scmp.ne.s32.totalorder %s20, %s23
    %p29 = scmp.eq.s32.totalorder %s10, 0
    %p30 = por %p28, %p29
    %p31 = scmp.ne.s32.totalorder %s20, %s23
    %p32 = scmp.eq.s32.totalorder %s15, 1
    %p33 = por %p31, %p32
    %p34 = scmp.ne.s32.totalorder %s23, %s24
    %p35 = scmp.eq.s32.totalorder %s15, 0
    %p36 = por %p34, %p35
    %p37 = scmp.ne.s32.totalorder %s23, %s24
    %p38 = scmp.eq.s32.totalorder %s16, 1
    %p39 = por %p37, %p38
    %p41 = scmp.ne.s32.totalorder %s24, %s40
    %p42 = scmp.eq.s32.totalorder %s16, 0
    %p43 = por %p41, %p42
    %s45 = sadd.s32 %s44, 1
    %p48 = scmp.eq.s32.totalorder %s10, 1
    %p49 = scmp.ne.s32.totalorder %s44, %s46
    %p50 = scmp.eq.s32.totalorder %s10, 0
    %p51 = por %p49, %p50
    %p52 = scmp.ne.s32.totalorder %s44, %s46
    %p53 = scmp.eq.s32.totalorder %s15, 1
    %p54 = por %p52, %p53
    %p55 = scmp.ne.s32.totalorder %s46, %s47
    %p56 = scmp.eq.s32.totalorder %s15, 0
    %p57 = por %p55, %p56
    %p58 = scmp.ne.s32.totalorder %s46, %s47
    %p59 = scmp.eq.s32.totalorder %s16, 1
    %p60 = por %p58, %p59
    %p62 = scmp.ne.s32.totalorder %s47, %s61
    %p63 = scmp.eq.s32.totalorder %s16, 0
    %p64 = por %p62, %p63
    %s66 = sadd.s32 %s65, 1
    %p69 = scmp.eq.s32.totalorder %s10, 1
    %p70 = scmp.ne.s32.totalorder %s65, %s67
    %p71 = scmp.eq.s32.totalorder %s10, 0
    %p72 = por %p70, %p71
    %p73 = scmp.ne.s32.totalorder %s65, %s67
    %p74 = scmp.eq.s32.totalorder %s15, 1
    %p75 = por %p73, %p74
    %p76 = scmp.ne.s32.totalorder %s67, %s68
    %p77 = scmp.eq.s32.totalorder %s15, 0
    %p78 = por %p76, %p77
    %p79 = scmp.ne.s32.totalorder %s67, %s68
    %p80 = scmp.eq.s32.totalorder %s16, 1
    %p81 = por %p79, %p80
    %p83 = scmp.ne.s32.totalorder %s68, %s82
    %p84 = scmp.eq.s32.totalorder %s16, 0
    %p85 = por %p83, %p84
    %s87 = sadd.s32 %s86, 1
    %p90 = scmp.eq.s32.totalorder %s10, 1
    %p91 = scmp.ne.s32.totalorder %s86, %s88
    %p92 = scmp.eq.s32.totalorder %s10, 0
    %p93 = por %p91, %p92
    %p94 = scmp.ne.s32.totalorder %s86, %s88
    %p95 = scmp.eq.s32.totalorder %s15, 1
    %p96 = por %p94, %p95
    %p97 = scmp.ne.s32.totalorder %s88, %s89
    %p98 = scmp.eq.s32.totalorder %s15, 0
    %p99 = por %p97, %p98
    %p100 = scmp.ne.s32.totalorder %s88, %s89
    %p101 = scmp.eq.s32.totalorder %s16, 1
    %p102 = por %p100, %p101
    %p104 = scmp.ne.s32.totalorder %s89, %s103
    %p105 = scmp.eq.s32.totalorder %s16, 0
    %p106 = por %p104, %p105
    %s107 = ssub.s32 %s10, %s17
    %p108 = scmp.eq.s32.totalorder %s107, 0
    %s110 = sadd.s32 %s109, 1
    %s111 = scalar_select %p108, %s109, %s110
    %p114 = pneg %p108
    %p115 = scmp.eq.s32.totalorder %s10, 1
    %p116 = por %p114, %p115
    %p117 = scmp.ne.s32.totalorder %s109, %s112
    %p118 = scmp.eq.s32.totalorder %s10, 0
    %p119 = por %p117, %p118
    %p120 = scmp.ne.s32.totalorder %s109, %s112
    %p121 = scmp.eq.s32.totalorder %s15, 1
    %p122 = por %p120, %p121
    %p123 = scmp.ne.s32.totalorder %s112, %s113
    %p124 = scmp.eq.s32.totalorder %s15, 0
    %p125 = por %p123, %p124
    %p126 = scmp.ne.s32.totalorder %s112, %s113
    %p127 = scmp.eq.s32.totalorder %s16, 1
    %p128 = por %p126, %p127
    %p130 = scmp.ne.s32.totalorder %s113, %s129
    %p131 = scmp.eq.s32.totalorder %s16, 0
    %p132 = por %p130, %p131
    %p133 = scmp.le.s32.totalorder 1, %s10
    %p134 = scmp.lt.s32.totalorder %s10, 3
    %p135 = pnand %p133, %p134
    %p136 = pneg %p135
    // Predicated region
    $region9: #{upconv_neck_forward.3} parent=5 // pred_check
      _
    $region10: #{upconv_neck_forward.3} parent=5 // pred_check_branch
      %138 = sbr.rel (%p135) target = $region12
    $region11: #{upconv_neck_forward.3} parent=5 // pred_region
      %s139 = ssub.s32 %s10, 1
      // Predicated region
      $region13: #{upconv_neck_forward.3} parent=11 // pred_check
        %p140 = pneg %p57
      $region14: #{upconv_neck_forward.3} parent=11 // pred_check_branch
        %142 = sbr.rel (%p140) target = $region16
      $region15: #{upconv_neck_forward.3} parent=11 // pred_region
        _
      $region16: #{upconv_neck_forward.3} parent=11 // pred_fallthru
        _
      // Predicated region
      $region17: #{upconv_neck_forward.3} parent=11 // pred_check
        %p143 = pneg %p78
      $region18: #{upconv_neck_forward.3} parent=11 // pred_check_branch
        %145 = sbr.rel (%p143) target = $region20
      $region19: #{upconv_neck_forward.3} parent=11 // pred_region
        _
      $region20: #{upconv_neck_forward.3} parent=11 // pred_fallthru
        _
      // Predicated region
      $region21: #{upconv_neck_forward.3} parent=11 // pred_check
        %p146 = pneg %p99
      $region22: #{upconv_neck_forward.3} parent=11 // pred_check_branch
        %148 = sbr.rel (%p146) target = $region24
      $region23: #{upconv_neck_forward.3} parent=11 // pred_region
        _
      $region24: #{upconv_neck_forward.3} parent=11 // pred_fallthru
        _
    $region12: #{upconv_neck_forward.3} parent=5 // pred_fallthru
      _
    %p149 = scmp.lt.s32.totalorder %s10, 2
    // Predicated region
    $region25: #{upconv_neck_forward.3} parent=5 // pred_check
      %p150 = pneg %p149
    $region26: #{upconv_neck_forward.3} parent=5 // pred_check_branch
      %152 = sbr.rel (%p150) target = $region28
    $region27: #{upconv_neck_forward.3} parent=5 // pred_region
      // Predicated region
      $region29: #{upconv_neck_forward.3} parent=27 // pred_check
        %p153 = pneg %p30
      $region30: #{upconv_neck_forward.3} parent=27 // pred_check_branch
        %155 = sbr.rel (%p153) target = $region32
      $region31: #{upconv_neck_forward.3} parent=27 // pred_region
        %p156 = scmp.lt.s32.totalorder %s10, 1
        %s157 = scalar_select %p156, %s10, 1
        %s158 = smul.addr %s157, 100
        %s159 = smul.addr %s158, 4
        %s160 = scalar_lea.vmem %s0, %s159
      $region32: #{upconv_neck_forward.3} parent=27 // pred_fallthru
        _
    $region28: #{upconv_neck_forward.3} parent=5 // pred_fallthru
      _
    %p161 = scmp.le.s32.totalorder 1, %s10
    %p162 = scmp.lt.s32.totalorder %s10, 3
    %p163 = pnand %p161, %p162
    %p164 = pneg %p163
    // Predicated region
    $region33: #{upconv_neck_forward.3} parent=5 // pred_check
      _
    $region34: #{upconv_neck_forward.3} parent=5 // pred_check_branch
      %166 = sbr.rel (%p163) target = $region36
    $region35: #{upconv_neck_forward.3} parent=5 // pred_region
      %s167 = ssub.s32 %s10, 1
      %p168 = scmp.lt.s32.totalorder %s15, 1
      %s169 = scalar_select %p168, %s15, 1
      %s170 = smul.addr %s169, 100
      %s171 = smul.addr %s170, 4
      %s172 = scalar_lea.vmem %s0, %s171
      %p173 = pneg %p36
      %p174 = pneg %p33
      %p175 = pneg %p57
      %p176 = pneg %p54
      %p177 = pneg %p78
      %p178 = pneg %p75
      %p179 = pneg %p99
      %p180 = pneg %p96
      %p181 = pneg %p125
      %p182 = pneg %p122
      %p183 = scmp.lt.s32.totalorder %s15, 1
      %s184 = scalar_select %p183, %s15, 1
      %s185 = smul.addr %s184, 200
      %s186 = smul.addr %s185, 8
      %s187 = scalar_lea.vmem %s4, %s186
      %p188 = scmp.lt.s32.totalorder %s15, 1
      %s189 = scalar_select %p188, %s15, 1
      %s190 = smul.addr %s189, 100
      %s191 = smul.addr %s190, 4
      %s192 = scalar_lea.vmem %s0, %s191
      %p193 = scmp.lt.s32.totalorder %s15, 1
      %s194 = scalar_select %p193, %s15, 1
      %s195 = smul.addr %s194, 200
      %s196 = smul.addr %s195, 8
      %s197 = scalar_lea.vmem %s4, %s196
      %v199 = vld [vmem:[%s192] sm:$0xf]
      %v200 = vld [vmem:[%s192 + $0x4] sm:$0xf]
      %v201 = vld [vmem:[%s192 + $0x8] sm:$0xf]
      %v202 = vld [vmem:[%s192 + $0xc] sm:$0xf]
      %v203 = vld [vmem:[%s192 + $0x10] sm:$0xf]
      %v204 = vld [vmem:[%s192 + $0x14] sm:$0xf]
      %v205 = vld [vmem:[%s192 + $0x18] sm:$0xf]
      %v206 = vld [vmem:[%s192 + $0x1c] sm:$0xf]
      %v207 = vld [vmem:[%s192 + $0x20] sm:$0xf]
      %v208 = vld [vmem:[%s192 + $0x24] sm:$0xf]
      %v209 = vld [vmem:[%s192 + $0x28] sm:$0xf]
      %v210 = vld [vmem:[%s192 + $0x2c] sm:$0xf]
      %v211 = vld [vmem:[%s192 + $0x30] sm:$0xf]
      %v212 = vld [vmem:[%s192 + $0x34] sm:$0xf]
      %v213 = vld [vmem:[%s192 + $0x38] sm:$0xf]
      %v214 = vld [vmem:[%s192 + $0x3c] sm:$0xf]
      %v215 = vld [vmem:[%s192 + $0x40] sm:$0xf]
      %v216 = vld [vmem:[%s192 + $0x44] sm:$0xf]
      %v217 = vld [vmem:[%s192 + $0x48] sm:$0xf]
      %v218 = vld [vmem:[%s192 + $0x4c] sm:$0xf]
      %v219 = vld [vmem:[%s192 + $0x50] sm:$0xf]
      %v220 = vld [vmem:[%s192 + $0x54] sm:$0xf]
      %v221 = vld [vmem:[%s192 + $0x58] sm:$0xf]
      %v222 = vld [vmem:[%s192 + $0x5c] sm:$0xf]
      %v223 = vld [vmem:[%s192 + $0x60] sm:$0xf]
      %v224 = vld [vmem:[%s192 + $0x64] sm:$0xf]
      %v225 = vld [vmem:[%s192 + $0x68] sm:$0xf]
      %v226 = vld [vmem:[%s192 + $0x6c] sm:$0xf]
      %v227 = vld [vmem:[%s192 + $0x70] sm:$0xf]
      %v228 = vld [vmem:[%s192 + $0x74] sm:$0xf]
      %v229 = vld [vmem:[%s192 + $0x78] sm:$0xf]
      %v230 = vld [vmem:[%s192 + $0x7c] sm:$0xf]
      %v231 = vld [vmem:[%s192 + $0x80] sm:$0xf]
      %v232 = vld [vmem:[%s192 + $0x84] sm:$0xf]
      %v233 = vld [vmem:[%s192 + $0x88] sm:$0xf]
      %v234 = vld [vmem:[%s192 + $0x8c] sm:$0xf]
      %v235 = vld [vmem:[%s192 + $0x90] sm:$0xf]
      %v236 = vld [vmem:[%s192 + $0x94] sm:$0xf]
      %v237 = vld [vmem:[%s192 + $0x98] sm:$0xf]
      %v238 = vld [vmem:[%s192 + $0x9c] sm:$0xf]
      %v239 = vld [vmem:[%s192 + $0xa0] sm:$0xf]
      %v240 = vld [vmem:[%s192 + $0xa4] sm:$0xf]
      %v241 = vld [vmem:[%s192 + $0xa8] sm:$0xf]
      %v242 = vld [vmem:[%s192 + $0xac] sm:$0xf]
      %v243 = vld [vmem:[%s192 + $0xb0] sm:$0xf]
      %v244 = vld [vmem:[%s192 + $0xb4] sm:$0xf]
      %v245 = vld [vmem:[%s192 + $0xb8] sm:$0xf]
      %v246 = vld [vmem:[%s192 + $0xbc] sm:$0xf]
      %v247 = vld [vmem:[%s192 + $0xc0] sm:$0xf]
      %v248 = vld [vmem:[%s192 + $0xc4] sm:$0xf]
      %v249 = vld [vmem:[%s192 + $0xc8] sm:$0xf]
      %v250 = vld [vmem:[%s192 + $0xcc] sm:$0xf]
      %v251 = vld [vmem:[%s192 + $0xd0] sm:$0xf]
      %v252 = vld [vmem:[%s192 + $0xd4] sm:$0xf]
      %v253 = vld [vmem:[%s192 + $0xd8] sm:$0xf]
      %v254 = vld [vmem:[%s192 + $0xdc] sm:$0xf]
      %v255 = vld [vmem:[%s192 + $0xe0] sm:$0xf]
      %v256 = vld [vmem:[%s192 + $0xe4] sm:$0xf]
      %v257 = vld [vmem:[%s192 + $0xe8] sm:$0xf]
      %v258 = vld [vmem:[%s192 + $0xec] sm:$0xf]
      %v259 = vld [vmem:[%s192 + $0xf0] sm:$0xf]
      %v260 = vld [vmem:[%s192 + $0xf4] sm:$0xf]
      %v261 = vld [vmem:[%s192 + $0xf8] sm:$0xf]
      %v262 = vld [vmem:[%s192 + $0xfc] sm:$0xf]
      %v263 = vld [vmem:[%s192 + $0x100] sm:$0xf]
      %v264 = vld [vmem:[%s192 + $0x104] sm:$0xf]
      %v265 = vld [vmem:[%s192 + $0x108] sm:$0xf]
      %v266 = vld [vmem:[%s192 + $0x10c] sm:$0xf]
      %v267 = vld [vmem:[%s192 + $0x110] sm:$0xf]
      %v268 = vld [vmem:[%s192 + $0x114] sm:$0xf]
      %v269 = vld [vmem:[%s192 + $0x118] sm:$0xf]
      %v270 = vld [vmem:[%s192 + $0x11c] sm:$0xf]
      %v271 = vld [vmem:[%s192 + $0x120] sm:$0xf]
      %v272 = vld [vmem:[%s192 + $0x124] sm:$0xf]
      %v273 = vld [vmem:[%s192 + $0x128] sm:$0xf]
      %v274 = vld [vmem:[%s192 + $0x12c] sm:$0xf]
      %v275 = vld [vmem:[%s192 + $0x130] sm:$0xf]
      %v276 = vld [vmem:[%s192 + $0x134] sm:$0xf]
      %v277 = vld [vmem:[%s192 + $0x138] sm:$0xf]
      %v278 = vld [vmem:[%s192 + $0x13c] sm:$0xf]
      %v279 = vld [vmem:[%s192 + $0x140] sm:$0xf]
      %v280 = vld [vmem:[%s192 + $0x144] sm:$0xf]
      %v281 = vld [vmem:[%s192 + $0x148] sm:$0xf]
      %v282 = vld [vmem:[%s192 + $0x14c] sm:$0xf]
      %v283 = vld [vmem:[%s192 + $0x150] sm:$0xf]
      %v284 = vld [vmem:[%s192 + $0x154] sm:$0xf]
      %v285 = vld [vmem:[%s192 + $0x158] sm:$0xf]
      %v286 = vld [vmem:[%s192 + $0x15c] sm:$0xf]
      %v287 = vld [vmem:[%s192 + $0x160] sm:$0xf]
      %v288 = vld [vmem:[%s192 + $0x164] sm:$0xf]
      %v289 = vld [vmem:[%s192 + $0x168] sm:$0xf]
      %v290 = vld [vmem:[%s192 + $0x16c] sm:$0xf]
      %v291 = vld [vmem:[%s192 + $0x170] sm:$0xf]
      %v292 = vld [vmem:[%s192 + $0x174] sm:$0xf]
      %v293 = vld [vmem:[%s192 + $0x178] sm:$0xf]
      %v294 = vld [vmem:[%s192 + $0x17c] sm:$0xf]
      %v295 = vld [vmem:[%s192 + $0x180] sm:$0xf]
      %v296 = vld [vmem:[%s192 + $0x184] sm:$0xf]
      %v297 = vld [vmem:[%s192 + $0x188] sm:$0xf]
      %v298 = vld [vmem:[%s192 + $0x18c] sm:$0xf]
      %v299 = vld [vmem:[%s1] sm:$0xf]
      %v300 = vld [vmem:[%s1 + $0x4] sm:$0xf]
      %v301 = vld [vmem:[%s1 + $0x8] sm:$0xf]
      %v302 = vld [vmem:[%s1 + $0xc] sm:$0xf]
      %v303 = vld [vmem:[%s1 + $0x10] sm:$0xf]
      %v304 = vld [vmem:[%s1 + $0x14] sm:$0xf]
      %v305 = vld [vmem:[%s1 + $0x18] sm:$0xf]
      %v306 = vld [vmem:[%s1 + $0x1c] sm:$0xf]
      %v307 = vld [vmem:[%s1 + $0x20] sm:$0xf]
      %v308 = vld [vmem:[%s1 + $0x24] sm:$0xf]
      %v309 = vld [vmem:[%s1 + $0x28] sm:$0xf]
      %v310 = vld [vmem:[%s1 + $0x2c] sm:$0xf]
      %v311 = vld [vmem:[%s1 + $0x30] sm:$0xf]
      %v312 = vld [vmem:[%s1 + $0x34] sm:$0xf]
      %v313 = vld [vmem:[%s1 + $0x38] sm:$0xf]
      %v314 = vld [vmem:[%s1 + $0x3c] sm:$0xf]
      %v315 = vld [vmem:[%s1 + $0x40] sm:$0xf]
      %v316 = vld [vmem:[%s1 + $0x44] sm:$0xf]
      %v317 = vld [vmem:[%s1 + $0x48] sm:$0xf]
      %v318 = vld [vmem:[%s1 + $0x4c] sm:$0xf]
      %v319 = vld [vmem:[%s1 + $0x50] sm:$0xf]
      %v320 = vld [vmem:[%s1 + $0x54] sm:$0xf]
      %v321 = vld [vmem:[%s1 + $0x58] sm:$0xf]
      %v322 = vld [vmem:[%s1 + $0x5c] sm:$0xf]
      %v323 = vld [vmem:[%s1 + $0x60] sm:$0xf]
      %v324 = vld [vmem:[%s1 + $0x64] sm:$0xf]
      %v325 = vld [vmem:[%s1 + $0x68] sm:$0xf]
      %v326 = vld [vmem:[%s1 + $0x6c] sm:$0xf]
      %v327 = vld [vmem:[%s1 + $0x70] sm:$0xf]
      %v328 = vld [vmem:[%s1 + $0x74] sm:$0xf]
      %v329 = vld [vmem:[%s1 + $0x78] sm:$0xf]
      %v330 = vld [vmem:[%s1 + $0x7c] sm:$0xf]
      %v331 = vld [vmem:[%s1 + $0x80] sm:$0xf]
      %v332 = vld [vmem:[%s1 + $0x84] sm:$0xf]
      %v333 = vld [vmem:[%s1 + $0x88] sm:$0xf]
      %v334 = vld [vmem:[%s1 + $0x8c] sm:$0xf]
      %v335 = vld [vmem:[%s1 + $0x90] sm:$0xf]
      %v336 = vld [vmem:[%s1 + $0x94] sm:$0xf]
      %v337 = vld [vmem:[%s1 + $0x98] sm:$0xf]
      %v338 = vld [vmem:[%s1 + $0x9c] sm:$0xf]
      %v339 = vld [vmem:[%s1 + $0xa0] sm:$0xf]
      %v340 = vld [vmem:[%s1 + $0xa4] sm:$0xf]
      %v341 = vld [vmem:[%s1 + $0xa8] sm:$0xf]
      %v342 = vld [vmem:[%s1 + $0xac] sm:$0xf]
      %v343 = vld [vmem:[%s1 + $0xb0] sm:$0xf]
      %v344 = vld [vmem:[%s1 + $0xb4] sm:$0xf]
      %v345 = vld [vmem:[%s1 + $0xb8] sm:$0xf]
      %v346 = vld [vmem:[%s1 + $0xbc] sm:$0xf]
      %v347 = vld [vmem:[%s1 + $0xc0] sm:$0xf]
      %v348 = vld [vmem:[%s1 + $0xc4] sm:$0xf]
      %v349 = vld [vmem:[%s1 + $0xc8] sm:$0xf]
      %v350 = vld [vmem:[%s1 + $0xcc] sm:$0xf]
      %v351 = vld [vmem:[%s1 + $0xd0] sm:$0xf]
      %v352 = vld [vmem:[%s1 + $0xd4] sm:$0xf]
      %v353 = vld [vmem:[%s1 + $0xd8] sm:$0xf]
      %v354 = vld [vmem:[%s1 + $0xdc] sm:$0xf]
      %v355 = vld [vmem:[%s1 + $0xe0] sm:$0xf]
      %v356 = vld [vmem:[%s1 + $0xe4] sm:$0xf]
      %v357 = vld [vmem:[%s1 + $0xe8] sm:$0xf]
      %v358 = vld [vmem:[%s1 + $0xec] sm:$0xf]
      %v359 = vld [vmem:[%s1 + $0xf0] sm:$0xf]
      %v360 = vld [vmem:[%s1 + $0xf4] sm:$0xf]
      %v361 = vld [vmem:[%s1 + $0xf8] sm:$0xf]
      %v362 = vld [vmem:[%s1 + $0xfc] sm:$0xf]
      %v363 = vld [vmem:[%s1 + $0x100] sm:$0xf]
      %v364 = vld [vmem:[%s1 + $0x104] sm:$0xf]
      %v365 = vld [vmem:[%s1 + $0x108] sm:$0xf]
      %v366 = vld [vmem:[%s1 + $0x10c] sm:$0xf]
      %v367 = vld [vmem:[%s1 + $0x110] sm:$0xf]
      %v368 = vld [vmem:[%s1 + $0x114] sm:$0xf]
      %v369 = vld [vmem:[%s1 + $0x118] sm:$0xf]
      %v370 = vld [vmem:[%s1 + $0x11c] sm:$0xf]
      %v371 = vld [vmem:[%s1 + $0x120] sm:$0xf]
      %v372 = vld [vmem:[%s1 + $0x124] sm:$0xf]
      %v373 = vld [vmem:[%s1 + $0x128] sm:$0xf]
      %v374 = vld [vmem:[%s1 + $0x12c] sm:$0xf]
      %v375 = vld [vmem:[%s1 + $0x130] sm:$0xf]
      %v376 = vld [vmem:[%s1 + $0x134] sm:$0xf]
      %v377 = vld [vmem:[%s1 + $0x138] sm:$0xf]
      %v378 = vld [vmem:[%s1 + $0x13c] sm:$0xf]
      %v379 = vld [vmem:[%s1 + $0x140] sm:$0xf]
      %v380 = vld [vmem:[%s1 + $0x144] sm:$0xf]
      %v381 = vld [vmem:[%s1 + $0x148] sm:$0xf]
      %v382 = vld [vmem:[%s1 + $0x14c] sm:$0xf]
      %v383 = vld [vmem:[%s1 + $0x150] sm:$0xf]
      %v384 = vld [vmem:[%s1 + $0x154] sm:$0xf]
      %v385 = vld [vmem:[%s1 + $0x158] sm:$0xf]
      %v386 = vld [vmem:[%s1 + $0x15c] sm:$0xf]
      %v387 = vld [vmem:[%s1 + $0x160] sm:$0xf]
      %v388 = vld [vmem:[%s1 + $0x164] sm:$0xf]
      %v389 = vld [vmem:[%s1 + $0x168] sm:$0xf]
      %v390 = vld [vmem:[%s1 + $0x16c] sm:$0xf]
      %v391 = vld [vmem:[%s1 + $0x170] sm:$0xf]
      %v392 = vld [vmem:[%s1 + $0x174] sm:$0xf]
      %v393 = vld [vmem:[%s1 + $0x178] sm:$0xf]
      %v394 = vld [vmem:[%s1 + $0x17c] sm:$0xf]
      %v395 = vld [vmem:[%s1 + $0x180] sm:$0xf]
      %v396 = vld [vmem:[%s1 + $0x184] sm:$0xf]
      %v397 = vld [vmem:[%s1 + $0x188] sm:$0xf]
      %v398 = vld [vmem:[%s1 + $0x18c] sm:$0xf]
      %v499 = vunpack.c.l.b16 %v199
      %v500 = vunpack.c.l.b16 %v200
      %v501 = vunpack.c.l.b16 %v201
      %v502 = vunpack.c.l.b16 %v202
      %v503 = vunpack.c.l.b16 %v203
      %v504 = vunpack.c.l.b16 %v204
      %v505 = vunpack.c.l.b16 %v205
      %v506 = vunpack.c.l.b16 %v206
      %v507 = vunpack.c.l.b16 %v207
      %v508 = vunpack.c.l.b16 %v208
      %v509 = vunpack.c.l.b16 %v209
      %v510 = vunpack.c.l.b16 %v210
      %v511 = vunpack.c.l.b16 %v211
      %v512 = vunpack.c.l.b16 %v212
      %v513 = vunpack.c.l.b16 %v213
      %v514 = vunpack.c.l.b16 %v214
      %v515 = vunpack.c.l.b16 %v215
      %v516 = vunpack.c.l.b16 %v216
      %v517 = vunpack.c.l.b16 %v217
      %v518 = vunpack.c.l.b16 %v218
      %v519 = vunpack.c.l.b16 %v219
      %v520 = vunpack.c.l.b16 %v220
      %v521 = vunpack.c.l.b16 %v221
      %v522 = vunpack.c.l.b16 %v222
      %v523 = vunpack.c.l.b16 %v223
      %v524 = vunpack.c.l.b16 %v224
      %v525 = vunpack.c.l.b16 %v225
      %v526 = vunpack.c.l.b16 %v226
      %v527 = vunpack.c.l.b16 %v227
      %v528 = vunpack.c.l.b16 %v228
      %v529 = vunpack.c.l.b16 %v229
      %v530 = vunpack.c.l.b16 %v230
      %v531 = vunpack.c.l.b16 %v231
      %v532 = vunpack.c.l.b16 %v232
      %v533 = vunpack.c.l.b16 %v233
      %v534 = vunpack.c.l.b16 %v234
      %v535 = vunpack.c.l.b16 %v235
      %v536 = vunpack.c.l.b16 %v236
      %v537 = vunpack.c.l.b16 %v237
      %v538 = vunpack.c.l.b16 %v238
      %v539 = vunpack.c.l.b16 %v239
      %v540 = vunpack.c.l.b16 %v240
      %v541 = vunpack.c.l.b16 %v241
      %v542 = vunpack.c.l.b16 %v242
      %v543 = vunpack.c.l.b16 %v243
      %v544 = vunpack.c.l.b16 %v244
      %v545 = vunpack.c.l.b16 %v245
      %v546 = vunpack.c.l.b16 %v246
      %v547 = vunpack.c.l.b16 %v247
      %v548 = vunpack.c.l.b16 %v248
      %v549 = vunpack.c.l.b16 %v249
      %v550 = vunpack.c.l.b16 %v250
      %v551 = vunpack.c.l.b16 %v251
      %v552 = vunpack.c.l.b16 %v252
      %v553 = vunpack.c.l.b16 %v253
      %v554 = vunpack.c.l.b16 %v254
      %v555 = vunpack.c.l.b16 %v255
      %v556 = vunpack.c.l.b16 %v256
      %v557 = vunpack.c.l.b16 %v257
      %v558 = vunpack.c.l.b16 %v258
      %v559 = vunpack.c.l.b16 %v259
      %v560 = vunpack.c.l.b16 %v260
      %v561 = vunpack.c.l.b16 %v261
      %v562 = vunpack.c.l.b16 %v262
      %v563 = vunpack.c.l.b16 %v263
      %v564 = vunpack.c.l.b16 %v264
      %v565 = vunpack.c.l.b16 %v265
      %v566 = vunpack.c.l.b16 %v266
      %v567 = vunpack.c.l.b16 %v267
      %v568 = vunpack.c.l.b16 %v268
      %v569 = vunpack.c.l.b16 %v269
      %v570 = vunpack.c.l.b16 %v270
      %v571 = vunpack.c.l.b16 %v271
      %v572 = vunpack.c.l.b16 %v272
      %v573 = vunpack.c.l.b16 %v273
      %v574 = vunpack.c.l.b16 %v274
      %v575 = vunpack.c.l.b16 %v275
      %v576 = vunpack.c.l.b16 %v276
      %v577 = vunpack.c.l.b16 %v277
      %v578 = vunpack.c.l.b16 %v278
      %v579 = vunpack.c.l.b16 %v279
      %v580 = vunpack.c.l.b16 %v280
      %v581 = vunpack.c.l.b16 %v281
      %v582 = vunpack.c.l.b16 %v282
      %v583 = vunpack.c.l.b16 %v283
      %v584 = vunpack.c.l.b16 %v284
      %v585 = vunpack.c.l.b16 %v285
      %v586 = vunpack.c.l.b16 %v286
      %v587 = vunpack.c.l.b16 %v287
      %v588 = vunpack.c.l.b16 %v288
      %v589 = vunpack.c.l.b16 %v289
      %v590 = vunpack.c.l.b16 %v290
      %v591 = vunpack.c.l.b16 %v291
      %v592 = vunpack.c.l.b16 %v292
      %v593 = vunpack.c.l.b16 %v293
      %v594 = vunpack.c.l.b16 %v294
      %v595 = vunpack.c.l.b16 %v295
      %v596 = vunpack.c.l.b16 %v296
      %v597 = vunpack.c.l.b16 %v297
      %v598 = vunpack.c.l.b16 %v298
      %v599 = vpack.c.b16 %v500, %v499
      %v600 = vpack.c.b16 %v502, %v501
      %v601 = vpack.c.b16 %v504, %v503
      %v602 = vpack.c.b16 %v506, %v505
      %v603 = vpack.c.b16 %v508, %v507
      %v604 = vpack.c.b16 %v510, %v509
      %v605 = vpack.c.b16 %v512, %v511
      %v606 = vpack.c.b16 %v514, %v513
      %v607 = vpack.c.b16 %v516, %v515
      %v608 = vpack.c.b16 %v518, %v517
      %v609 = vpack.c.b16 %v520, %v519
      %v610 = vpack.c.b16 %v522, %v521
      %v611 = vpack.c.b16 %v524, %v523
      %v612 = vpack.c.b16 %v526, %v525
      %v613 = vpack.c.b16 %v528, %v527
      %v614 = vpack.c.b16 %v530, %v529
      %v615 = vpack.c.b16 %v532, %v531
      %v616 = vpack.c.b16 %v534, %v533
      %v617 = vpack.c.b16 %v536, %v535
      %v618 = vpack.c.b16 %v538, %v537
      %v619 = vpack.c.b16 %v540, %v539
      %v620 = vpack.c.b16 %v542, %v541
      %v621 = vpack.c.b16 %v544, %v543
      %v622 = vpack.c.b16 %v546, %v545
      %v623 = vpack.c.b16 %v548, %v547
      %v624 = vpack.c.b16 %v550, %v549
      %v625 = vpack.c.b16 %v552, %v551
      %v626 = vpack.c.b16 %v554, %v553
      %v627 = vpack.c.b16 %v556, %v555
      %v628 = vpack.c.b16 %v558, %v557
      %v629 = vpack.c.b16 %v560, %v559
      %v630 = vpack.c.b16 %v562, %v561
      %v631 = vpack.c.b16 %v564, %v563
      %v632 = vpack.c.b16 %v566, %v565
      %v633 = vpack.c.b16 %v568, %v567
      %v634 = vpack.c.b16 %v570, %v569
      %v635 = vpack.c.b16 %v572, %v571
      %v636 = vpack.c.b16 %v574, %v573
      %v637 = vpack.c.b16 %v576, %v575
      %v638 = vpack.c.b16 %v578, %v577
      %v639 = vpack.c.b16 %v580, %v579
      %v640 = vpack.c.b16 %v582, %v581
      %v641 = vpack.c.b16 %v584, %v583
      %v642 = vpack.c.b16 %v586, %v585
      %v643 = vpack.c.b16 %v588, %v587
      %v644 = vpack.c.b16 %v590, %v589
      %v645 = vpack.c.b16 %v592, %v591
      %v646 = vpack.c.b16 %v594, %v593
      %v647 = vpack.c.b16 %v596, %v595
      %v648 = vpack.c.b16 %v598, %v597
      %vm649 = vsmask.f32 7424
      %v651 = vshrl.u32 %v599, 16
      %v653 = vshll.u32 %v599, 16
      %v655 = vrot.slane %v653, 1
      %v656 = vor.u32 %v651, %v655
      %v658 = vshll.u32 %v600, 16
      %v660 = vrot.slane %v658, 1
      %v661 = vsel %vm649, %v656, %v660
      %v662 = vshrl.u32 %v600, 16
      %v664 = vor.u32 %v662, %v660
      %v666 = vshll.u32 %v601, 16
      %v668 = vrot.slane %v666, 1
      %v669 = vsel %vm649, %v664, %v668
      %v670 = vshrl.u32 %v601, 16
      %v672 = vor.u32 %v670, %v668
      %v674 = vshll.u32 %v602, 16
      %v676 = vrot.slane %v674, 1
      %v677 = vsel %vm649, %v672, %v676
      %v678 = vshrl.u32 %v602, 16
      %v680 = vor.u32 %v678, %v676
      %v682 = vshll.u32 %v603, 16
      %v684 = vrot.slane %v682, 1
      %v685 = vsel %vm649, %v680, %v684
      %v686 = vshrl.u32 %v603, 16
      %v688 = vor.u32 %v686, %v684
      %v690 = vshll.u32 %v604, 16
      %v692 = vrot.slane %v690, 1
      %v693 = vsel %vm649, %v688, %v692
      %v694 = vshrl.u32 %v604, 16
      %v696 = vor.u32 %v694, %v692
      %v698 = vshll.u32 %v605, 16
      %v700 = vrot.slane %v698, 1
      %v701 = vsel %vm649, %v696, %v700
      %v702 = vshrl.u32 %v605, 16
      %v704 = vor.u32 %v702, %v700
      %v706 = vshll.u32 %v606, 16
      %v708 = vrot.slane %v706, 1
      %v709 = vsel %vm649, %v704, %v708
      %v710 = vshrl.u32 %v606, 16
      %v712 = vor.u32 %v710, %v708
      %v714 = vshll.u32 %v607, 16
      %v716 = vrot.slane %v714, 1
      %v717 = vsel %vm649, %v712, %v716
      %v718 = vshrl.u32 %v607, 16
      %v720 = vor.u32 %v718, %v716
      %v722 = vshll.u32 %v608, 16
      %v724 = vrot.slane %v722, 1
      %v725 = vsel %vm649, %v720, %v724
      %v726 = vshrl.u32 %v608, 16
      %v728 = vor.u32 %v726, %v724
      %v730 = vshll.u32 %v609, 16
      %v732 = vrot.slane %v730, 1
      %v733 = vsel %vm649, %v728, %v732
      %v734 = vshrl.u32 %v609, 16
      %v736 = vor.u32 %v734, %v732
      %v738 = vshll.u32 %v610, 16
      %v740 = vrot.slane %v738, 1
      %v741 = vsel %vm649, %v736, %v740
      %v742 = vshrl.u32 %v610, 16
      %v744 = vor.u32 %v742, %v740
      %v746 = vshll.u32 %v611, 16
      %v748 = vrot.slane %v746, 1
      %v749 = vsel %vm649, %v744, %v748
      %v750 = vshrl.u32 %v611, 16
      %v752 = vor.u32 %v750, %v748
      %v754 = vshll.u32 %v612, 16
      %v756 = vrot.slane %v754, 1
      %v757 = vsel %vm649, %v752, %v756
      %v758 = vshrl.u32 %v612, 16
      %v760 = vor.u32 %v758, %v756
      %v762 = vshll.u32 %v613, 16
      %v764 = vrot.slane %v762, 1
      %v765 = vsel %vm649, %v760, %v764
      %v766 = vshrl.u32 %v613, 16
      %v768 = vor.u32 %v766, %v764
      %v770 = vshll.u32 %v614, 16
      %v772 = vrot.slane %v770, 1
      %v773 = vsel %vm649, %v768, %v772
      %v774 = vshrl.u32 %v614, 16
      %v776 = vor.u32 %v774, %v772
      %v778 = vshll.u32 %v615, 16
      %v780 = vrot.slane %v778, 1
      %v781 = vsel %vm649, %v776, %v780
      %v782 = vshrl.u32 %v615, 16
      %v784 = vor.u32 %v782, %v780
      %v786 = vshll.u32 %v616, 16
      %v788 = vrot.slane %v786, 1
      %v789 = vsel %vm649, %v784, %v788
      %v790 = vshrl.u32 %v616, 16
      %v792 = vor.u32 %v790, %v788
      %v794 = vshll.u32 %v617, 16
      %v796 = vrot.slane %v794, 1
      %v797 = vsel %vm649, %v792, %v796
      %v798 = vshrl.u32 %v617, 16
      %v800 = vor.u32 %v798, %v796
      %v802 = vshll.u32 %v618, 16
      %v804 = vrot.slane %v802, 1
      %v805 = vsel %vm649, %v800, %v804
      %v806 = vshrl.u32 %v618, 16
      %v808 = vor.u32 %v806, %v804
      %v810 = vshll.u32 %v619, 16
      %v812 = vrot.slane %v810, 1
      %v813 = vsel %vm649, %v808, %v812
      %v814 = vshrl.u32 %v619, 16
      %v816 = vor.u32 %v814, %v812
      %v818 = vshll.u32 %v620, 16
      %v820 = vrot.slane %v818, 1
      %v821 = vsel %vm649, %v816, %v820
      %v822 = vshrl.u32 %v620, 16
      %v824 = vor.u32 %v822, %v820
      %v826 = vshll.u32 %v621, 16
      %v828 = vrot.slane %v826, 1
      %v829 = vsel %vm649, %v824, %v828
      %v830 = vshrl.u32 %v621, 16
      %v832 = vor.u32 %v830, %v828
      %v834 = vshll.u32 %v622, 16
      %v836 = vrot.slane %v834, 1
      %v837 = vsel %vm649, %v832, %v836
      %v838 = vshrl.u32 %v622, 16
      %v840 = vor.u32 %v838, %v836
      %v842 = vshll.u32 %v623, 16
      %v844 = vrot.slane %v842, 1
      %v845 = vsel %vm649, %v840, %v844
      %v846 = vshrl.u32 %v623, 16
      %v848 = vor.u32 %v846, %v844
      %v850 = vshll.u32 %v624, 16
      %v852 = vrot.slane %v850, 1
      %v853 = vsel %vm649, %v848, %v852
      %v854 = vshrl.u32 %v624, 16
      %v856 = vor.u32 %v854, %v852
      %v858 = vshll.u32 %v625, 16
      %v860 = vrot.slane %v858, 1
      %v861 = vsel %vm649, %v856, %v860
      %v862 = vshrl.u32 %v625, 16
      %v864 = vor.u32 %v862, %v860
      %v866 = vshll.u32 %v626, 16
      %v868 = vrot.slane %v866, 1
      %v869 = vsel %vm649, %v864, %v868
      %v870 = vshrl.u32 %v626, 16
      %v872 = vor.u32 %v870, %v868
      %v874 = vshll.u32 %v627, 16
      %v876 = vrot.slane %v874, 1
      %v877 = vsel %vm649, %v872, %v876
      %v878 = vshrl.u32 %v627, 16
      %v880 = vor.u32 %v878, %v876
      %v882 = vshll.u32 %v628, 16
      %v884 = vrot.slane %v882, 1
      %v885 = vsel %vm649, %v880, %v884
      %v886 = vshrl.u32 %v628, 16
      %v888 = vor.u32 %v886, %v884
      %v890 = vshll.u32 %v629, 16
      %v892 = vrot.slane %v890, 1
      %v893 = vsel %vm649, %v888, %v892
      %v894 = vshrl.u32 %v629, 16
      %v896 = vor.u32 %v894, %v892
      %v898 = vshll.u32 %v630, 16
      %v900 = vrot.slane %v898, 1
      %v901 = vsel %vm649, %v896, %v900
      %v902 = vshrl.u32 %v630, 16
      %v904 = vor.u32 %v902, %v900
      %v906 = vshll.u32 %v631, 16
      %v908 = vrot.slane %v906, 1
      %v909 = vsel %vm649, %v904, %v908
      %v910 = vshrl.u32 %v631, 16
      %v912 = vor.u32 %v910, %v908
      %v914 = vshll.u32 %v632, 16
      %v916 = vrot.slane %v914, 1
      %v917 = vsel %vm649, %v912, %v916
      %v918 = vshrl.u32 %v632, 16
      %v920 = vor.u32 %v918, %v916
      %v922 = vshll.u32 %v633, 16
      %v924 = vrot.slane %v922, 1
      %v925 = vsel %vm649, %v920, %v924
      %v926 = vshrl.u32 %v633, 16
      %v928 = vor.u32 %v926, %v924
      %v930 = vshll.u32 %v634, 16
      %v932 = vrot.slane %v930, 1
      %v933 = vsel %vm649, %v928, %v932
      %v934 = vshrl.u32 %v634, 16
      %v936 = vor.u32 %v934, %v932
      %v938 = vshll.u32 %v635, 16
      %v940 = vrot.slane %v938, 1
      %v941 = vsel %vm649, %v936, %v940
      %v942 = vshrl.u32 %v635, 16
      %v944 = vor.u32 %v942, %v940
      %v946 = vshll.u32 %v636, 16
      %v948 = vrot.slane %v946, 1
      %v949 = vsel %vm649, %v944, %v948
      %v950 = vshrl.u32 %v636, 16
      %v952 = vor.u32 %v950, %v948
      %v954 = vshll.u32 %v637, 16
      %v956 = vrot.slane %v954, 1
      %v957 = vsel %vm649, %v952, %v956
      %v958 = vshrl.u32 %v637, 16
      %v960 = vor.u32 %v958, %v956
      %v962 = vshll.u32 %v638, 16
      %v964 = vrot.slane %v962, 1
      %v965 = vsel %vm649, %v960, %v964
      %v966 = vshrl.u32 %v638, 16
      %v968 = vor.u32 %v966, %v964
      %v970 = vshll.u32 %v639, 16
      %v972 = vrot.slane %v970, 1
      %v973 = vsel %vm649, %v968, %v972
      %v974 = vshrl.u32 %v639, 16
      %v976 = vor.u32 %v974, %v972
      %v978 = vshll.u32 %v640, 16
      %v980 = vrot.slane %v978, 1
      %v981 = vsel %vm649, %v976, %v980
      %v982 = vshrl.u32 %v640, 16
      %v984 = vor.u32 %v982, %v980
      %v986 = vshll.u32 %v641, 16
      %v988 = vrot.slane %v986, 1
      %v989 = vsel %vm649, %v984, %v988
      %v990 = vshrl.u32 %v641, 16
      %v992 = vor.u32 %v990, %v988
      %v994 = vshll.u32 %v642, 16
      %v996 = vrot.slane %v994, 1
      %v997 = vsel %vm649, %v992, %v996
      %v998 = vshrl.u32 %v642, 16
      %v1000 = vor.u32 %v998, %v996
      %v1002 = vshll.u32 %v643, 16
      %v1004 = vrot.slane %v1002, 1
      %v1005 = vsel %vm649, %v1000, %v1004
      %v1006 = vshrl.u32 %v643, 16
      %v1008 = vor.u32 %v1006, %v1004
      %v1010 = vshll.u32 %v644, 16
      %v1012 = vrot.slane %v1010, 1
      %v1013 = vsel %vm649, %v1008, %v1012
      %v1014 = vshrl.u32 %v644, 16
      %v1016 = vor.u32 %v1014, %v1012
      %v1018 = vshll.u32 %v645, 16
      %v1020 = vrot.slane %v1018, 1
      %v1021 = vsel %vm649, %v1016, %v1020
      %v1022 = vshrl.u32 %v645, 16
      %v1024 = vor.u32 %v1022, %v1020
      %v1026 = vshll.u32 %v646, 16
      %v1028 = vrot.slane %v1026, 1
      %v1029 = vsel %vm649, %v1024, %v1028
      %v1030 = vshrl.u32 %v646, 16
      %v1032 = vor.u32 %v1030, %v1028
      %v1034 = vshll.u32 %v647, 16
      %v1036 = vrot.slane %v1034, 1
      %v1037 = vsel %vm649, %v1032, %v1036
      %v1038 = vshrl.u32 %v647, 16
      %v1040 = vor.u32 %v1038, %v1036
      %v1042 = vshll.u32 %v648, 16
      %v1044 = vrot.slane %v1042, 1
      %v1045 = vsel %vm649, %v1040, %v1044
      %v1046 = vshrl.u32 %v648, 16
      %v1048 = vor.u32 %v1046, %v1044
      %vm1099 = vcmask 1047552
      %vm1100 = vmand %vm1099, %vm649
      %v1101 = vsel %vm1100, %v1048, 0
      %1103 = vset.pattern.permute.xlu0 0
      %1104 = vperm.xlu0 %1103, %v299
      %v1105 = vpop.permute.xlu0 %1104
      %v1108 = vunpack.c.l.s4 839922192
      %v1109 = vunpack.c.0.s8 %v1108
      %v1110 = vlaneseq
      %v1111 = vshrl.u32 %v1110, 7
      %v1112 = vsub.s32 %v1109, %v1111
      %v1113 = vrot.slane %v1105, %v1112
      %1115 = vset.pattern.permute.xlu0 0
      %1116 = vperm.xlu0 %1115, %v300
      %v1117 = vpop.permute.xlu0 %1116
      %v1120 = vunpack.c.l.s4 839922192
      %v1121 = vunpack.c.0.s8 %v1120
      %v1122 = vlaneseq
      %v1123 = vshrl.u32 %v1122, 7
      %v1124 = vsub.s32 %v1121, %v1123
      %v1125 = vrot.slane %v1117, %v1124
      %1127 = vset.pattern.permute.xlu0 0
      %1128 = vperm.xlu0 %1127, %v301
      %v1129 = vpop.permute.xlu0 %1128
      %v1132 = vunpack.c.l.s4 839922192
      %v1133 = vunpack.c.0.s8 %v1132
      %v1134 = vlaneseq
      %v1135 = vshrl.u32 %v1134, 7
      %v1136 = vsub.s32 %v1133, %v1135
      %v1137 = vrot.slane %v1129, %v1136
      %1139 = vset.pattern.permute.xlu0 0
      %1140 = vperm.xlu0 %1139, %v302
      %v1141 = vpop.permute.xlu0 %1140
      %v1144 = vunpack.c.l.s4 839922192
      %v1145 = vunpack.c.0.s8 %v1144
      %v1146 = vlaneseq
      %v1147 = vshrl.u32 %v1146, 7
      %v1148 = vsub.s32 %v1145, %v1147
      %v1149 = vrot.slane %v1141, %v1148
      %1151 = vset.pattern.permute.xlu0 0
      %1152 = vperm.xlu0 %1151, %v303
      %v1153 = vpop.permute.xlu0 %1152
      %v1156 = vunpack.c.l.s4 839922192
      %v1157 = vunpack.c.0.s8 %v1156
      %v1158 = vlaneseq
      %v1159 = vshrl.u32 %v1158, 7
      %v1160 = vsub.s32 %v1157, %v1159
      %v1161 = vrot.slane %v1153, %v1160
      %1163 = vset.pattern.permute.xlu0 0
      %1164 = vperm.xlu0 %1163, %v304
      %v1165 = vpop.permute.xlu0 %1164
      %v1168 = vunpack.c.l.s4 839922192
      %v1169 = vunpack.c.0.s8 %v1168
      %v1170 = vlaneseq
      %v1171 = vshrl.u32 %v1170, 7
      %v1172 = vsub.s32 %v1169, %v1171
      %v1173 = vrot.slane %v1165, %v1172
      %1175 = vset.pattern.permute.xlu0 0
      %1176 = vperm.xlu0 %1175, %v305
      %v1177 = vpop.permute.xlu0 %1176
      %v1180 = vunpack.c.l.s4 839922192
      %v1181 = vunpack.c.0.s8 %v1180
      %v1182 = vlaneseq
      %v1183 = vshrl.u32 %v1182, 7
      %v1184 = vsub.s32 %v1181, %v1183
      %v1185 = vrot.slane %v1177, %v1184
      %1187 = vset.pattern.permute.xlu0 0
      %1188 = vperm.xlu0 %1187, %v306
      %v1189 = vpop.permute.xlu0 %1188
      %v1192 = vunpack.c.l.s4 839922192
      %v1193 = vunpack.c.0.s8 %v1192
      %v1194 = vlaneseq
      %v1195 = vshrl.u32 %v1194, 7
      %v1196 = vsub.s32 %v1193, %v1195
      %v1197 = vrot.slane %v1189, %v1196
      %1199 = vset.pattern.permute.xlu0 0
      %1200 = vperm.xlu0 %1199, %v307
      %v1201 = vpop.permute.xlu0 %1200
      %v1204 = vunpack.c.l.s4 839922192
      %v1205 = vunpack.c.0.s8 %v1204
      %v1206 = vlaneseq
      %v1207 = vshrl.u32 %v1206, 7
      %v1208 = vsub.s32 %v1205, %v1207
      %v1209 = vrot.slane %v1201, %v1208
      %1211 = vset.pattern.permute.xlu0 0
      %1212 = vperm.xlu0 %1211, %v308
      %v1213 = vpop.permute.xlu0 %1212
      %v1216 = vunpack.c.l.s4 839922192
      %v1217 = vunpack.c.0.s8 %v1216
      %v1218 = vlaneseq
      %v1219 = vshrl.u32 %v1218, 7
      %v1220 = vsub.s32 %v1217, %v1219
      %v1221 = vrot.slane %v1213, %v1220
      %1223 = vset.pattern.permute.xlu0 0
      %1224 = vperm.xlu0 %1223, %v309
      %v1225 = vpop.permute.xlu0 %1224
      %v1228 = vunpack.c.l.s4 839922192
      %v1229 = vunpack.c.0.s8 %v1228
      %v1230 = vlaneseq
      %v1231 = vshrl.u32 %v1230, 7
      %v1232 = vsub.s32 %v1229, %v1231
      %v1233 = vrot.slane %v1225, %v1232
      %1235 = vset.pattern.permute.xlu0 0
      %1236 = vperm.xlu0 %1235, %v310
      %v1237 = vpop.permute.xlu0 %1236
      %v1240 = vunpack.c.l.s4 839922192
      %v1241 = vunpack.c.0.s8 %v1240
      %v1242 = vlaneseq
      %v1243 = vshrl.u32 %v1242, 7
      %v1244 = vsub.s32 %v1241, %v1243
      %v1245 = vrot.slane %v1237, %v1244
      %1247 = vset.pattern.permute.xlu0 0
      %1248 = vperm.xlu0 %1247, %v311
      %v1249 = vpop.permute.xlu0 %1248
      %v1252 = vunpack.c.l.s4 839922192
      %v1253 = vunpack.c.0.s8 %v1252
      %v1254 = vlaneseq
      %v1255 = vshrl.u32 %v1254, 7
      %v1256 = vsub.s32 %v1253, %v1255
      %v1257 = vrot.slane %v1249, %v1256
      %1259 = vset.pattern.permute.xlu0 0
      %1260 = vperm.xlu0 %1259, %v312
      %v1261 = vpop.permute.xlu0 %1260
      %v1264 = vunpack.c.l.s4 839922192
      %v1265 = vunpack.c.0.s8 %v1264
      %v1266 = vlaneseq
      %v1267 = vshrl.u32 %v1266, 7
      %v1268 = vsub.s32 %v1265, %v1267
      %v1269 = vrot.slane %v1261, %v1268
      %1271 = vset.pattern.permute.xlu0 0
      %1272 = vperm.xlu0 %1271, %v313
      %v1273 = vpop.permute.xlu0 %1272
      %v1276 = vunpack.c.l.s4 839922192
      %v1277 = vunpack.c.0.s8 %v1276
      %v1278 = vlaneseq
      %v1279 = vshrl.u32 %v1278, 7
      %v1280 = vsub.s32 %v1277, %v1279
      %v1281 = vrot.slane %v1273, %v1280
      %1283 = vset.pattern.permute.xlu0 0
      %1284 = vperm.xlu0 %1283, %v314
      %v1285 = vpop.permute.xlu0 %1284
      %v1288 = vunpack.c.l.s4 839922192
      %v1289 = vunpack.c.0.s8 %v1288
      %v1290 = vlaneseq
      %v1291 = vshrl.u32 %v1290, 7
      %v1292 = vsub.s32 %v1289, %v1291
      %v1293 = vrot.slane %v1285, %v1292
      %1295 = vset.pattern.permute.xlu0 0
      %1296 = vperm.xlu0 %1295, %v315
      %v1297 = vpop.permute.xlu0 %1296
      %v1300 = vunpack.c.l.s4 839922192
      %v1301 = vunpack.c.0.s8 %v1300
      %v1302 = vlaneseq
      %v1303 = vshrl.u32 %v1302, 7
      %v1304 = vsub.s32 %v1301, %v1303
      %v1305 = vrot.slane %v1297, %v1304
      %1307 = vset.pattern.permute.xlu0 0
      %1308 = vperm.xlu0 %1307, %v316
      %v1309 = vpop.permute.xlu0 %1308
      %v1312 = vunpack.c.l.s4 839922192
      %v1313 = vunpack.c.0.s8 %v1312
      %v1314 = vlaneseq
      %v1315 = vshrl.u32 %v1314, 7
      %v1316 = vsub.s32 %v1313, %v1315
      %v1317 = vrot.slane %v1309, %v1316
      %1319 = vset.pattern.permute.xlu0 0
      %1320 = vperm.xlu0 %1319, %v317
      %v1321 = vpop.permute.xlu0 %1320
      %v1324 = vunpack.c.l.s4 839922192
      %v1325 = vunpack.c.0.s8 %v1324
      %v1326 = vlaneseq
      %v1327 = vshrl.u32 %v1326, 7
      %v1328 = vsub.s32 %v1325, %v1327
      %v1329 = vrot.slane %v1321, %v1328
      %1331 = vset.pattern.permute.xlu0 0
      %1332 = vperm.xlu0 %1331, %v318
      %v1333 = vpop.permute.xlu0 %1332
      %v1336 = vunpack.c.l.s4 839922192
      %v1337 = vunpack.c.0.s8 %v1336
      %v1338 = vlaneseq
      %v1339 = vshrl.u32 %v1338, 7
      %v1340 = vsub.s32 %v1337, %v1339
      %v1341 = vrot.slane %v1333, %v1340
      %1343 = vset.pattern.permute.xlu0 0
      %1344 = vperm.xlu0 %1343, %v319
      %v1345 = vpop.permute.xlu0 %1344
      %v1348 = vunpack.c.l.s4 839922192
      %v1349 = vunpack.c.0.s8 %v1348
      %v1350 = vlaneseq
      %v1351 = vshrl.u32 %v1350, 7
      %v1352 = vsub.s32 %v1349, %v1351
      %v1353 = vrot.slane %v1345, %v1352
      %1355 = vset.pattern.permute.xlu0 0
      %1356 = vperm.xlu0 %1355, %v320
      %v1357 = vpop.permute.xlu0 %1356
      %v1360 = vunpack.c.l.s4 839922192
      %v1361 = vunpack.c.0.s8 %v1360
      %v1362 = vlaneseq
      %v1363 = vshrl.u32 %v1362, 7
      %v1364 = vsub.s32 %v1361, %v1363
      %v1365 = vrot.slane %v1357, %v1364
      %1367 = vset.pattern.permute.xlu0 0
      %1368 = vperm.xlu0 %1367, %v321
      %v1369 = vpop.permute.xlu0 %1368
      %v1372 = vunpack.c.l.s4 839922192
      %v1373 = vunpack.c.0.s8 %v1372
      %v1374 = vlaneseq
      %v1375 = vshrl.u32 %v1374, 7
      %v1376 = vsub.s32 %v1373, %v1375
      %v1377 = vrot.slane %v1369, %v1376
      %1379 = vset.pattern.permute.xlu0 0
      %1380 = vperm.xlu0 %1379, %v322
      %v1381 = vpop.permute.xlu0 %1380
      %v1384 = vunpack.c.l.s4 839922192
      %v1385 = vunpack.c.0.s8 %v1384
      %v1386 = vlaneseq
      %v1387 = vshrl.u32 %v1386, 7
      %v1388 = vsub.s32 %v1385, %v1387
      %v1389 = vrot.slane %v1381, %v1388
      %1391 = vset.pattern.permute.xlu0 0
      %1392 = vperm.xlu0 %1391, %v323
      %v1393 = vpop.permute.xlu0 %1392
      %v1396 = vunpack.c.l.s4 839922192
      %v1397 = vunpack.c.0.s8 %v1396
      %v1398 = vlaneseq
      %v1399 = vshrl.u32 %v1398, 7
      %v1400 = vsub.s32 %v1397, %v1399
      %v1401 = vrot.slane %v1393, %v1400
      %1403 = vset.pattern.permute.xlu0 0
      %1404 = vperm.xlu0 %1403, %v324
      %v1405 = vpop.permute.xlu0 %1404
      %v1408 = vunpack.c.l.s4 839922192
      %v1409 = vunpack.c.0.s8 %v1408
      %v1410 = vlaneseq
      %v1411 = vshrl.u32 %v1410, 7
      %v1412 = vsub.s32 %v1409, %v1411
      %v1413 = vrot.slane %v1405, %v1412
      %1415 = vset.pattern.permute.xlu0 0
      %1416 = vperm.xlu0 %1415, %v325
      %v1417 = vpop.permute.xlu0 %1416
      %v1420 = vunpack.c.l.s4 839922192
      %v1421 = vunpack.c.0.s8 %v1420
      %v1422 = vlaneseq
      %v1423 = vshrl.u32 %v1422, 7
      %v1424 = vsub.s32 %v1421, %v1423
      %v1425 = vrot.slane %v1417, %v1424
      %1427 = vset.pattern.permute.xlu0 0
      %1428 = vperm.xlu0 %1427, %v326
      %v1429 = vpop.permute.xlu0 %1428
      %v1432 = vunpack.c.l.s4 839922192
      %v1433 = vunpack.c.0.s8 %v1432
      %v1434 = vlaneseq
      %v1435 = vshrl.u32 %v1434, 7
      %v1436 = vsub.s32 %v1433, %v1435
      %v1437 = vrot.slane %v1429, %v1436
      %1439 = vset.pattern.permute.xlu0 0
      %1440 = vperm.xlu0 %1439, %v327
      %v1441 = vpop.permute.xlu0 %1440
      %v1444 = vunpack.c.l.s4 839922192
      %v1445 = vunpack.c.0.s8 %v1444
      %v1446 = vlaneseq
      %v1447 = vshrl.u32 %v1446, 7
      %v1448 = vsub.s32 %v1445, %v1447
      %v1449 = vrot.slane %v1441, %v1448
      %1451 = vset.pattern.permute.xlu0 0
      %1452 = vperm.xlu0 %1451, %v328
      %v1453 = vpop.permute.xlu0 %1452
      %v1456 = vunpack.c.l.s4 839922192
      %v1457 = vunpack.c.0.s8 %v1456
      %v1458 = vlaneseq
      %v1459 = vshrl.u32 %v1458, 7
      %v1460 = vsub.s32 %v1457, %v1459
      %v1461 = vrot.slane %v1453, %v1460
      %1463 = vset.pattern.permute.xlu0 0
      %1464 = vperm.xlu0 %1463, %v329
      %v1465 = vpop.permute.xlu0 %1464
      %v1468 = vunpack.c.l.s4 839922192
      %v1469 = vunpack.c.0.s8 %v1468
      %v1470 = vlaneseq
      %v1471 = vshrl.u32 %v1470, 7
      %v1472 = vsub.s32 %v1469, %v1471
      %v1473 = vrot.slane %v1465, %v1472
      %1475 = vset.pattern.permute.xlu0 0
      %1476 = vperm.xlu0 %1475, %v330
      %v1477 = vpop.permute.xlu0 %1476
      %v1480 = vunpack.c.l.s4 839922192
      %v1481 = vunpack.c.0.s8 %v1480
      %v1482 = vlaneseq
      %v1483 = vshrl.u32 %v1482, 7
      %v1484 = vsub.s32 %v1481, %v1483
      %v1485 = vrot.slane %v1477, %v1484
      %1487 = vset.pattern.permute.xlu0 0
      %1488 = vperm.xlu0 %1487, %v331
      %v1489 = vpop.permute.xlu0 %1488
      %v1492 = vunpack.c.l.s4 839922192
      %v1493 = vunpack.c.0.s8 %v1492
      %v1494 = vlaneseq
      %v1495 = vshrl.u32 %v1494, 7
      %v1496 = vsub.s32 %v1493, %v1495
      %v1497 = vrot.slane %v1489, %v1496
      %1499 = vset.pattern.permute.xlu0 0
      %1500 = vperm.xlu0 %1499, %v332
      %v1501 = vpop.permute.xlu0 %1500
      %v1504 = vunpack.c.l.s4 839922192
      %v1505 = vunpack.c.0.s8 %v1504
      %v1506 = vlaneseq
      %v1507 = vshrl.u32 %v1506, 7
      %v1508 = vsub.s32 %v1505, %v1507
      %v1509 = vrot.slane %v1501, %v1508
      %1511 = vset.pattern.permute.xlu0 0
      %1512 = vperm.xlu0 %1511, %v333
      %v1513 = vpop.permute.xlu0 %1512
      %v1516 = vunpack.c.l.s4 839922192
      %v1517 = vunpack.c.0.s8 %v1516
      %v1518 = vlaneseq
      %v1519 = vshrl.u32 %v1518, 7
      %v1520 = vsub.s32 %v1517, %v1519
      %v1521 = vrot.slane %v1513, %v1520
      %1523 = vset.pattern.permute.xlu0 0
      %1524 = vperm.xlu0 %1523, %v334
      %v1525 = vpop.permute.xlu0 %1524
      %v1528 = vunpack.c.l.s4 839922192
      %v1529 = vunpack.c.0.s8 %v1528
      %v1530 = vlaneseq
      %v1531 = vshrl.u32 %v1530, 7
      %v1532 = vsub.s32 %v1529, %v1531
      %v1533 = vrot.slane %v1525, %v1532
      %1535 = vset.pattern.permute.xlu0 0
      %1536 = vperm.xlu0 %1535, %v335
      %v1537 = vpop.permute.xlu0 %1536
      %v1540 = vunpack.c.l.s4 839922192
      %v1541 = vunpack.c.0.s8 %v1540
      %v1542 = vlaneseq
      %v1543 = vshrl.u32 %v1542, 7
      %v1544 = vsub.s32 %v1541, %v1543
      %v1545 = vrot.slane %v1537, %v1544
      %1547 = vset.pattern.permute.xlu0 0
      %1548 = vperm.xlu0 %1547, %v336
      %v1549 = vpop.permute.xlu0 %1548
      %v1552 = vunpack.c.l.s4 839922192
      %v1553 = vunpack.c.0.s8 %v1552
      %v1554 = vlaneseq
      %v1555 = vshrl.u32 %v1554, 7
      %v1556 = vsub.s32 %v1553, %v1555
      %v1557 = vrot.slane %v1549, %v1556
      %1559 = vset.pattern.permute.xlu0 0
      %1560 = vperm.xlu0 %1559, %v337
      %v1561 = vpop.permute.xlu0 %1560
      %v1564 = vunpack.c.l.s4 839922192
      %v1565 = vunpack.c.0.s8 %v1564
      %v1566 = vlaneseq
      %v1567 = vshrl.u32 %v1566, 7
      %v1568 = vsub.s32 %v1565, %v1567
      %v1569 = vrot.slane %v1561, %v1568
      %1571 = vset.pattern.permute.xlu0 0
      %1572 = vperm.xlu0 %1571, %v338
      %v1573 = vpop.permute.xlu0 %1572
      %v1576 = vunpack.c.l.s4 839922192
      %v1577 = vunpack.c.0.s8 %v1576
      %v1578 = vlaneseq
      %v1579 = vshrl.u32 %v1578, 7
      %v1580 = vsub.s32 %v1577, %v1579
      %v1581 = vrot.slane %v1573, %v1580
      %1583 = vset.pattern.permute.xlu0 0
      %1584 = vperm.xlu0 %1583, %v339
      %v1585 = vpop.permute.xlu0 %1584
      %v1588 = vunpack.c.l.s4 839922192
      %v1589 = vunpack.c.0.s8 %v1588
      %v1590 = vlaneseq
      %v1591 = vshrl.u32 %v1590, 7
      %v1592 = vsub.s32 %v1589, %v1591
      %v1593 = vrot.slane %v1585, %v1592
      %1595 = vset.pattern.permute.xlu0 0
      %1596 = vperm.xlu0 %1595, %v340
      %v1597 = vpop.permute.xlu0 %1596
      %v1600 = vunpack.c.l.s4 839922192
      %v1601 = vunpack.c.0.s8 %v1600
      %v1602 = vlaneseq
      %v1603 = vshrl.u32 %v1602, 7
      %v1604 = vsub.s32 %v1601, %v1603
      %v1605 = vrot.slane %v1597, %v1604
      %1607 = vset.pattern.permute.xlu0 0
      %1608 = vperm.xlu0 %1607, %v341
      %v1609 = vpop.permute.xlu0 %1608
      %v1612 = vunpack.c.l.s4 839922192
      %v1613 = vunpack.c.0.s8 %v1612
      %v1614 = vlaneseq
      %v1615 = vshrl.u32 %v1614, 7
      %v1616 = vsub.s32 %v1613, %v1615
      %v1617 = vrot.slane %v1609, %v1616
      %1619 = vset.pattern.permute.xlu0 0
      %1620 = vperm.xlu0 %1619, %v342
      %v1621 = vpop.permute.xlu0 %1620
      %v1624 = vunpack.c.l.s4 839922192
      %v1625 = vunpack.c.0.s8 %v1624
      %v1626 = vlaneseq
      %v1627 = vshrl.u32 %v1626, 7
      %v1628 = vsub.s32 %v1625, %v1627
      %v1629 = vrot.slane %v1621, %v1628
      %1631 = vset.pattern.permute.xlu0 0
      %1632 = vperm.xlu0 %1631, %v343
      %v1633 = vpop.permute.xlu0 %1632
      %v1636 = vunpack.c.l.s4 839922192
      %v1637 = vunpack.c.0.s8 %v1636
      %v1638 = vlaneseq
      %v1639 = vshrl.u32 %v1638, 7
      %v1640 = vsub.s32 %v1637, %v1639
      %v1641 = vrot.slane %v1633, %v1640
      %1643 = vset.pattern.permute.xlu0 0
      %1644 = vperm.xlu0 %1643, %v344
      %v1645 = vpop.permute.xlu0 %1644
      %v1648 = vunpack.c.l.s4 839922192
      %v1649 = vunpack.c.0.s8 %v1648
      %v1650 = vlaneseq
      %v1651 = vshrl.u32 %v1650, 7
      %v1652 = vsub.s32 %v1649, %v1651
      %v1653 = vrot.slane %v1645, %v1652
      %1655 = vset.pattern.permute.xlu0 0
      %1656 = vperm.xlu0 %1655, %v345
      %v1657 = vpop.permute.xlu0 %1656
      %v1660 = vunpack.c.l.s4 839922192
      %v1661 = vunpack.c.0.s8 %v1660
      %v1662 = vlaneseq
      %v1663 = vshrl.u32 %v1662, 7
      %v1664 = vsub.s32 %v1661, %v1663
      %v1665 = vrot.slane %v1657, %v1664
      %1667 = vset.pattern.permute.xlu0 0
      %1668 = vperm.xlu0 %1667, %v346
      %v1669 = vpop.permute.xlu0 %1668
      %v1672 = vunpack.c.l.s4 839922192
      %v1673 = vunpack.c.0.s8 %v1672
      %v1674 = vlaneseq
      %v1675 = vshrl.u32 %v1674, 7
      %v1676 = vsub.s32 %v1673, %v1675
      %v1677 = vrot.slane %v1669, %v1676
      %1679 = vset.pattern.permute.xlu0 0
      %1680 = vperm.xlu0 %1679, %v347
      %v1681 = vpop.permute.xlu0 %1680
      %v1684 = vunpack.c.l.s4 839922192
      %v1685 = vunpack.c.0.s8 %v1684
      %v1686 = vlaneseq
      %v1687 = vshrl.u32 %v1686, 7
      %v1688 = vsub.s32 %v1685, %v1687
      %v1689 = vrot.slane %v1681, %v1688
      %1691 = vset.pattern.permute.xlu0 0
      %1692 = vperm.xlu0 %1691, %v348
      %v1693 = vpop.permute.xlu0 %1692
      %v1696 = vunpack.c.l.s4 839922192
      %v1697 = vunpack.c.0.s8 %v1696
      %v1698 = vlaneseq
      %v1699 = vshrl.u32 %v1698, 7
      %v1700 = vsub.s32 %v1697, %v1699
      %v1701 = vrot.slane %v1693, %v1700
      %1703 = vset.pattern.permute.xlu0 0
      %1704 = vperm.xlu0 %1703, %v349
      %v1705 = vpop.permute.xlu0 %1704
      %v1708 = vunpack.c.l.s4 839922192
      %v1709 = vunpack.c.0.s8 %v1708
      %v1710 = vlaneseq
      %v1711 = vshrl.u32 %v1710, 7
      %v1712 = vsub.s32 %v1709, %v1711
      %v1713 = vrot.slane %v1705, %v1712
      %1715 = vset.pattern.permute.xlu0 0
      %1716 = vperm.xlu0 %1715, %v350
      %v1717 = vpop.permute.xlu0 %1716
      %v1720 = vunpack.c.l.s4 839922192
      %v1721 = vunpack.c.0.s8 %v1720
      %v1722 = vlaneseq
      %v1723 = vshrl.u32 %v1722, 7
      %v1724 = vsub.s32 %v1721, %v1723
      %v1725 = vrot.slane %v1717, %v1724
      %1727 = vset.pattern.permute.xlu0 0
      %1728 = vperm.xlu0 %1727, %v351
      %v1729 = vpop.permute.xlu0 %1728
      %v1732 = vunpack.c.l.s4 839922192
      %v1733 = vunpack.c.0.s8 %v1732
      %v1734 = vlaneseq
      %v1735 = vshrl.u32 %v1734, 7
      %v1736 = vsub.s32 %v1733, %v1735
      %v1737 = vrot.slane %v1729, %v1736
      %1739 = vset.pattern.permute.xlu0 0
      %1740 = vperm.xlu0 %1739, %v352
      %v1741 = vpop.permute.xlu0 %1740
      %v1744 = vunpack.c.l.s4 839922192
      %v1745 = vunpack.c.0.s8 %v1744
      %v1746 = vlaneseq
      %v1747 = vshrl.u32 %v1746, 7
      %v1748 = vsub.s32 %v1745, %v1747
      %v1749 = vrot.slane %v1741, %v1748
      %1751 = vset.pattern.permute.xlu0 0
      %1752 = vperm.xlu0 %1751, %v353
      %v1753 = vpop.permute.xlu0 %1752
      %v1756 = vunpack.c.l.s4 839922192
      %v1757 = vunpack.c.0.s8 %v1756
      %v1758 = vlaneseq
      %v1759 = vshrl.u32 %v1758, 7
      %v1760 = vsub.s32 %v1757, %v1759
      %v1761 = vrot.slane %v1753, %v1760
      %1763 = vset.pattern.permute.xlu0 0
      %1764 = vperm.xlu0 %1763, %v354
      %v1765 = vpop.permute.xlu0 %1764
      %v1768 = vunpack.c.l.s4 839922192
      %v1769 = vunpack.c.0.s8 %v1768
      %v1770 = vlaneseq
      %v1771 = vshrl.u32 %v1770, 7
      %v1772 = vsub.s32 %v1769, %v1771
      %v1773 = vrot.slane %v1765, %v1772
      %1775 = vset.pattern.permute.xlu0 0
      %1776 = vperm.xlu0 %1775, %v355
      %v1777 = vpop.permute.xlu0 %1776
      %v1780 = vunpack.c.l.s4 839922192
      %v1781 = vunpack.c.0.s8 %v1780
      %v1782 = vlaneseq
      %v1783 = vshrl.u32 %v1782, 7
      %v1784 = vsub.s32 %v1781, %v1783
      %v1785 = vrot.slane %v1777, %v1784
      %1787 = vset.pattern.permute.xlu0 0
      %1788 = vperm.xlu0 %1787, %v356
      %v1789 = vpop.permute.xlu0 %1788
      %v1792 = vunpack.c.l.s4 839922192
      %v1793 = vunpack.c.0.s8 %v1792
      %v1794 = vlaneseq
      %v1795 = vshrl.u32 %v1794, 7
      %v1796 = vsub.s32 %v1793, %v1795
      %v1797 = vrot.slane %v1789, %v1796
      %1799 = vset.pattern.permute.xlu0 0
      %1800 = vperm.xlu0 %1799, %v357
      %v1801 = vpop.permute.xlu0 %1800
      %v1804 = vunpack.c.l.s4 839922192
      %v1805 = vunpack.c.0.s8 %v1804
      %v1806 = vlaneseq
      %v1807 = vshrl.u32 %v1806, 7
      %v1808 = vsub.s32 %v1805, %v1807
      %v1809 = vrot.slane %v1801, %v1808
      %1811 = vset.pattern.permute.xlu0 0
      %1812 = vperm.xlu0 %1811, %v358
      %v1813 = vpop.permute.xlu0 %1812
      %v1816 = vunpack.c.l.s4 839922192
      %v1817 = vunpack.c.0.s8 %v1816
      %v1818 = vlaneseq
      %v1819 = vshrl.u32 %v1818, 7
      %v1820 = vsub.s32 %v1817, %v1819
      %v1821 = vrot.slane %v1813, %v1820
      %1823 = vset.pattern.permute.xlu0 0
      %1824 = vperm.xlu0 %1823, %v359
      %v1825 = vpop.permute.xlu0 %1824
      %v1828 = vunpack.c.l.s4 839922192
      %v1829 = vunpack.c.0.s8 %v1828
      %v1830 = vlaneseq
      %v1831 = vshrl.u32 %v1830, 7
      %v1832 = vsub.s32 %v1829, %v1831
      %v1833 = vrot.slane %v1825, %v1832
      %1835 = vset.pattern.permute.xlu0 0
      %1836 = vperm.xlu0 %1835, %v360
      %v1837 = vpop.permute.xlu0 %1836
      %v1840 = vunpack.c.l.s4 839922192
      %v1841 = vunpack.c.0.s8 %v1840
      %v1842 = vlaneseq
      %v1843 = vshrl.u32 %v1842, 7
      %v1844 = vsub.s32 %v1841, %v1843
      %v1845 = vrot.slane %v1837, %v1844
      %1847 = vset.pattern.permute.xlu0 0
      %1848 = vperm.xlu0 %1847, %v361
      %v1849 = vpop.permute.xlu0 %1848
      %v1852 = vunpack.c.l.s4 839922192
      %v1853 = vunpack.c.0.s8 %v1852
      %v1854 = vlaneseq
      %v1855 = vshrl.u32 %v1854, 7
      %v1856 = vsub.s32 %v1853, %v1855
      %v1857 = vrot.slane %v1849, %v1856
      %1859 = vset.pattern.permute.xlu0 0
      %1860 = vperm.xlu0 %1859, %v362
      %v1861 = vpop.permute.xlu0 %1860
      %v1864 = vunpack.c.l.s4 839922192
      %v1865 = vunpack.c.0.s8 %v1864
      %v1866 = vlaneseq
      %v1867 = vshrl.u32 %v1866, 7
      %v1868 = vsub.s32 %v1865, %v1867
      %v1869 = vrot.slane %v1861, %v1868
      %1871 = vset.pattern.permute.xlu0 0
      %1872 = vperm.xlu0 %1871, %v363
      %v1873 = vpop.permute.xlu0 %1872
      %v1876 = vunpack.c.l.s4 839922192
      %v1877 = vunpack.c.0.s8 %v1876
      %v1878 = vlaneseq
      %v1879 = vshrl.u32 %v1878, 7
      %v1880 = vsub.s32 %v1877, %v1879
      %v1881 = vrot.slane %v1873, %v1880
      %1883 = vset.pattern.permute.xlu0 0
      %1884 = vperm.xlu0 %1883, %v364
      %v1885 = vpop.permute.xlu0 %1884
      %v1888 = vunpack.c.l.s4 839922192
      %v1889 = vunpack.c.0.s8 %v1888
      %v1890 = vlaneseq
      %v1891 = vshrl.u32 %v1890, 7
      %v1892 = vsub.s32 %v1889, %v1891
      %v1893 = vrot.slane %v1885, %v1892
      %1895 = vset.pattern.permute.xlu0 0
      %1896 = vperm.xlu0 %1895, %v365
      %v1897 = vpop.permute.xlu0 %1896
      %v1900 = vunpack.c.l.s4 839922192
      %v1901 = vunpack.c.0.s8 %v1900
      %v1902 = vlaneseq
      %v1903 = vshrl.u32 %v1902, 7
      %v1904 = vsub.s32 %v1901, %v1903
      %v1905 = vrot.slane %v1897, %v1904
      %1907 = vset.pattern.permute.xlu0 0
      %1908 = vperm.xlu0 %1907, %v366
      %v1909 = vpop.permute.xlu0 %1908
      %v1912 = vunpack.c.l.s4 839922192
      %v1913 = vunpack.c.0.s8 %v1912
      %v1914 = vlaneseq
      %v1915 = vshrl.u32 %v1914, 7
      %v1916 = vsub.s32 %v1913, %v1915
      %v1917 = vrot.slane %v1909, %v1916
      %1919 = vset.pattern.permute.xlu0 0
      %1920 = vperm.xlu0 %1919, %v367
      %v1921 = vpop.permute.xlu0 %1920
      %v1924 = vunpack.c.l.s4 839922192
      %v1925 = vunpack.c.0.s8 %v1924
      %v1926 = vlaneseq
      %v1927 = vshrl.u32 %v1926, 7
      %v1928 = vsub.s32 %v1925, %v1927
      %v1929 = vrot.slane %v1921, %v1928
      %1931 = vset.pattern.permute.xlu0 0
      %1932 = vperm.xlu0 %1931, %v368
      %v1933 = vpop.permute.xlu0 %1932
      %v1936 = vunpack.c.l.s4 839922192
      %v1937 = vunpack.c.0.s8 %v1936
      %v1938 = vlaneseq
      %v1939 = vshrl.u32 %v1938, 7
      %v1940 = vsub.s32 %v1937, %v1939
      %v1941 = vrot.slane %v1933, %v1940
      %1943 = vset.pattern.permute.xlu0 0
      %1944 = vperm.xlu0 %1943, %v369
      %v1945 = vpop.permute.xlu0 %1944
      %v1948 = vunpack.c.l.s4 839922192
      %v1949 = vunpack.c.0.s8 %v1948
      %v1950 = vlaneseq
      %v1951 = vshrl.u32 %v1950, 7
      %v1952 = vsub.s32 %v1949, %v1951
      %v1953 = vrot.slane %v1945, %v1952
      %1955 = vset.pattern.permute.xlu0 0
      %1956 = vperm.xlu0 %1955, %v370
      %v1957 = vpop.permute.xlu0 %1956
      %v1960 = vunpack.c.l.s4 839922192
      %v1961 = vunpack.c.0.s8 %v1960
      %v1962 = vlaneseq
      %v1963 = vshrl.u32 %v1962, 7
      %v1964 = vsub.s32 %v1961, %v1963
      %v1965 = vrot.slane %v1957, %v1964
      %1967 = vset.pattern.permute.xlu0 0
      %1968 = vperm.xlu0 %1967, %v371
      %v1969 = vpop.permute.xlu0 %1968
      %v1972 = vunpack.c.l.s4 839922192
      %v1973 = vunpack.c.0.s8 %v1972
      %v1974 = vlaneseq
      %v1975 = vshrl.u32 %v1974, 7
      %v1976 = vsub.s32 %v1973, %v1975
      %v1977 = vrot.slane %v1969, %v1976
      %1979 = vset.pattern.permute.xlu0 0
      %1980 = vperm.xlu0 %1979, %v372
      %v1981 = vpop.permute.xlu0 %1980
      %v1984 = vunpack.c.l.s4 839922192
      %v1985 = vunpack.c.0.s8 %v1984
      %v1986 = vlaneseq
      %v1987 = vshrl.u32 %v1986, 7
      %v1988 = vsub.s32 %v1985, %v1987
      %v1989 = vrot.slane %v1981, %v1988
      %1991 = vset.pattern.permute.xlu0 0
      %1992 = vperm.xlu0 %1991, %v373
      %v1993 = vpop.permute.xlu0 %1992
      %v1996 = vunpack.c.l.s4 839922192
      %v1997 = vunpack.c.0.s8 %v1996
      %v1998 = vlaneseq
      %v1999 = vshrl.u32 %v1998, 7
      %v2000 = vsub.s32 %v1997, %v1999
      %v2001 = vrot.slane %v1993, %v2000
      %2003 = vset.pattern.permute.xlu0 0
      %2004 = vperm.xlu0 %2003, %v374
      %v2005 = vpop.permute.xlu0 %2004
      %v2008 = vunpack.c.l.s4 839922192
      %v2009 = vunpack.c.0.s8 %v2008
      %v2010 = vlaneseq
      %v2011 = vshrl.u32 %v2010, 7
      %v2012 = vsub.s32 %v2009, %v2011
      %v2013 = vrot.slane %v2005, %v2012
      %2015 = vset.pattern.permute.xlu0 0
      %2016 = vperm.xlu0 %2015, %v375
      %v2017 = vpop.permute.xlu0 %2016
      %v2020 = vunpack.c.l.s4 839922192
      %v2021 = vunpack.c.0.s8 %v2020
      %v2022 = vlaneseq
      %v2023 = vshrl.u32 %v2022, 7
      %v2024 = vsub.s32 %v2021, %v2023
      %v2025 = vrot.slane %v2017, %v2024
      %2027 = vset.pattern.permute.xlu0 0
      %2028 = vperm.xlu0 %2027, %v376
      %v2029 = vpop.permute.xlu0 %2028
      %v2032 = vunpack.c.l.s4 839922192
      %v2033 = vunpack.c.0.s8 %v2032
      %v2034 = vlaneseq
      %v2035 = vshrl.u32 %v2034, 7
      %v2036 = vsub.s32 %v2033, %v2035
      %v2037 = vrot.slane %v2029, %v2036
      %2039 = vset.pattern.permute.xlu0 0
      %2040 = vperm.xlu0 %2039, %v377
      %v2041 = vpop.permute.xlu0 %2040
      %v2044 = vunpack.c.l.s4 839922192
      %v2045 = vunpack.c.0.s8 %v2044
      %v2046 = vlaneseq
      %v2047 = vshrl.u32 %v2046, 7
      %v2048 = vsub.s32 %v2045, %v2047
      %v2049 = vrot.slane %v2041, %v2048
      %2051 = vset.pattern.permute.xlu0 0
      %2052 = vperm.xlu0 %2051, %v378
      %v2053 = vpop.permute.xlu0 %2052
      %v2056 = vunpack.c.l.s4 839922192
      %v2057 = vunpack.c.0.s8 %v2056
      %v2058 = vlaneseq
      %v2059 = vshrl.u32 %v2058, 7
      %v2060 = vsub.s32 %v2057, %v2059
      %v2061 = vrot.slane %v2053, %v2060
      %2063 = vset.pattern.permute.xlu0 0
      %2064 = vperm.xlu0 %2063, %v379
      %v2065 = vpop.permute.xlu0 %2064
      %v2068 = vunpack.c.l.s4 839922192
      %v2069 = vunpack.c.0.s8 %v2068
      %v2070 = vlaneseq
      %v2071 = vshrl.u32 %v2070, 7
      %v2072 = vsub.s32 %v2069, %v2071
      %v2073 = vrot.slane %v2065, %v2072
      %2075 = vset.pattern.permute.xlu0 0
      %2076 = vperm.xlu0 %2075, %v380
      %v2077 = vpop.permute.xlu0 %2076
      %v2080 = vunpack.c.l.s4 839922192
      %v2081 = vunpack.c.0.s8 %v2080
      %v2082 = vlaneseq
      %v2083 = vshrl.u32 %v2082, 7
      %v2084 = vsub.s32 %v2081, %v2083
      %v2085 = vrot.slane %v2077, %v2084
      %2087 = vset.pattern.permute.xlu0 0
      %2088 = vperm.xlu0 %2087, %v381
      %v2089 = vpop.permute.xlu0 %2088
      %v2092 = vunpack.c.l.s4 839922192
      %v2093 = vunpack.c.0.s8 %v2092
      %v2094 = vlaneseq
      %v2095 = vshrl.u32 %v2094, 7
      %v2096 = vsub.s32 %v2093, %v2095
      %v2097 = vrot.slane %v2089, %v2096
      %2099 = vset.pattern.permute.xlu0 0
      %2100 = vperm.xlu0 %2099, %v382
      %v2101 = vpop.permute.xlu0 %2100
      %v2104 = vunpack.c.l.s4 839922192
      %v2105 = vunpack.c.0.s8 %v2104
      %v2106 = vlaneseq
      %v2107 = vshrl.u32 %v2106, 7
      %v2108 = vsub.s32 %v2105, %v2107
      %v2109 = vrot.slane %v2101, %v2108
      %2111 = vset.pattern.permute.xlu0 0
      %2112 = vperm.xlu0 %2111, %v383
      %v2113 = vpop.permute.xlu0 %2112
      %v2116 = vunpack.c.l.s4 839922192
      %v2117 = vunpack.c.0.s8 %v2116
      %v2118 = vlaneseq
      %v2119 = vshrl.u32 %v2118, 7
      %v2120 = vsub.s32 %v2117, %v2119
      %v2121 = vrot.slane %v2113, %v2120
      %2123 = vset.pattern.permute.xlu0 0
      %2124 = vperm.xlu0 %2123, %v384
      %v2125 = vpop.permute.xlu0 %2124
      %v2128 = vunpack.c.l.s4 839922192
      %v2129 = vunpack.c.0.s8 %v2128
      %v2130 = vlaneseq
      %v2131 = vshrl.u32 %v2130, 7
      %v2132 = vsub.s32 %v2129, %v2131
      %v2133 = vrot.slane %v2125, %v2132
      %2135 = vset.pattern.permute.xlu0 0
      %2136 = vperm.xlu0 %2135, %v385
      %v2137 = vpop.permute.xlu0 %2136
      %v2140 = vunpack.c.l.s4 839922192
      %v2141 = vunpack.c.0.s8 %v2140
      %v2142 = vlaneseq
      %v2143 = vshrl.u32 %v2142, 7
      %v2144 = vsub.s32 %v2141, %v2143
      %v2145 = vrot.slane %v2137, %v2144
      %2147 = vset.pattern.permute.xlu0 0
      %2148 = vperm.xlu0 %2147, %v386
      %v2149 = vpop.permute.xlu0 %2148
      %v2152 = vunpack.c.l.s4 839922192
      %v2153 = vunpack.c.0.s8 %v2152
      %v2154 = vlaneseq
      %v2155 = vshrl.u32 %v2154, 7
      %v2156 = vsub.s32 %v2153, %v2155
      %v2157 = vrot.slane %v2149, %v2156
      %2159 = vset.pattern.permute.xlu0 0
      %2160 = vperm.xlu0 %2159, %v387
      %v2161 = vpop.permute.xlu0 %2160
      %v2164 = vunpack.c.l.s4 839922192
      %v2165 = vunpack.c.0.s8 %v2164
      %v2166 = vlaneseq
      %v2167 = vshrl.u32 %v2166, 7
      %v2168 = vsub.s32 %v2165, %v2167
      %v2169 = vrot.slane %v2161, %v2168
      %2171 = vset.pattern.permute.xlu0 0
      %2172 = vperm.xlu0 %2171, %v388
      %v2173 = vpop.permute.xlu0 %2172
      %v2176 = vunpack.c.l.s4 839922192
      %v2177 = vunpack.c.0.s8 %v2176
      %v2178 = vlaneseq
      %v2179 = vshrl.u32 %v2178, 7
      %v2180 = vsub.s32 %v2177, %v2179
      %v2181 = vrot.slane %v2173, %v2180
      %2183 = vset.pattern.permute.xlu0 0
      %2184 = vperm.xlu0 %2183, %v389
      %v2185 = vpop.permute.xlu0 %2184
      %v2188 = vunpack.c.l.s4 839922192
      %v2189 = vunpack.c.0.s8 %v2188
      %v2190 = vlaneseq
      %v2191 = vshrl.u32 %v2190, 7
      %v2192 = vsub.s32 %v2189, %v2191
      %v2193 = vrot.slane %v2185, %v2192
      %2195 = vset.pattern.permute.xlu0 0
      %2196 = vperm.xlu0 %2195, %v390
      %v2197 = vpop.permute.xlu0 %2196
      %v2200 = vunpack.c.l.s4 839922192
      %v2201 = vunpack.c.0.s8 %v2200
      %v2202 = vlaneseq
      %v2203 = vshrl.u32 %v2202, 7
      %v2204 = vsub.s32 %v2201, %v2203
      %v2205 = vrot.slane %v2197, %v2204
      %2207 = vset.pattern.permute.xlu0 0
      %2208 = vperm.xlu0 %2207, %v391
      %v2209 = vpop.permute.xlu0 %2208
      %v2212 = vunpack.c.l.s4 839922192
      %v2213 = vunpack.c.0.s8 %v2212
      %v2214 = vlaneseq
      %v2215 = vshrl.u32 %v2214, 7
      %v2216 = vsub.s32 %v2213, %v2215
      %v2217 = vrot.slane %v2209, %v2216
      %2219 = vset.pattern.permute.xlu0 0
      %2220 = vperm.xlu0 %2219, %v392
      %v2221 = vpop.permute.xlu0 %2220
      %v2224 = vunpack.c.l.s4 839922192
      %v2225 = vunpack.c.0.s8 %v2224
      %v2226 = vlaneseq
      %v2227 = vshrl.u32 %v2226, 7
      %v2228 = vsub.s32 %v2225, %v2227
      %v2229 = vrot.slane %v2221, %v2228
      %2231 = vset.pattern.permute.xlu0 0
      %2232 = vperm.xlu0 %2231, %v393
      %v2233 = vpop.permute.xlu0 %2232
      %v2236 = vunpack.c.l.s4 839922192
      %v2237 = vunpack.c.0.s8 %v2236
      %v2238 = vlaneseq
      %v2239 = vshrl.u32 %v2238, 7
      %v2240 = vsub.s32 %v2237, %v2239
      %v2241 = vrot.slane %v2233, %v2240
      %2243 = vset.pattern.permute.xlu0 0
      %2244 = vperm.xlu0 %2243, %v394
      %v2245 = vpop.permute.xlu0 %2244
      %v2248 = vunpack.c.l.s4 839922192
      %v2249 = vunpack.c.0.s8 %v2248
      %v2250 = vlaneseq
      %v2251 = vshrl.u32 %v2250, 7
      %v2252 = vsub.s32 %v2249, %v2251
      %v2253 = vrot.slane %v2245, %v2252
      %2255 = vset.pattern.permute.xlu0 0
      %2256 = vperm.xlu0 %2255, %v395
      %v2257 = vpop.permute.xlu0 %2256
      %v2260 = vunpack.c.l.s4 839922192
      %v2261 = vunpack.c.0.s8 %v2260
      %v2262 = vlaneseq
      %v2263 = vshrl.u32 %v2262, 7
      %v2264 = vsub.s32 %v2261, %v2263
      %v2265 = vrot.slane %v2257, %v2264
      %2267 = vset.pattern.permute.xlu0 0
      %2268 = vperm.xlu0 %2267, %v396
      %v2269 = vpop.permute.xlu0 %2268
      %v2272 = vunpack.c.l.s4 839922192
      %v2273 = vunpack.c.0.s8 %v2272
      %v2274 = vlaneseq
      %v2275 = vshrl.u32 %v2274, 7
      %v2276 = vsub.s32 %v2273, %v2275
      %v2277 = vrot.slane %v2269, %v2276
      %2279 = vset.pattern.permute.xlu0 0
      %2280 = vperm.xlu0 %2279, %v397
      %v2281 = vpop.permute.xlu0 %2280
      %v2284 = vunpack.c.l.s4 839922192
      %v2285 = vunpack.c.0.s8 %v2284
      %v2286 = vlaneseq
      %v2287 = vshrl.u32 %v2286, 7
      %v2288 = vsub.s32 %v2285, %v2287
      %v2289 = vrot.slane %v2281, %v2288
      %2291 = vset.pattern.permute.xlu0 0
      %2292 = vperm.xlu0 %2291, %v398
      %v2293 = vpop.permute.xlu0 %2292
      %v2296 = vunpack.c.l.s4 839922192
      %v2297 = vunpack.c.0.s8 %v2296
      %v2298 = vlaneseq
      %v2299 = vshrl.u32 %v2298, 7
      %v2300 = vsub.s32 %v2297, %v2299
      %v2301 = vrot.slane %v2293, %v2300
      %v2402 = vunpack.c.l.b16 %v1113
      %v2403 = vunpack.c.l.b16 %v1125
      %v2404 = vunpack.c.l.b16 %v1137
      %v2405 = vunpack.c.l.b16 %v1149
      %v2406 = vunpack.c.l.b16 %v1161
      %v2407 = vunpack.c.l.b16 %v1173
      %v2408 = vunpack.c.l.b16 %v1185
      %v2409 = vunpack.c.l.b16 %v1197
      %v2410 = vunpack.c.l.b16 %v1209
      %v2411 = vunpack.c.l.b16 %v1221
      %v2412 = vunpack.c.l.b16 %v1233
      %v2413 = vunpack.c.l.b16 %v1245
      %v2414 = vunpack.c.l.b16 %v1257
      %v2415 = vunpack.c.l.b16 %v1269
      %v2416 = vunpack.c.l.b16 %v1281
      %v2417 = vunpack.c.l.b16 %v1293
      %v2418 = vunpack.c.l.b16 %v1305
      %v2419 = vunpack.c.l.b16 %v1317
      %v2420 = vunpack.c.l.b16 %v1329
      %v2421 = vunpack.c.l.b16 %v1341
      %v2422 = vunpack.c.l.b16 %v1353
      %v2423 = vunpack.c.l.b16 %v1365
      %v2424 = vunpack.c.l.b16 %v1377
      %v2425 = vunpack.c.l.b16 %v1389
      %v2426 = vunpack.c.l.b16 %v1401
      %v2427 = vunpack.c.l.b16 %v1413
      %v2428 = vunpack.c.l.b16 %v1425
      %v2429 = vunpack.c.l.b16 %v1437
      %v2430 = vunpack.c.l.b16 %v1449
      %v2431 = vunpack.c.l.b16 %v1461
      %v2432 = vunpack.c.l.b16 %v1473
      %v2433 = vunpack.c.l.b16 %v1485
      %v2434 = vunpack.c.l.b16 %v1497
      %v2435 = vunpack.c.l.b16 %v1509
      %v2436 = vunpack.c.l.b16 %v1521
      %v2437 = vunpack.c.l.b16 %v1533
      %v2438 = vunpack.c.l.b16 %v1545
      %v2439 = vunpack.c.l.b16 %v1557
      %v2440 = vunpack.c.l.b16 %v1569
      %v2441 = vunpack.c.l.b16 %v1581
      %v2442 = vunpack.c.l.b16 %v1593
      %v2443 = vunpack.c.l.b16 %v1605
      %v2444 = vunpack.c.l.b16 %v1617
      %v2445 = vunpack.c.l.b16 %v1629
      %v2446 = vunpack.c.l.b16 %v1641
      %v2447 = vunpack.c.l.b16 %v1653
      %v2448 = vunpack.c.l.b16 %v1665
      %v2449 = vunpack.c.l.b16 %v1677
      %v2450 = vunpack.c.l.b16 %v1689
      %v2451 = vunpack.c.l.b16 %v1701
      %v2452 = vunpack.c.l.b16 %v1713
      %v2453 = vunpack.c.l.b16 %v1725
      %v2454 = vunpack.c.l.b16 %v1737
      %v2455 = vunpack.c.l.b16 %v1749
      %v2456 = vunpack.c.l.b16 %v1761
      %v2457 = vunpack.c.l.b16 %v1773
      %v2458 = vunpack.c.l.b16 %v1785
      %v2459 = vunpack.c.l.b16 %v1797
      %v2460 = vunpack.c.l.b16 %v1809
      %v2461 = vunpack.c.l.b16 %v1821
      %v2462 = vunpack.c.l.b16 %v1833
      %v2463 = vunpack.c.l.b16 %v1845
      %v2464 = vunpack.c.l.b16 %v1857
      %v2465 = vunpack.c.l.b16 %v1869
      %v2466 = vunpack.c.l.b16 %v1881
      %v2467 = vunpack.c.l.b16 %v1893
      %v2468 = vunpack.c.l.b16 %v1905
      %v2469 = vunpack.c.l.b16 %v1917
      %v2470 = vunpack.c.l.b16 %v1929
      %v2471 = vunpack.c.l.b16 %v1941
      %v2472 = vunpack.c.l.b16 %v1953
      %v2473 = vunpack.c.l.b16 %v1965
      %v2474 = vunpack.c.l.b16 %v1977
      %v2475 = vunpack.c.l.b16 %v1989
      %v2476 = vunpack.c.l.b16 %v2001
      %v2477 = vunpack.c.l.b16 %v2013
      %v2478 = vunpack.c.l.b16 %v2025
      %v2479 = vunpack.c.l.b16 %v2037
      %v2480 = vunpack.c.l.b16 %v2049
      %v2481 = vunpack.c.l.b16 %v2061
      %v2482 = vunpack.c.l.b16 %v2073
      %v2483 = vunpack.c.l.b16 %v2085
      %v2484 = vunpack.c.l.b16 %v2097
      %v2485 = vunpack.c.l.b16 %v2109
      %v2486 = vunpack.c.l.b16 %v2121
      %v2487 = vunpack.c.l.b16 %v2133
      %v2488 = vunpack.c.l.b16 %v2145
      %v2489 = vunpack.c.l.b16 %v2157
      %v2490 = vunpack.c.l.b16 %v2169
      %v2491 = vunpack.c.l.b16 %v2181
      %v2492 = vunpack.c.l.b16 %v2193
      %v2493 = vunpack.c.l.b16 %v2205
      %v2494 = vunpack.c.l.b16 %v2217
      %v2495 = vunpack.c.l.b16 %v2229
      %v2496 = vunpack.c.l.b16 %v2241
      %v2497 = vunpack.c.l.b16 %v2253
      %v2498 = vunpack.c.l.b16 %v2265
      %v2499 = vunpack.c.l.b16 %v2277
      %v2500 = vunpack.c.l.b16 %v2289
      %v2501 = vunpack.c.l.b16 %v2301
      %v2502 = vpack.c.b16 %v2403, %v2402
      %v2503 = vpack.c.b16 %v2405, %v2404
      %v2504 = vpack.c.b16 %v2407, %v2406
      %v2505 = vpack.c.b16 %v2409, %v2408
      %v2506 = vpack.c.b16 %v2411, %v2410
      %v2507 = vpack.c.b16 %v2413, %v2412
      %v2508 = vpack.c.b16 %v2415, %v2414
      %v2509 = vpack.c.b16 %v2417, %v2416
      %v2510 = vpack.c.b16 %v2419, %v2418
      %v2511 = vpack.c.b16 %v2421, %v2420
      %v2512 = vpack.c.b16 %v2423, %v2422
      %v2513 = vpack.c.b16 %v2425, %v2424
      %v2514 = vpack.c.b16 %v2427, %v2426
      %v2515 = vpack.c.b16 %v2429, %v2428
      %v2516 = vpack.c.b16 %v2431, %v2430
      %v2517 = vpack.c.b16 %v2433, %v2432
      %v2518 = vpack.c.b16 %v2435, %v2434
      %v2519 = vpack.c.b16 %v2437, %v2436
      %v2520 = vpack.c.b16 %v2439, %v2438
      %v2521 = vpack.c.b16 %v2441, %v2440
      %v2522 = vpack.c.b16 %v2443, %v2442
      %v2523 = vpack.c.b16 %v2445, %v2444
      %v2524 = vpack.c.b16 %v2447, %v2446
      %v2525 = vpack.c.b16 %v2449, %v2448
      %v2526 = vpack.c.b16 %v2451, %v2450
      %v2527 = vpack.c.b16 %v2453, %v2452
      %v2528 = vpack.c.b16 %v2455, %v2454
      %v2529 = vpack.c.b16 %v2457, %v2456
      %v2530 = vpack.c.b16 %v2459, %v2458
      %v2531 = vpack.c.b16 %v2461, %v2460
      %v2532 = vpack.c.b16 %v2463, %v2462
      %v2533 = vpack.c.b16 %v2465, %v2464
      %v2534 = vpack.c.b16 %v2467, %v2466
      %v2535 = vpack.c.b16 %v2469, %v2468
      %v2536 = vpack.c.b16 %v2471, %v2470
      %v2537 = vpack.c.b16 %v2473, %v2472
      %v2538 = vpack.c.b16 %v2475, %v2474
      %v2539 = vpack.c.b16 %v2477, %v2476
      %v2540 = vpack.c.b16 %v2479, %v2478
      %v2541 = vpack.c.b16 %v2481, %v2480
      %v2542 = vpack.c.b16 %v2483, %v2482
      %v2543 = vpack.c.b16 %v2485, %v2484
      %v2544 = vpack.c.b16 %v2487, %v2486
      %v2545 = vpack.c.b16 %v2489, %v2488
      %v2546 = vpack.c.b16 %v2491, %v2490
      %v2547 = vpack.c.b16 %v2493, %v2492
      %v2548 = vpack.c.b16 %v2495, %v2494
      %v2549 = vpack.c.b16 %v2497, %v2496
      %v2550 = vpack.c.b16 %v2499, %v2498
      %v2551 = vpack.c.b16 %v2501, %v2500
      %v2602 = vmul.bf16 %v661, %v2502
      %v2603 = vmul.bf16 %v669, %v2503
      %v2604 = vmul.bf16 %v677, %v2504
      %v2605 = vmul.bf16 %v685, %v2505
      %v2606 = vmul.bf16 %v693, %v2506
      %v2607 = vmul.bf16 %v701, %v2507
      %v2608 = vmul.bf16 %v709, %v2508
      %v2609 = vmul.bf16 %v717, %v2509
      %v2610 = vmul.bf16 %v725, %v2510
      %v2611 = vmul.bf16 %v733, %v2511
      %v2612 = vmul.bf16 %v741, %v2512
      %v2613 = vmul.bf16 %v749, %v2513
      %v2614 = vmul.bf16 %v757, %v2514
      %v2615 = vmul.bf16 %v765, %v2515
      %v2616 = vmul.bf16 %v773, %v2516
      %v2617 = vmul.bf16 %v781, %v2517
      %v2618 = vmul.bf16 %v789, %v2518
      %v2619 = vmul.bf16 %v797, %v2519
      %v2620 = vmul.bf16 %v805, %v2520
      %v2621 = vmul.bf16 %v813, %v2521
      %v2622 = vmul.bf16 %v821, %v2522
      %v2623 = vmul.bf16 %v829, %v2523
      %v2624 = vmul.bf16 %v837, %v2524
      %v2625 = vmul.bf16 %v845, %v2525
      %v2626 = vmul.bf16 %v853, %v2526
      %v2627 = vmul.bf16 %v861, %v2527
      %v2628 = vmul.bf16 %v869, %v2528
      %v2629 = vmul.bf16 %v877, %v2529
      %v2630 = vmul.bf16 %v885, %v2530
      %v2631 = vmul.bf16 %v893, %v2531
      %v2632 = vmul.bf16 %v901, %v2532
      %v2633 = vmul.bf16 %v909, %v2533
      %v2634 = vmul.bf16 %v917, %v2534
      %v2635 = vmul.bf16 %v925, %v2535
      %v2636 = vmul.bf16 %v933, %v2536
      %v2637 = vmul.bf16 %v941, %v2537
      %v2638 = vmul.bf16 %v949, %v2538
      %v2639 = vmul.bf16 %v957, %v2539
      %v2640 = vmul.bf16 %v965, %v2540
      %v2641 = vmul.bf16 %v973, %v2541
      %v2642 = vmul.bf16 %v981, %v2542
      %v2643 = vmul.bf16 %v989, %v2543
      %v2644 = vmul.bf16 %v997, %v2544
      %v2645 = vmul.bf16 %v1005, %v2545
      %v2646 = vmul.bf16 %v1013, %v2546
      %v2647 = vmul.bf16 %v1021, %v2547
      %v2648 = vmul.bf16 %v1029, %v2548
      %v2649 = vmul.bf16 %v1037, %v2549
      %v2650 = vmul.bf16 %v1045, %v2550
      %v2651 = vmul.bf16 %v1101, %v2551
      %v2652 = vpack.c.b16 %v505, %v504
      %v2653 = vpack.c.b16 %v507, %v506
      %v2654 = vpack.c.b16 %v509, %v508
      %v2655 = vpack.c.b16 %v511, %v510
      %v2656 = vpack.c.b16 %v513, %v512
      %v2657 = vpack.c.b16 %v515, %v514
      %v2658 = vpack.c.b16 %v517, %v516
      %v2659 = vpack.c.b16 %v519, %v518
      %v2660 = vpack.c.b16 %v521, %v520
      %v2661 = vpack.c.b16 %v523, %v522
      %v2662 = vpack.c.b16 %v525, %v524
      %v2663 = vpack.c.b16 %v527, %v526
      %v2664 = vpack.c.b16 %v529, %v528
      %v2665 = vpack.c.b16 %v531, %v530
      %v2666 = vpack.c.b16 %v533, %v532
      %v2667 = vpack.c.b16 %v535, %v534
      %v2668 = vpack.c.b16 %v537, %v536
      %v2669 = vpack.c.b16 %v539, %v538
      %v2670 = vpack.c.b16 %v541, %v540
      %v2671 = vpack.c.b16 %v543, %v542
      %v2672 = vpack.c.b16 %v545, %v544
      %v2673 = vpack.c.b16 %v547, %v546
      %v2674 = vpack.c.b16 %v549, %v548
      %v2675 = vpack.c.b16 %v551, %v550
      %v2676 = vpack.c.b16 %v553, %v552
      %v2677 = vpack.c.b16 %v555, %v554
      %v2678 = vpack.c.b16 %v557, %v556
      %v2679 = vpack.c.b16 %v559, %v558
      %v2680 = vpack.c.b16 %v561, %v560
      %v2681 = vpack.c.b16 %v563, %v562
      %v2682 = vpack.c.b16 %v565, %v564
      %v2683 = vpack.c.b16 %v567, %v566
      %v2684 = vpack.c.b16 %v569, %v568
      %v2685 = vpack.c.b16 %v571, %v570
      %v2686 = vpack.c.b16 %v573, %v572
      %v2687 = vpack.c.b16 %v575, %v574
      %v2688 = vpack.c.b16 %v577, %v576
      %v2689 = vpack.c.b16 %v579, %v578
      %v2690 = vpack.c.b16 %v581, %v580
      %v2691 = vpack.c.b16 %v583, %v582
      %v2692 = vpack.c.b16 %v585, %v584
      %v2693 = vpack.c.b16 %v587, %v586
      %v2694 = vpack.c.b16 %v589, %v588
      %v2695 = vpack.c.b16 %v591, %v590
      %v2696 = vpack.c.b16 %v593, %v592
      %v2697 = vpack.c.b16 %v595, %v594
      %v2698 = vpack.c.b16 %v597, %v596
      %v2699 = vpack.c.b16 %v598, %v598
      %vm2700 = vcmask 1043456
      %v2703 = vsel %vm2700, %v2699, 0
      %vm2752 = vcmask 1043456
      %v2753 = vrot.slane %v2604, 4
      %v2754 = vrot.slane %v2605, 4
      %v2755 = vsel %vm2752, %v2753, %v2754
      %v2756 = vrot.slane %v2606, 4
      %v2757 = vsel %vm2752, %v2754, %v2756
      %v2758 = vrot.slane %v2607, 4
      %v2759 = vsel %vm2752, %v2756, %v2758
      %v2760 = vrot.slane %v2608, 4
      %v2761 = vsel %vm2752, %v2758, %v2760
      %v2762 = vrot.slane %v2609, 4
      %v2763 = vsel %vm2752, %v2760, %v2762
      %v2764 = vrot.slane %v2610, 4
      %v2765 = vsel %vm2752, %v2762, %v2764
      %v2766 = vrot.slane %v2611, 4
      %v2767 = vsel %vm2752, %v2764, %v2766
      %v2768 = vrot.slane %v2612, 4
      %v2769 = vsel %vm2752, %v2766, %v2768
      %v2770 = vrot.slane %v2613, 4
      %v2771 = vsel %vm2752, %v2768, %v2770
      %v2772 = vrot.slane %v2614, 4
      %v2773 = vsel %vm2752, %v2770, %v2772
      %v2774 = vrot.slane %v2615, 4
      %v2775 = vsel %vm2752, %v2772, %v2774
      %v2776 = vrot.slane %v2616, 4
      %v2777 = vsel %vm2752, %v2774, %v2776
      %v2778 = vrot.slane %v2617, 4
      %v2779 = vsel %vm2752, %v2776, %v2778
      %v2780 = vrot.slane %v2618, 4
      %v2781 = vsel %vm2752, %v2778, %v2780
      %v2782 = vrot.slane %v2619, 4
      %v2783 = vsel %vm2752, %v2780, %v2782
      %v2784 = vrot.slane %v2620, 4
      %v2785 = vsel %vm2752, %v2782, %v2784
      %v2786 = vrot.slane %v2621, 4
      %v2787 = vsel %vm2752, %v2784, %v2786
      %v2788 = vrot.slane %v2622, 4
      %v2789 = vsel %vm2752, %v2786, %v2788
      %v2790 = vrot.slane %v2623, 4
      %v2791 = vsel %vm2752, %v2788, %v2790
      %v2792 = vrot.slane %v2624, 4
      %v2793 = vsel %vm2752, %v2790, %v2792
      %v2794 = vrot.slane %v2625, 4
      %v2795 = vsel %vm2752, %v2792, %v2794
      %v2796 = vrot.slane %v2626, 4
      %v2797 = vsel %vm2752, %v2794, %v2796
      %v2798 = vrot.slane %v2627, 4
      %v2799 = vsel %vm2752, %v2796, %v2798
      %v2800 = vrot.slane %v2628, 4
      %v2801 = vsel %vm2752, %v2798, %v2800
      %v2802 = vrot.slane %v2629, 4
      %v2803 = vsel %vm2752, %v2800, %v2802
      %v2804 = vrot.slane %v2630, 4
      %v2805 = vsel %vm2752, %v2802, %v2804
      %v2806 = vrot.slane %v2631, 4
      %v2807 = vsel %vm2752, %v2804, %v2806
      %v2808 = vrot.slane %v2632, 4
      %v2809 = vsel %vm2752, %v2806, %v2808
      %v2810 = vrot.slane %v2633, 4
      %v2811 = vsel %vm2752, %v2808, %v2810
      %v2812 = vrot.slane %v2634, 4
      %v2813 = vsel %vm2752, %v2810, %v2812
      %v2814 = vrot.slane %v2635, 4
      %v2815 = vsel %vm2752, %v2812, %v2814
      %v2816 = vrot.slane %v2636, 4
      %v2817 = vsel %vm2752, %v2814, %v2816
      %v2818 = vrot.slane %v2637, 4
      %v2819 = vsel %vm2752, %v2816, %v2818
      %v2820 = vrot.slane %v2638, 4
      %v2821 = vsel %vm2752, %v2818, %v2820
      %v2822 = vrot.slane %v2639, 4
      %v2823 = vsel %vm2752, %v2820, %v2822
      %v2824 = vrot.slane %v2640, 4
      %v2825 = vsel %vm2752, %v2822, %v2824
      %v2826 = vrot.slane %v2641, 4
      %v2827 = vsel %vm2752, %v2824, %v2826
      %v2828 = vrot.slane %v2642, 4
      %v2829 = vsel %vm2752, %v2826, %v2828
      %v2830 = vrot.slane %v2643, 4
      %v2831 = vsel %vm2752, %v2828, %v2830
      %v2832 = vrot.slane %v2644, 4
      %v2833 = vsel %vm2752, %v2830, %v2832
      %v2834 = vrot.slane %v2645, 4
      %v2835 = vsel %vm2752, %v2832, %v2834
      %v2836 = vrot.slane %v2646, 4
      %v2837 = vsel %vm2752, %v2834, %v2836
      %v2838 = vrot.slane %v2647, 4
      %v2839 = vsel %vm2752, %v2836, %v2838
      %v2840 = vrot.slane %v2648, 4
      %v2841 = vsel %vm2752, %v2838, %v2840
      %v2842 = vrot.slane %v2649, 4
      %v2843 = vsel %vm2752, %v2840, %v2842
      %v2844 = vrot.slane %v2650, 4
      %v2845 = vsel %vm2752, %v2842, %v2844
      %v2846 = vrot.slane %v2651, 4
      %v2847 = vsel %vm2752, %v2844, %v2846
      %v2849 = vsel %vm2700, %v2846, 0
      %2852 = vrot.lane.b32.xlu0 %v2602, 64
      %v2853 = vpop.permute.xlu0 %2852
      %2854 = vrot.lane.b32.xlu0 %v2603, 64
      %v2855 = vpop.permute.xlu0 %2854
      %2856 = vrot.lane.b32.xlu0 %v2604, 64
      %v2857 = vpop.permute.xlu0 %2856
      %2858 = vrot.lane.b32.xlu0 %v2605, 64
      %v2859 = vpop.permute.xlu0 %2858
      %2860 = vrot.lane.b32.xlu0 %v2606, 64
      %v2861 = vpop.permute.xlu0 %2860
      %2862 = vrot.lane.b32.xlu0 %v2607, 64
      %v2863 = vpop.permute.xlu0 %2862
      %2864 = vrot.lane.b32.xlu0 %v2608, 64
      %v2865 = vpop.permute.xlu0 %2864
      %2866 = vrot.lane.b32.xlu0 %v2609, 64
      %v2867 = vpop.permute.xlu0 %2866
      %2868 = vrot.lane.b32.xlu0 %v2610, 64
      %v2869 = vpop.permute.xlu0 %2868
      %2870 = vrot.lane.b32.xlu0 %v2611, 64
      %v2871 = vpop.permute.xlu0 %2870
      %2872 = vrot.lane.b32.xlu0 %v2612, 64
      %v2873 = vpop.permute.xlu0 %2872
      %2874 = vrot.lane.b32.xlu0 %v2613, 64
      %v2875 = vpop.permute.xlu0 %2874
      %2876 = vrot.lane.b32.xlu0 %v2614, 64
      %v2877 = vpop.permute.xlu0 %2876
      %2878 = vrot.lane.b32.xlu0 %v2615, 64
      %v2879 = vpop.permute.xlu0 %2878
      %2880 = vrot.lane.b32.xlu0 %v2616, 64
      %v2881 = vpop.permute.xlu0 %2880
      %2882 = vrot.lane.b32.xlu0 %v2617, 64
      %v2883 = vpop.permute.xlu0 %2882
      %2884 = vrot.lane.b32.xlu0 %v2618, 64
      %v2885 = vpop.permute.xlu0 %2884
      %2886 = vrot.lane.b32.xlu0 %v2619, 64
      %v2887 = vpop.permute.xlu0 %2886
      %2888 = vrot.lane.b32.xlu0 %v2620, 64
      %v2889 = vpop.permute.xlu0 %2888
      %2890 = vrot.lane.b32.xlu0 %v2621, 64
      %v2891 = vpop.permute.xlu0 %2890
      %2892 = vrot.lane.b32.xlu0 %v2622, 64
      %v2893 = vpop.permute.xlu0 %2892
      %2894 = vrot.lane.b32.xlu0 %v2623, 64
      %v2895 = vpop.permute.xlu0 %2894
      %2896 = vrot.lane.b32.xlu0 %v2624, 64
      %v2897 = vpop.permute.xlu0 %2896
      %2898 = vrot.lane.b32.xlu0 %v2625, 64
      %v2899 = vpop.permute.xlu0 %2898
      %2900 = vrot.lane.b32.xlu0 %v2626, 64
      %v2901 = vpop.permute.xlu0 %2900
      %2902 = vrot.lane.b32.xlu0 %v2627, 64
      %v2903 = vpop.permute.xlu0 %2902
      %2904 = vrot.lane.b32.xlu0 %v2628, 64
      %v2905 = vpop.permute.xlu0 %2904
      %2906 = vrot.lane.b32.xlu0 %v2629, 64
      %v2907 = vpop.permute.xlu0 %2906
      %2908 = vrot.lane.b32.xlu0 %v2630, 64
      %v2909 = vpop.permute.xlu0 %2908
      %2910 = vrot.lane.b32.xlu0 %v2631, 64
      %v2911 = vpop.permute.xlu0 %2910
      %2912 = vrot.lane.b32.xlu0 %v2632, 64
      %v2913 = vpop.permute.xlu0 %2912
      %2914 = vrot.lane.b32.xlu0 %v2633, 64
      %v2915 = vpop.permute.xlu0 %2914
      %2916 = vrot.lane.b32.xlu0 %v2634, 64
      %v2917 = vpop.permute.xlu0 %2916
      %2918 = vrot.lane.b32.xlu0 %v2635, 64
      %v2919 = vpop.permute.xlu0 %2918
      %2920 = vrot.lane.b32.xlu0 %v2636, 64
      %v2921 = vpop.permute.xlu0 %2920
      %2922 = vrot.lane.b32.xlu0 %v2637, 64
      %v2923 = vpop.permute.xlu0 %2922
      %2924 = vrot.lane.b32.xlu0 %v2638, 64
      %v2925 = vpop.permute.xlu0 %2924
      %2926 = vrot.lane.b32.xlu0 %v2639, 64
      %v2927 = vpop.permute.xlu0 %2926
      %2928 = vrot.lane.b32.xlu0 %v2640, 64
      %v2929 = vpop.permute.xlu0 %2928
      %2930 = vrot.lane.b32.xlu0 %v2641, 64
      %v2931 = vpop.permute.xlu0 %2930
      %2932 = vrot.lane.b32.xlu0 %v2642, 64
      %v2933 = vpop.permute.xlu0 %2932
      %2934 = vrot.lane.b32.xlu0 %v2643, 64
      %v2935 = vpop.permute.xlu0 %2934
      %2936 = vrot.lane.b32.xlu0 %v2644, 64
      %v2937 = vpop.permute.xlu0 %2936
      %2938 = vrot.lane.b32.xlu0 %v2645, 64
      %v2939 = vpop.permute.xlu0 %2938
      %2940 = vrot.lane.b32.xlu0 %v2646, 64
      %v2941 = vpop.permute.xlu0 %2940
      %2942 = vrot.lane.b32.xlu0 %v2647, 64
      %v2943 = vpop.permute.xlu0 %2942
      %2944 = vrot.lane.b32.xlu0 %v2648, 64
      %v2945 = vpop.permute.xlu0 %2944
      %2946 = vrot.lane.b32.xlu0 %v2649, 64
      %v2947 = vpop.permute.xlu0 %2946
      %2948 = vrot.lane.b32.xlu0 %v2650, 64
      %v2949 = vpop.permute.xlu0 %2948
      %2950 = vrot.lane.b32.xlu0 %v2651, 64
      %v2951 = vpop.permute.xlu0 %2950
      %2954 = vrot.lane.b32.xlu0 %v2755, 64
      %v2955 = vpop.permute.xlu0 %2954
      %2956 = vrot.lane.b32.xlu0 %v2757, 64
      %v2957 = vpop.permute.xlu0 %2956
      %2958 = vrot.lane.b32.xlu0 %v2759, 64
      %v2959 = vpop.permute.xlu0 %2958
      %2960 = vrot.lane.b32.xlu0 %v2761, 64
      %v2961 = vpop.permute.xlu0 %2960
      %2962 = vrot.lane.b32.xlu0 %v2763, 64
      %v2963 = vpop.permute.xlu0 %2962
      %2964 = vrot.lane.b32.xlu0 %v2765, 64
      %v2965 = vpop.permute.xlu0 %2964
      %2966 = vrot.lane.b32.xlu0 %v2767, 64
      %v2967 = vpop.permute.xlu0 %2966
      %2968 = vrot.lane.b32.xlu0 %v2769, 64
      %v2969 = vpop.permute.xlu0 %2968
      %2970 = vrot.lane.b32.xlu0 %v2771, 64
      %v2971 = vpop.permute.xlu0 %2970
      %2972 = vrot.lane.b32.xlu0 %v2773, 64
      %v2973 = vpop.permute.xlu0 %2972
      %2974 = vrot.lane.b32.xlu0 %v2775, 64
      %v2975 = vpop.permute.xlu0 %2974
      %2976 = vrot.lane.b32.xlu0 %v2777, 64
      %v2977 = vpop.permute.xlu0 %2976
      %2978 = vrot.lane.b32.xlu0 %v2779, 64
      %v2979 = vpop.permute.xlu0 %2978
      %2980 = vrot.lane.b32.xlu0 %v2781, 64
      %v2981 = vpop.permute.xlu0 %2980
      %2982 = vrot.lane.b32.xlu0 %v2783, 64
      %v2983 = vpop.permute.xlu0 %2982
      %2984 = vrot.lane.b32.xlu0 %v2785, 64
      %v2985 = vpop.permute.xlu0 %2984
      %2986 = vrot.lane.b32.xlu0 %v2787, 64
      %v2987 = vpop.permute.xlu0 %2986
      %2988 = vrot.lane.b32.xlu0 %v2789, 64
      %v2989 = vpop.permute.xlu0 %2988
      %2990 = vrot.lane.b32.xlu0 %v2791, 64
      %v2991 = vpop.permute.xlu0 %2990
      %2992 = vrot.lane.b32.xlu0 %v2793, 64
      %v2993 = vpop.permute.xlu0 %2992
      %2994 = vrot.lane.b32.xlu0 %v2795, 64
      %v2995 = vpop.permute.xlu0 %2994
      %2996 = vrot.lane.b32.xlu0 %v2797, 64
      %v2997 = vpop.permute.xlu0 %2996
      %2998 = vrot.lane.b32.xlu0 %v2799, 64
      %v2999 = vpop.permute.xlu0 %2998
      %3000 = vrot.lane.b32.xlu0 %v2801, 64
      %v3001 = vpop.permute.xlu0 %3000
      %3002 = vrot.lane.b32.xlu0 %v2803, 64
      %v3003 = vpop.permute.xlu0 %3002
      %3004 = vrot.lane.b32.xlu0 %v2805, 64
      %v3005 = vpop.permute.xlu0 %3004
      %3006 = vrot.lane.b32.xlu0 %v2807, 64
      %v3007 = vpop.permute.xlu0 %3006
      %3008 = vrot.lane.b32.xlu0 %v2809, 64
      %v3009 = vpop.permute.xlu0 %3008
      %3010 = vrot.lane.b32.xlu0 %v2811, 64
      %v3011 = vpop.permute.xlu0 %3010
      %3012 = vrot.lane.b32.xlu0 %v2813, 64
      %v3013 = vpop.permute.xlu0 %3012
      %3014 = vrot.lane.b32.xlu0 %v2815, 64
      %v3015 = vpop.permute.xlu0 %3014
      %3016 = vrot.lane.b32.xlu0 %v2817, 64
      %v3017 = vpop.permute.xlu0 %3016
      %3018 = vrot.lane.b32.xlu0 %v2819, 64
      %v3019 = vpop.permute.xlu0 %3018
      %3020 = vrot.lane.b32.xlu0 %v2821, 64
      %v3021 = vpop.permute.xlu0 %3020
      %3022 = vrot.lane.b32.xlu0 %v2823, 64
      %v3023 = vpop.permute.xlu0 %3022
      %3024 = vrot.lane.b32.xlu0 %v2825, 64
      %v3025 = vpop.permute.xlu0 %3024
      %3026 = vrot.lane.b32.xlu0 %v2827, 64
      %v3027 = vpop.permute.xlu0 %3026
      %3028 = vrot.lane.b32.xlu0 %v2829, 64
      %v3029 = vpop.permute.xlu0 %3028
      %3030 = vrot.lane.b32.xlu0 %v2831, 64
      %v3031 = vpop.permute.xlu0 %3030
      %3032 = vrot.lane.b32.xlu0 %v2833, 64
      %v3033 = vpop.permute.xlu0 %3032
      %3034 = vrot.lane.b32.xlu0 %v2835, 64
      %v3035 = vpop.permute.xlu0 %3034
      %3036 = vrot.lane.b32.xlu0 %v2837, 64
      %v3037 = vpop.permute.xlu0 %3036
      %3038 = vrot.lane.b32.xlu0 %v2839, 64
      %v3039 = vpop.permute.xlu0 %3038
      %3040 = vrot.lane.b32.xlu0 %v2841, 64
      %v3041 = vpop.permute.xlu0 %3040
      %3042 = vrot.lane.b32.xlu0 %v2843, 64
      %v3043 = vpop.permute.xlu0 %3042
      %3044 = vrot.lane.b32.xlu0 %v2845, 64
      %v3045 = vpop.permute.xlu0 %3044
      %3046 = vrot.lane.b32.xlu0 %v2847, 64
      %v3047 = vpop.permute.xlu0 %3046
      %3048 = vrot.lane.b32.xlu0 %v2849, 64
      %v3049 = vpop.permute.xlu0 %3048
      %3050 = vrot.lane.b32.xlu0 0, 64
      %v3051 = vpop.permute.xlu0 %3050
      %vm3052 = vcmask 523264
      %v3054 = vsel %vm3052, %v599, %v2853
      %v3057 = vsel %vm3052, %v600, %v2855
      %v3060 = vsel %vm3052, %v601, %v2857
      %v3063 = vsel %vm3052, %v602, %v2859
      %v3066 = vsel %vm3052, %v603, %v2861
      %v3069 = vsel %vm3052, %v604, %v2863
      %v3072 = vsel %vm3052, %v605, %v2865
      %v3075 = vsel %vm3052, %v606, %v2867
      %v3078 = vsel %vm3052, %v607, %v2869
      %v3081 = vsel %vm3052, %v608, %v2871
      %v3084 = vsel %vm3052, %v609, %v2873
      %v3087 = vsel %vm3052, %v610, %v2875
      %v3090 = vsel %vm3052, %v611, %v2877
      %v3093 = vsel %vm3052, %v612, %v2879
      %v3096 = vsel %vm3052, %v613, %v2881
      %v3099 = vsel %vm3052, %v614, %v2883
      %v3102 = vsel %vm3052, %v615, %v2885
      %v3105 = vsel %vm3052, %v616, %v2887
      %v3108 = vsel %vm3052, %v617, %v2889
      %v3111 = vsel %vm3052, %v618, %v2891
      %v3114 = vsel %vm3052, %v619, %v2893
      %v3117 = vsel %vm3052, %v620, %v2895
      %v3120 = vsel %vm3052, %v621, %v2897
      %v3123 = vsel %vm3052, %v622, %v2899
      %v3126 = vsel %vm3052, %v623, %v2901
      %v3129 = vsel %vm3052, %v624, %v2903
      %v3132 = vsel %vm3052, %v625, %v2905
      %v3135 = vsel %vm3052, %v626, %v2907
      %v3138 = vsel %vm3052, %v627, %v2909
      %v3141 = vsel %vm3052, %v628, %v2911
      %v3144 = vsel %vm3052, %v629, %v2913
      %v3147 = vsel %vm3052, %v630, %v2915
      %v3150 = vsel %vm3052, %v631, %v2917
      %v3153 = vsel %vm3052, %v632, %v2919
      %v3156 = vsel %vm3052, %v633, %v2921
      %v3159 = vsel %vm3052, %v634, %v2923
      %v3162 = vsel %vm3052, %v635, %v2925
      %v3165 = vsel %vm3052, %v636, %v2927
      %v3168 = vsel %vm3052, %v637, %v2929
      %v3171 = vsel %vm3052, %v638, %v2931
      %v3174 = vsel %vm3052, %v639, %v2933
      %v3177 = vsel %vm3052, %v640, %v2935
      %v3180 = vsel %vm3052, %v641, %v2937
      %v3183 = vsel %vm3052, %v642, %v2939
      %v3186 = vsel %vm3052, %v643, %v2941
      %v3189 = vsel %vm3052, %v644, %v2943
      %v3192 = vsel %vm3052, %v645, %v2945
      %v3195 = vsel %vm3052, %v646, %v2947
      %v3198 = vsel %vm3052, %v647, %v2949
      %v3201 = vsel %vm3052, %v648, %v2951
      %v3205 = vsel %vm3052, %v2652, %v2955
      %v3209 = vsel %vm3052, %v2653, %v2957
      %v3213 = vsel %vm3052, %v2654, %v2959
      %v3217 = vsel %vm3052, %v2655, %v2961
      %v3221 = vsel %vm3052, %v2656, %v2963
      %v3225 = vsel %vm3052, %v2657, %v2965
      %v3229 = vsel %vm3052, %v2658, %v2967
      %v3233 = vsel %vm3052, %v2659, %v2969
      %v3237 = vsel %vm3052, %v2660, %v2971
      %v3241 = vsel %vm3052, %v2661, %v2973
      %v3245 = vsel %vm3052, %v2662, %v2975
      %v3249 = vsel %vm3052, %v2663, %v2977
      %v3253 = vsel %vm3052, %v2664, %v2979
      %v3257 = vsel %vm3052, %v2665, %v2981
      %v3261 = vsel %vm3052, %v2666, %v2983
      %v3265 = vsel %vm3052, %v2667, %v2985
      %v3269 = vsel %vm3052, %v2668, %v2987
      %v3273 = vsel %vm3052, %v2669, %v2989
      %v3277 = vsel %vm3052, %v2670, %v2991
      %v3281 = vsel %vm3052, %v2671, %v2993
      %v3285 = vsel %vm3052, %v2672, %v2995
      %v3289 = vsel %vm3052, %v2673, %v2997
      %v3293 = vsel %vm3052, %v2674, %v2999
      %v3297 = vsel %vm3052, %v2675, %v3001
      %v3301 = vsel %vm3052, %v2676, %v3003
      %v3305 = vsel %vm3052, %v2677, %v3005
      %v3309 = vsel %vm3052, %v2678, %v3007
      %v3313 = vsel %vm3052, %v2679, %v3009
      %v3317 = vsel %vm3052, %v2680, %v3011
      %v3321 = vsel %vm3052, %v2681, %v3013
      %v3325 = vsel %vm3052, %v2682, %v3015
      %v3329 = vsel %vm3052, %v2683, %v3017
      %v3333 = vsel %vm3052, %v2684, %v3019
      %v3337 = vsel %vm3052, %v2685, %v3021
      %v3341 = vsel %vm3052, %v2686, %v3023
      %v3345 = vsel %vm3052, %v2687, %v3025
      %v3349 = vsel %vm3052, %v2688, %v3027
      %v3353 = vsel %vm3052, %v2689, %v3029
      %v3357 = vsel %vm3052, %v2690, %v3031
      %v3361 = vsel %vm3052, %v2691, %v3033
      %v3365 = vsel %vm3052, %v2692, %v3035
      %v3369 = vsel %vm3052, %v2693, %v3037
      %v3373 = vsel %vm3052, %v2694, %v3039
      %v3377 = vsel %vm3052, %v2695, %v3041
      %v3381 = vsel %vm3052, %v2696, %v3043
      %v3385 = vsel %vm3052, %v2697, %v3045
      %v3389 = vsel %vm3052, %v2698, %v3047
      %v3392 = vsel %vm3052, %v2703, %v3049
      %v3395 = vsel %vm3052, 0, %v3051
      %v3397 = vld [vmem:[%s2] sm:$0xff]
      %v3398 = vld [vmem:[%s2 + $0x8] sm:$0xff]
      %v3399 = vld [vmem:[%s2 + $0x10] sm:$0xff]
      %v3400 = vld [vmem:[%s2 + $0x18] sm:$0xff]
      %v3401 = vld [vmem:[%s2 + $0x20] sm:$0xff]
      %v3402 = vld [vmem:[%s2 + $0x28] sm:$0xff]
      %v3403 = vld [vmem:[%s2 + $0x30] sm:$0xff]
      %v3404 = vld [vmem:[%s2 + $0x38] sm:$0xff]
      %v3405 = vld [vmem:[%s2 + $0x40] sm:$0xff]
      %v3406 = vld [vmem:[%s2 + $0x48] sm:$0xff]
      %v3407 = vld [vmem:[%s2 + $0x50] sm:$0xff]
      %v3408 = vld [vmem:[%s2 + $0x58] sm:$0xff]
      %v3409 = vld [vmem:[%s2 + $0x60] sm:$0xff]
      %v3410 = vld [vmem:[%s2 + $0x68] sm:$0xff]
      %v3411 = vld [vmem:[%s2 + $0x70] sm:$0xff]
      %v3412 = vld [vmem:[%s2 + $0x78] sm:$0xff]
      %v3413 = vld [vmem:[%s2 + $0x80] sm:$0xff]
      %v3414 = vld [vmem:[%s2 + $0x88] sm:$0xff]
      %v3415 = vld [vmem:[%s2 + $0x90] sm:$0xff]
      %v3416 = vld [vmem:[%s2 + $0x98] sm:$0xff]
      %v3417 = vld [vmem:[%s2 + $0xa0] sm:$0xff]
      %v3418 = vld [vmem:[%s2 + $0xa8] sm:$0xff]
      %v3419 = vld [vmem:[%s2 + $0xb0] sm:$0xff]
      %v3420 = vld [vmem:[%s2 + $0xb8] sm:$0xff]
      %v3421 = vld [vmem:[%s2 + $0xc0] sm:$0xff]
      %v3422 = vld [vmem:[%s2 + $0xc8] sm:$0xff]
      %v3423 = vld [vmem:[%s2 + $0xd0] sm:$0xff]
      %v3424 = vld [vmem:[%s2 + $0xd8] sm:$0xff]
      %v3425 = vld [vmem:[%s2 + $0xe0] sm:$0xff]
      %v3426 = vld [vmem:[%s2 + $0xe8] sm:$0xff]
      %v3427 = vld [vmem:[%s2 + $0xf0] sm:$0xff]
      %v3428 = vld [vmem:[%s2 + $0xf8] sm:$0xff]
      %v3429 = vld [vmem:[%s3] sm:$0x3]
      %v3431 = vlaneseq
      %v3432 = vshrl.u32 %v3431, 7
      %v3433 = vsub.s32 0, %v3432
      %v3434 = vrot.slane %v3429, %v3433
      %v3435 = vlaneseq
      %v3436 = vshrl.u32 %v3435, 7
      %v3437 = vsub.s32 1, %v3436
      %v3438 = vrot.slane %v3429, %v3437
      %v3473 = vunpack.c.l.b16 %v3397
      %v3474 = vunpack.c.h.b16 %v3397
      %v3475 = vunpack.c.l.b16 %v3398
      %v3476 = vunpack.c.h.b16 %v3398
      %v3477 = vunpack.c.l.b16 %v3399
      %v3478 = vunpack.c.h.b16 %v3399
      %v3479 = vunpack.c.l.b16 %v3400
      %v3480 = vunpack.c.h.b16 %v3400
      %v3481 = vunpack.c.l.b16 %v3401
      %v3482 = vunpack.c.h.b16 %v3401
      %v3483 = vunpack.c.l.b16 %v3402
      %v3484 = vunpack.c.h.b16 %v3402
      %v3485 = vunpack.c.l.b16 %v3403
      %v3486 = vunpack.c.h.b16 %v3403
      %v3487 = vunpack.c.l.b16 %v3404
      %v3488 = vunpack.c.h.b16 %v3404
      %v3489 = vunpack.c.l.b16 %v3405
      %v3490 = vunpack.c.h.b16 %v3405
      %v3491 = vunpack.c.l.b16 %v3406
      %v3492 = vunpack.c.h.b16 %v3406
      %v3493 = vunpack.c.l.b16 %v3407
      %v3494 = vunpack.c.h.b16 %v3407
      %v3495 = vunpack.c.l.b16 %v3408
      %v3496 = vunpack.c.h.b16 %v3408
      %v3497 = vunpack.c.l.b16 %v3409
      %v3498 = vunpack.c.h.b16 %v3409
      %v3499 = vunpack.c.l.b16 %v3410
      %v3500 = vunpack.c.h.b16 %v3410
      %v3501 = vunpack.c.l.b16 %v3411
      %v3502 = vunpack.c.h.b16 %v3411
      %v3503 = vunpack.c.l.b16 %v3412
      %v3504 = vunpack.c.h.b16 %v3412
      %v3505 = vunpack.c.l.b16 %v3413
      %v3506 = vunpack.c.h.b16 %v3413
      %v3507 = vunpack.c.l.b16 %v3414
      %v3508 = vunpack.c.h.b16 %v3414
      %v3509 = vunpack.c.l.b16 %v3415
      %v3510 = vunpack.c.h.b16 %v3415
      %v3511 = vunpack.c.l.b16 %v3416
      %v3512 = vunpack.c.h.b16 %v3416
      %v3513 = vunpack.c.l.b16 %v3417
      %v3514 = vunpack.c.h.b16 %v3417
      %v3515 = vunpack.c.l.b16 %v3418
      %v3516 = vunpack.c.h.b16 %v3418
      %v3517 = vunpack.c.l.b16 %v3419
      %v3518 = vunpack.c.h.b16 %v3419
      %v3519 = vunpack.c.l.b16 %v3420
      %v3520 = vunpack.c.h.b16 %v3420
      %v3521 = vunpack.c.l.b16 %v3421
      %v3522 = vunpack.c.h.b16 %v3421
      %v3523 = vunpack.c.l.b16 %v3422
      %v3524 = vunpack.c.h.b16 %v3422
      %v3525 = vunpack.c.l.b16 %v3423
      %v3526 = vunpack.c.h.b16 %v3423
      %v3527 = vunpack.c.l.b16 %v3424
      %v3528 = vunpack.c.h.b16 %v3424
      %v3529 = vunpack.c.l.b16 %v3425
      %v3530 = vunpack.c.h.b16 %v3425
      %v3531 = vunpack.c.l.b16 %v3426
      %v3532 = vunpack.c.h.b16 %v3426
      %v3533 = vunpack.c.l.b16 %v3427
      %v3534 = vunpack.c.h.b16 %v3427
      %v3535 = vunpack.c.l.b16 %v3428
      %v3536 = vunpack.c.h.b16 %v3428
      %v3537 = vpack.c.b16 %v3475, %v3473
      %v3538 = vpack.c.b16 %v3476, %v3474
      %v3539 = vpack.c.b16 %v3479, %v3477
      %v3540 = vpack.c.b16 %v3480, %v3478
      %v3541 = vpack.c.b16 %v3483, %v3481
      %v3542 = vpack.c.b16 %v3484, %v3482
      %v3543 = vpack.c.b16 %v3487, %v3485
      %v3544 = vpack.c.b16 %v3488, %v3486
      %v3545 = vpack.c.b16 %v3491, %v3489
      %v3546 = vpack.c.b16 %v3492, %v3490
      %v3547 = vpack.c.b16 %v3495, %v3493
      %v3548 = vpack.c.b16 %v3496, %v3494
      %v3549 = vpack.c.b16 %v3499, %v3497
      %v3550 = vpack.c.b16 %v3500, %v3498
      %v3551 = vpack.c.b16 %v3503, %v3501
      %v3552 = vpack.c.b16 %v3504, %v3502
      %v3553 = vpack.c.b16 %v3507, %v3505
      %v3554 = vpack.c.b16 %v3508, %v3506
      %v3555 = vpack.c.b16 %v3511, %v3509
      %v3556 = vpack.c.b16 %v3512, %v3510
      %v3557 = vpack.c.b16 %v3515, %v3513
      %v3558 = vpack.c.b16 %v3516, %v3514
      %v3559 = vpack.c.b16 %v3519, %v3517
      %v3560 = vpack.c.b16 %v3520, %v3518
      %v3561 = vpack.c.b16 %v3523, %v3521
      %v3562 = vpack.c.b16 %v3524, %v3522
      %v3563 = vpack.c.b16 %v3527, %v3525
      %v3564 = vpack.c.b16 %v3528, %v3526
      %v3565 = vpack.c.b16 %v3531, %v3529
      %v3566 = vpack.c.b16 %v3532, %v3530
      %v3567 = vpack.c.b16 %v3535, %v3533
      %v3568 = vpack.c.b16 %v3536, %v3534
      %3601 = vmatprep.subr.bf16.mxu0 %v3538
      %3602 = vmatpush1.bf16.msra.mxu0 %v3537
      %3603 = vmatprep.subr.bf16.mxu0 %v3540
      %3604 = vmatpush1.bf16.msra.mxu0 %v3539
      %3605 = vmatprep.subr.bf16.mxu0 %v3542
      %3606 = vmatpush1.bf16.msra.mxu0 %v3541
      %3607 = vmatprep.subr.bf16.mxu0 %v3544
      %3608 = vmatpush1.bf16.msra.mxu0 %v3543
      %3609 = vmatprep.subr.bf16.mxu0 %v3546
      %3610 = vmatpush1.bf16.msra.mxu0 %v3545
      %3611 = vmatprep.subr.bf16.mxu0 %v3548
      %3612 = vmatpush1.bf16.msra.mxu0 %v3547
      %3613 = vmatprep.subr.bf16.mxu0 %v3550
      %3614 = vmatpush1.bf16.msra.mxu0 %v3549
      %3615 = vmatprep.subr.bf16.mxu0 %v3552
      %3616 = vmatpush1.bf16.msra.mxu0 %v3551
      %3617 = vmatprep.subr.bf16.mxu0 %v3554
      %3618 = vmatpush1.bf16.msra.mxu0 %v3553
      %3619 = vmatprep.subr.bf16.mxu0 %v3556
      %3620 = vmatpush1.bf16.msra.mxu0 %v3555
      %3621 = vmatprep.subr.bf16.mxu0 %v3558
      %3622 = vmatpush1.bf16.msra.mxu0 %v3557
      %3623 = vmatprep.subr.bf16.mxu0 %v3560
      %3624 = vmatpush1.bf16.msra.mxu0 %v3559
      %3625 = vmatprep.subr.bf16.mxu0 %v3562
      %3626 = vmatpush1.bf16.msra.mxu0 %v3561
      %3627 = vmatprep.subr.bf16.mxu0 %v3564
      %3628 = vmatpush1.bf16.msra.mxu0 %v3563
      %3629 = vmatprep.subr.bf16.mxu0 %v3566
      %3630 = vmatpush1.bf16.msra.mxu0 %v3565
      %3631 = vmatprep.subr.bf16.mxu0 %v3568
      %3632 = vmatpush1.bf16.msra.mxu0 %v3567
      %3633 = vmatprep.mubr.bf16.mxu0 %v3205
      %3634 = vmatmul.mubr.bf16.gmra.mrb[0].mxu0 %v3054
      %v3635 = vpop.f32.mrb[0].mxu0
      %v3636 = vadd.f32 %v3434, %v3635
      %v3637 = vpop.f32.mrb[0].mxu0
      %v3638 = vadd.f32 %v3438, %v3637
      %v3639 = vpop.f32.mrb[0].mxu0
      %v3640 = vadd.f32 %v3434, %v3639
      %v3641 = vpop.f32.mrb[0].mxu0
      %v3642 = vadd.f32 %v3438, %v3641
      %3643 = vmatprep.mubr.bf16.mxu0 %v3209
      %3644 = vmatmul.mubr.bf16.gmra.mrb[0].mxu0 %v3057
      %v3645 = vpop.f32.mrb[0].mxu0
      %v3646 = vadd.f32 %v3434, %v3645
      %v3647 = vpop.f32.mrb[0].mxu0
      %v3648 = vadd.f32 %v3438, %v3647
      %v3649 = vpop.f32.mrb[0].mxu0
      %v3650 = vadd.f32 %v3434, %v3649
      %v3651 = vpop.f32.mrb[0].mxu0
      %v3652 = vadd.f32 %v3438, %v3651
      %3653 = vmatprep.mubr.bf16.mxu0 %v3213
      %3654 = vmatmul.mubr.bf16.gmra.mrb[0].mxu0 %v3060
      %v3655 = vpop.f32.mrb[0].mxu0
      %v3656 = vadd.f32 %v3434, %v3655
      %v3657 = vpop.f32.mrb[0].mxu0
      %v3658 = vadd.f32 %v3438, %v3657
      %v3659 = vpop.f32.mrb[0].mxu0
      %v3660 = vadd.f32 %v3434, %v3659
      %v3661 = vpop.f32.mrb[0].mxu0
      %v3662 = vadd.f32 %v3438, %v3661
      %3663 = vmatprep.mubr.bf16.mxu0 %v3217
      %3664 = vmatmul.mubr.bf16.gmra.mrb[0].mxu0 %v3063
      %v3665 = vpop.f32.mrb[0].mxu0
      %v3666 = vadd.f32 %v3434, %v3665
      %v3667 = vpop.f32.mrb[0].mxu0
      %v3668 = vadd.f32 %v3438, %v3667
      %v3669 = vpop.f32.mrb[0].mxu0
      %v3670 = vadd.f32 %v3434, %v3669
      %v3671 = vpop.f32.mrb[0].mxu0
      %v3672 = vadd.f32 %v3438, %v3671
      %3673 = vmatprep.mubr.bf16.mxu0 %v3221
      %3674 = vmatmul.mubr.bf16.gmra.mrb[0].mxu0 %v3066
      %v3675 = vpop.f32.mrb[0].mxu0
      %v3676 = vadd.f32 %v3434, %v3675
      %v3677 = vpop.f32.mrb[0].mxu0
      %v3678 = vadd.f32 %v3438, %v3677
      %v3679 = vpop.f32.mrb[0].mxu0
      %v3680 = vadd.f32 %v3434, %v3679
      %v3681 = vpop.f32.mrb[0].mxu0
      %v3682 = vadd.f32 %v3438, %v3681
      %3683 = vmatprep.mubr.bf16.mxu0 %v3225
      %3684 = vmatmul.mubr.bf16.gmra.mrb[0].mxu0 %v3069
      %v3685 = vpop.f32.mrb[0].mxu0
      %v3686 = vadd.f32 %v3434, %v3685
      %v3687 = vpop.f32.mrb[0].mxu0
      %v3688 = vadd.f32 %v3438, %v3687
      %v3689 = vpop.f32.mrb[0].mxu0
      %v3690 = vadd.f32 %v3434, %v3689
      %v3691 = vpop.f32.mrb[0].mxu0
      %v3692 = vadd.f32 %v3438, %v3691
      %3693 = vmatprep.mubr.bf16.mxu0 %v3229
      %3694 = vmatmul.mubr.bf16.gmra.mrb[0].mxu0 %v3072
      %v3695 = vpop.f32.mrb[0].mxu0
      %v3696 = vadd.f32 %v3434, %v3695
      %v3697 = vpop.f32.mrb[0].mxu0
      %v3698 = vadd.f32 %v3438, %v3697
      %v3699 = vpop.f32.mrb[0].mxu0
      %v3700 = vadd.f32 %v3434, %v3699
      %v3701 = vpop.f32.mrb[0].mxu0
      %v3702 = vadd.f32 %v3438, %v3701
      %3703 = vmatprep.mubr.bf16.mxu0 %v3233
      %3704 = vmatmul.mubr.bf16.gmra.mrb[0].mxu0 %v3075
      %v3705 = vpop.f32.mrb[0].mxu0
      %v3706 = vadd.f32 %v3434, %v3705
      %v3707 = vpop.f32.mrb[0].mxu0
      %v3708 = vadd.f32 %v3438, %v3707
      %v3709 = vpop.f32.mrb[0].mxu0
      %v3710 = vadd.f32 %v3434, %v3709
      %v3711 = vpop.f32.mrb[0].mxu0
      %v3712 = vadd.f32 %v3438, %v3711
      %3713 = vmatprep.mubr.bf16.mxu0 %v3237
      %3714 = vmatmul.mubr.bf16.gmra.mrb[0].mxu0 %v3078
      %v3715 = vpop.f32.mrb[0].mxu0
      %v3716 = vadd.f32 %v3434, %v3715
      %v3717 = vpop.f32.mrb[0].mxu0
      %v3718 = vadd.f32 %v3438, %v3717
      %v3719 = vpop.f32.mrb[0].mxu0
      %v3720 = vadd.f32 %v3434, %v3719
      %v3721 = vpop.f32.mrb[0].mxu0
      %v3722 = vadd.f32 %v3438, %v3721
      %3723 = vmatprep.mubr.bf16.mxu0 %v3241
      %3724 = vmatmul.mubr.bf16.gmra.mrb[0].mxu0 %v3081
      %v3725 = vpop.f32.mrb[0].mxu0
      %v3726 = vadd.f32 %v3434, %v3725
      %v3727 = vpop.f32.mrb[0].mxu0
      %v3728 = vadd.f32 %v3438, %v3727
      %v3729 = vpop.f32.mrb[0].mxu0
      %v3730 = vadd.f32 %v3434, %v3729
      %v3731 = vpop.f32.mrb[0].mxu0
      %v3732 = vadd.f32 %v3438, %v3731
      %3733 = vmatprep.mubr.bf16.mxu0 %v3245
      %3734 = vmatmul.mubr.bf16.gmra.mrb[0].mxu0 %v3084
      %v3735 = vpop.f32.mrb[0].mxu0
      %v3736 = vadd.f32 %v3434, %v3735
      %v3737 = vpop.f32.mrb[0].mxu0
      %v3738 = vadd.f32 %v3438, %v3737
      %v3739 = vpop.f32.mrb[0].mxu0
      %v3740 = vadd.f32 %v3434, %v3739
      %v3741 = vpop.f32.mrb[0].mxu0
      %v3742 = vadd.f32 %v3438, %v3741
      %3743 = vmatprep.mubr.bf16.mxu0 %v3249
      %3744 = vmatmul.mubr.bf16.gmra.mrb[0].mxu0 %v3087
      %v3745 = vpop.f32.mrb[0].mxu0
      %v3746 = vadd.f32 %v3434, %v3745
      %v3747 = vpop.f32.mrb[0].mxu0
      %v3748 = vadd.f32 %v3438, %v3747
      %v3749 = vpop.f32.mrb[0].mxu0
      %v3750 = vadd.f32 %v3434, %v3749
      %v3751 = vpop.f32.mrb[0].mxu0
      %v3752 = vadd.f32 %v3438, %v3751
      %3753 = vmatprep.mubr.bf16.mxu0 %v3253
      %3754 = vmatmul.mubr.bf16.gmra.mrb[0].mxu0 %v3090
      %v3755 = vpop.f32.mrb[0].mxu0
      %v3756 = vadd.f32 %v3434, %v3755
      %v3757 = vpop.f32.mrb[0].mxu0
      %v3758 = vadd.f32 %v3438, %v3757
      %v3759 = vpop.f32.mrb[0].mxu0
      %v3760 = vadd.f32 %v3434, %v3759
      %v3761 = vpop.f32.mrb[0].mxu0
      %v3762 = vadd.f32 %v3438, %v3761
      %3763 = vmatprep.mubr.bf16.mxu0 %v3257
      %3764 = vmatmul.mubr.bf16.gmra.mrb[0].mxu0 %v3093
      %v3765 = vpop.f32.mrb[0].mxu0
      %v3766 = vadd.f32 %v3434, %v3765
      %v3767 = vpop.f32.mrb[0].mxu0
      %v3768 = vadd.f32 %v3438, %v3767
      %v3769 = vpop.f32.mrb[0].mxu0
      %v3770 = vadd.f32 %v3434, %v3769
      %v3771 = vpop.f32.mrb[0].mxu0
      %v3772 = vadd.f32 %v3438, %v3771
      %3773 = vmatprep.mubr.bf16.mxu0 %v3261
      %3774 = vmatmul.mubr.bf16.gmra.mrb[0].mxu0 %v3096
      %v3775 = vpop.f32.mrb[0].mxu0
      %v3776 = vadd.f32 %v3434, %v3775
      %v3777 = vpop.f32.mrb[0].mxu0
      %v3778 = vadd.f32 %v3438, %v3777
      %v3779 = vpop.f32.mrb[0].mxu0
      %v3780 = vadd.f32 %v3434, %v3779
      %v3781 = vpop.f32.mrb[0].mxu0
      %v3782 = vadd.f32 %v3438, %v3781
      %3783 = vmatprep.mubr.bf16.mxu0 %v3265
      %3784 = vmatmul.mubr.bf16.gmra.mrb[0].mxu0 %v3099
      %v3785 = vpop.f32.mrb[0].mxu0
      %v3786 = vadd.f32 %v3434, %v3785
      %v3787 = vpop.f32.mrb[0].mxu0
      %v3788 = vadd.f32 %v3438, %v3787
      %v3789 = vpop.f32.mrb[0].mxu0
      %v3790 = vadd.f32 %v3434, %v3789
      %v3791 = vpop.f32.mrb[0].mxu0
      %v3792 = vadd.f32 %v3438, %v3791
      %3793 = vmatprep.mubr.bf16.mxu0 %v3269
      %3794 = vmatmul.mubr.bf16.gmra.mrb[0].mxu0 %v3102
      %v3795 = vpop.f32.mrb[0].mxu0
      %v3796 = vadd.f32 %v3434, %v3795
      %v3797 = vpop.f32.mrb[0].mxu0
      %v3798 = vadd.f32 %v3438, %v3797
      %v3799 = vpop.f32.mrb[0].mxu0
      %v3800 = vadd.f32 %v3434, %v3799
      %v3801 = vpop.f32.mrb[0].mxu0
      %v3802 = vadd.f32 %v3438, %v3801
      %3803 = vmatprep.mubr.bf16.mxu0 %v3273
      %3804 = vmatmul.mubr.bf16.gmra.mrb[0].mxu0 %v3105
      %v3805 = vpop.f32.mrb[0].mxu0
      %v3806 = vadd.f32 %v3434, %v3805
      %v3807 = vpop.f32.mrb[0].mxu0
      %v3808 = vadd.f32 %v3438, %v3807
      %v3809 = vpop.f32.mrb[0].mxu0
      %v3810 = vadd.f32 %v3434, %v3809
      %v3811 = vpop.f32.mrb[0].mxu0
      %v3812 = vadd.f32 %v3438, %v3811
      %3813 = vmatprep.mubr.bf16.mxu0 %v3277
      %3814 = vmatmul.mubr.bf16.gmra.mrb[0].mxu0 %v3108
      %v3815 = vpop.f32.mrb[0].mxu0
      %v3816 = vadd.f32 %v3434, %v3815
      %v3817 = vpop.f32.mrb[0].mxu0
      %v3818 = vadd.f32 %v3438, %v3817
      %v3819 = vpop.f32.mrb[0].mxu0
      %v3820 = vadd.f32 %v3434, %v3819
      %v3821 = vpop.f32.mrb[0].mxu0
      %v3822 = vadd.f32 %v3438, %v3821
      %3823 = vmatprep.mubr.bf16.mxu0 %v3281
      %3824 = vmatmul.mubr.bf16.gmra.mrb[0].mxu0 %v3111
      %v3825 = vpop.f32.mrb[0].mxu0
      %v3826 = vadd.f32 %v3434, %v3825
      %v3827 = vpop.f32.mrb[0].mxu0
      %v3828 = vadd.f32 %v3438, %v3827
      %v3829 = vpop.f32.mrb[0].mxu0
      %v3830 = vadd.f32 %v3434, %v3829
      %v3831 = vpop.f32.mrb[0].mxu0
      %v3832 = vadd.f32 %v3438, %v3831
      %3833 = vmatprep.mubr.bf16.mxu0 %v3285
      %3834 = vmatmul.mubr.bf16.gmra.mrb[0].mxu0 %v3114
      %v3835 = vpop.f32.mrb[0].mxu0
      %v3836 = vadd.f32 %v3434, %v3835
      %v3837 = vpop.f32.mrb[0].mxu0
      %v3838 = vadd.f32 %v3438, %v3837
      %v3839 = vpop.f32.mrb[0].mxu0
      %v3840 = vadd.f32 %v3434, %v3839
      %v3841 = vpop.f32.mrb[0].mxu0
      %v3842 = vadd.f32 %v3438, %v3841
      %3843 = vmatprep.mubr.bf16.mxu0 %v3289
      %3844 = vmatmul.mubr.bf16.gmra.mrb[0].mxu0 %v3117
      %v3845 = vpop.f32.mrb[0].mxu0
      %v3846 = vadd.f32 %v3434, %v3845
      %v3847 = vpop.f32.mrb[0].mxu0
      %v3848 = vadd.f32 %v3438, %v3847
      %v3849 = vpop.f32.mrb[0].mxu0
      %v3850 = vadd.f32 %v3434, %v3849
      %v3851 = vpop.f32.mrb[0].mxu0
      %v3852 = vadd.f32 %v3438, %v3851
      %3853 = vmatprep.mubr.bf16.mxu0 %v3293
      %3854 = vmatmul.mubr.bf16.gmra.mrb[0].mxu0 %v3120
      %v3855 = vpop.f32.mrb[0].mxu0
      %v3856 = vadd.f32 %v3434, %v3855
      %v3857 = vpop.f32.mrb[0].mxu0
      %v3858 = vadd.f32 %v3438, %v3857
      %v3859 = vpop.f32.mrb[0].mxu0
      %v3860 = vadd.f32 %v3434, %v3859
      %v3861 = vpop.f32.mrb[0].mxu0
      %v3862 = vadd.f32 %v3438, %v3861
      %3863 = vmatprep.mubr.bf16.mxu0 %v3297
      %3864 = vmatmul.mubr.bf16.gmra.mrb[0].mxu0 %v3123
      %v3865 = vpop.f32.mrb[0].mxu0
      %v3866 = vadd.f32 %v3434, %v3865
      %v3867 = vpop.f32.mrb[0].mxu0
      %v3868 = vadd.f32 %v3438, %v3867
      %v3869 = vpop.f32.mrb[0].mxu0
      %v3870 = vadd.f32 %v3434, %v3869
      %v3871 = vpop.f32.mrb[0].mxu0
      %v3872 = vadd.f32 %v3438, %v3871
      %3873 = vmatprep.mubr.bf16.mxu0 %v3301
      %3874 = vmatmul.mubr.bf16.gmra.mrb[0].mxu0 %v3126
      %v3875 = vpop.f32.mrb[0].mxu0
      %v3876 = vadd.f32 %v3434, %v3875
      %v3877 = vpop.f32.mrb[0].mxu0
      %v3878 = vadd.f32 %v3438, %v3877
      %v3879 = vpop.f32.mrb[0].mxu0
      %v3880 = vadd.f32 %v3434, %v3879
      %v3881 = vpop.f32.mrb[0].mxu0
      %v3882 = vadd.f32 %v3438, %v3881
      %3883 = vmatprep.mubr.bf16.mxu0 %v3305
      %3884 = vmatmul.mubr.bf16.gmra.mrb[0].mxu0 %v3129
      %v3885 = vpop.f32.mrb[0].mxu0
      %v3886 = vadd.f32 %v3434, %v3885
      %v3887 = vpop.f32.mrb[0].mxu0
      %v3888 = vadd.f32 %v3438, %v3887
      %v3889 = vpop.f32.mrb[0].mxu0
      %v3890 = vadd.f32 %v3434, %v3889
      %v3891 = vpop.f32.mrb[0].mxu0
      %v3892 = vadd.f32 %v3438, %v3891
      %3893 = vmatprep.mubr.bf16.mxu0 %v3309
      %3894 = vmatmul.mubr.bf16.gmra.mrb[0].mxu0 %v3132
      %v3895 = vpop.f32.mrb[0].mxu0
      %v3896 = vadd.f32 %v3434, %v3895
      %v3897 = vpop.f32.mrb[0].mxu0
      %v3898 = vadd.f32 %v3438, %v3897
      %v3899 = vpop.f32.mrb[0].mxu0
      %v3900 = vadd.f32 %v3434, %v3899
      %v3901 = vpop.f32.mrb[0].mxu0
      %v3902 = vadd.f32 %v3438, %v3901
      %3903 = vmatprep.mubr.bf16.mxu0 %v3313
      %3904 = vmatmul.mubr.bf16.gmra.mrb[0].mxu0 %v3135
      %v3905 = vpop.f32.mrb[0].mxu0
      %v3906 = vadd.f32 %v3434, %v3905
      %v3907 = vpop.f32.mrb[0].mxu0
      %v3908 = vadd.f32 %v3438, %v3907
      %v3909 = vpop.f32.mrb[0].mxu0
      %v3910 = vadd.f32 %v3434, %v3909
      %v3911 = vpop.f32.mrb[0].mxu0
      %v3912 = vadd.f32 %v3438, %v3911
      %3913 = vmatprep.mubr.bf16.mxu0 %v3317
      %3914 = vmatmul.mubr.bf16.gmra.mrb[0].mxu0 %v3138
      %v3915 = vpop.f32.mrb[0].mxu0
      %v3916 = vadd.f32 %v3434, %v3915
      %v3917 = vpop.f32.mrb[0].mxu0
      %v3918 = vadd.f32 %v3438, %v3917
      %v3919 = vpop.f32.mrb[0].mxu0
      %v3920 = vadd.f32 %v3434, %v3919
      %v3921 = vpop.f32.mrb[0].mxu0
      %v3922 = vadd.f32 %v3438, %v3921
      %3923 = vmatprep.mubr.bf16.mxu0 %v3321
      %3924 = vmatmul.mubr.bf16.gmra.mrb[0].mxu0 %v3141
      %v3925 = vpop.f32.mrb[0].mxu0
      %v3926 = vadd.f32 %v3434, %v3925
      %v3927 = vpop.f32.mrb[0].mxu0
      %v3928 = vadd.f32 %v3438, %v3927
      %v3929 = vpop.f32.mrb[0].mxu0
      %v3930 = vadd.f32 %v3434, %v3929
      %v3931 = vpop.f32.mrb[0].mxu0
      %v3932 = vadd.f32 %v3438, %v3931
      %3933 = vmatprep.mubr.bf16.mxu0 %v3325
      %3934 = vmatmul.mubr.bf16.gmra.mrb[0].mxu0 %v3144
      %v3935 = vpop.f32.mrb[0].mxu0
      %v3936 = vadd.f32 %v3434, %v3935
      %v3937 = vpop.f32.mrb[0].mxu0
      %v3938 = vadd.f32 %v3438, %v3937
      %v3939 = vpop.f32.mrb[0].mxu0
      %v3940 = vadd.f32 %v3434, %v3939
      %v3941 = vpop.f32.mrb[0].mxu0
      %v3942 = vadd.f32 %v3438, %v3941
      %3943 = vmatprep.mubr.bf16.mxu0 %v3329
      %3944 = vmatmul.mubr.bf16.gmra.mrb[0].mxu0 %v3147
      %v3945 = vpop.f32.mrb[0].mxu0
      %v3946 = vadd.f32 %v3434, %v3945
      %v3947 = vpop.f32.mrb[0].mxu0
      %v3948 = vadd.f32 %v3438, %v3947
      %v3949 = vpop.f32.mrb[0].mxu0
      %v3950 = vadd.f32 %v3434, %v3949
      %v3951 = vpop.f32.mrb[0].mxu0
      %v3952 = vadd.f32 %v3438, %v3951
      %3953 = vmatprep.mubr.bf16.mxu0 %v3333
      %3954 = vmatmul.mubr.bf16.gmra.mrb[0].mxu0 %v3150
      %v3955 = vpop.f32.mrb[0].mxu0
      %v3956 = vadd.f32 %v3434, %v3955
      %v3957 = vpop.f32.mrb[0].mxu0
      %v3958 = vadd.f32 %v3438, %v3957
      %v3959 = vpop.f32.mrb[0].mxu0
      %v3960 = vadd.f32 %v3434, %v3959
      %v3961 = vpop.f32.mrb[0].mxu0
      %v3962 = vadd.f32 %v3438, %v3961
      %3963 = vmatprep.mubr.bf16.mxu0 %v3337
      %3964 = vmatmul.mubr.bf16.gmra.mrb[0].mxu0 %v3153
      %v3965 = vpop.f32.mrb[0].mxu0
      %v3966 = vadd.f32 %v3434, %v3965
      %v3967 = vpop.f32.mrb[0].mxu0
      %v3968 = vadd.f32 %v3438, %v3967
      %v3969 = vpop.f32.mrb[0].mxu0
      %v3970 = vadd.f32 %v3434, %v3969
      %v3971 = vpop.f32.mrb[0].mxu0
      %v3972 = vadd.f32 %v3438, %v3971
      %3973 = vmatprep.mubr.bf16.mxu0 %v3341
      %3974 = vmatmul.mubr.bf16.gmra.mrb[0].mxu0 %v3156
      %v3975 = vpop.f32.mrb[0].mxu0
      %v3976 = vadd.f32 %v3434, %v3975
      %v3977 = vpop.f32.mrb[0].mxu0
      %v3978 = vadd.f32 %v3438, %v3977
      %v3979 = vpop.f32.mrb[0].mxu0
      %v3980 = vadd.f32 %v3434, %v3979
      %v3981 = vpop.f32.mrb[0].mxu0
      %v3982 = vadd.f32 %v3438, %v3981
      %3983 = vmatprep.mubr.bf16.mxu0 %v3345
      %3984 = vmatmul.mubr.bf16.gmra.mrb[0].mxu0 %v3159
      %v3985 = vpop.f32.mrb[0].mxu0
      %v3986 = vadd.f32 %v3434, %v3985
      %v3987 = vpop.f32.mrb[0].mxu0
      %v3988 = vadd.f32 %v3438, %v3987
      %v3989 = vpop.f32.mrb[0].mxu0
      %v3990 = vadd.f32 %v3434, %v3989
      %v3991 = vpop.f32.mrb[0].mxu0
      %v3992 = vadd.f32 %v3438, %v3991
      %3993 = vmatprep.mubr.bf16.mxu0 %v3349
      %3994 = vmatmul.mubr.bf16.gmra.mrb[0].mxu0 %v3162
      %v3995 = vpop.f32.mrb[0].mxu0
      %v3996 = vadd.f32 %v3434, %v3995
      %v3997 = vpop.f32.mrb[0].mxu0
      %v3998 = vadd.f32 %v3438, %v3997
      %v3999 = vpop.f32.mrb[0].mxu0
      %v4000 = vadd.f32 %v3434, %v3999
      %v4001 = vpop.f32.mrb[0].mxu0
      %v4002 = vadd.f32 %v3438, %v4001
      %4003 = vmatprep.mubr.bf16.mxu0 %v3353
      %4004 = vmatmul.mubr.bf16.gmra.mrb[0].mxu0 %v3165
      %v4005 = vpop.f32.mrb[0].mxu0
      %v4006 = vadd.f32 %v3434, %v4005
      %v4007 = vpop.f32.mrb[0].mxu0
      %v4008 = vadd.f32 %v3438, %v4007
      %v4009 = vpop.f32.mrb[0].mxu0
      %v4010 = vadd.f32 %v3434, %v4009
      %v4011 = vpop.f32.mrb[0].mxu0
      %v4012 = vadd.f32 %v3438, %v4011
      %4013 = vmatprep.mubr.bf16.mxu0 %v3357
      %4014 = vmatmul.mubr.bf16.gmra.mrb[0].mxu0 %v3168
      %v4015 = vpop.f32.mrb[0].mxu0
      %v4016 = vadd.f32 %v3434, %v4015
      %v4017 = vpop.f32.mrb[0].mxu0
      %v4018 = vadd.f32 %v3438, %v4017
      %v4019 = vpop.f32.mrb[0].mxu0
      %v4020 = vadd.f32 %v3434, %v4019
      %v4021 = vpop.f32.mrb[0].mxu0
      %v4022 = vadd.f32 %v3438, %v4021
      %4023 = vmatprep.mubr.bf16.mxu0 %v3361
      %4024 = vmatmul.mubr.bf16.gmra.mrb[0].mxu0 %v3171
      %v4025 = vpop.f32.mrb[0].mxu0
      %v4026 = vadd.f32 %v3434, %v4025
      %v4027 = vpop.f32.mrb[0].mxu0
      %v4028 = vadd.f32 %v3438, %v4027
      %v4029 = vpop.f32.mrb[0].mxu0
      %v4030 = vadd.f32 %v3434, %v4029
      %v4031 = vpop.f32.mrb[0].mxu0
      %v4032 = vadd.f32 %v3438, %v4031
      %4033 = vmatprep.mubr.bf16.mxu0 %v3365
      %4034 = vmatmul.mubr.bf16.gmra.mrb[0].mxu0 %v3174
      %v4035 = vpop.f32.mrb[0].mxu0
      %v4036 = vadd.f32 %v3434, %v4035
      %v4037 = vpop.f32.mrb[0].mxu0
      %v4038 = vadd.f32 %v3438, %v4037
      %v4039 = vpop.f32.mrb[0].mxu0
      %v4040 = vadd.f32 %v3434, %v4039
      %v4041 = vpop.f32.mrb[0].mxu0
      %v4042 = vadd.f32 %v3438, %v4041
      %4043 = vmatprep.mubr.bf16.mxu0 %v3369
      %4044 = vmatmul.mubr.bf16.gmra.mrb[0].mxu0 %v3177
      %v4045 = vpop.f32.mrb[0].mxu0
      %v4046 = vadd.f32 %v3434, %v4045
      %v4047 = vpop.f32.mrb[0].mxu0
      %v4048 = vadd.f32 %v3438, %v4047
      %v4049 = vpop.f32.mrb[0].mxu0
      %v4050 = vadd.f32 %v3434, %v4049
      %v4051 = vpop.f32.mrb[0].mxu0
      %v4052 = vadd.f32 %v3438, %v4051
      %4053 = vmatprep.mubr.bf16.mxu0 %v3373
      %4054 = vmatmul.mubr.bf16.gmra.mrb[0].mxu0 %v3180
      %v4055 = vpop.f32.mrb[0].mxu0
      %v4056 = vadd.f32 %v3434, %v4055
      %v4057 = vpop.f32.mrb[0].mxu0
      %v4058 = vadd.f32 %v3438, %v4057
      %v4059 = vpop.f32.mrb[0].mxu0
      %v4060 = vadd.f32 %v3434, %v4059
      %v4061 = vpop.f32.mrb[0].mxu0
      %v4062 = vadd.f32 %v3438, %v4061
      %4063 = vmatprep.mubr.bf16.mxu0 %v3377
      %4064 = vmatmul.mubr.bf16.gmra.mrb[0].mxu0 %v3183
      %v4065 = vpop.f32.mrb[0].mxu0
      %v4066 = vadd.f32 %v3434, %v4065
      %v4067 = vpop.f32.mrb[0].mxu0
      %v4068 = vadd.f32 %v3438, %v4067
      %v4069 = vpop.f32.mrb[0].mxu0
      %v4070 = vadd.f32 %v3434, %v4069
      %v4071 = vpop.f32.mrb[0].mxu0
      %v4072 = vadd.f32 %v3438, %v4071
      %4073 = vmatprep.mubr.bf16.mxu0 %v3381
      %4074 = vmatmul.mubr.bf16.gmra.mrb[0].mxu0 %v3186
      %v4075 = vpop.f32.mrb[0].mxu0
      %v4076 = vadd.f32 %v3434, %v4075
      %v4077 = vpop.f32.mrb[0].mxu0
      %v4078 = vadd.f32 %v3438, %v4077
      %v4079 = vpop.f32.mrb[0].mxu0
      %v4080 = vadd.f32 %v3434, %v4079
      %v4081 = vpop.f32.mrb[0].mxu0
      %v4082 = vadd.f32 %v3438, %v4081
      %4083 = vmatprep.mubr.bf16.mxu0 %v3385
      %4084 = vmatmul.mubr.bf16.gmra.mrb[0].mxu0 %v3189
      %v4085 = vpop.f32.mrb[0].mxu0
      %v4086 = vadd.f32 %v3434, %v4085
      %v4087 = vpop.f32.mrb[0].mxu0
      %v4088 = vadd.f32 %v3438, %v4087
      %v4089 = vpop.f32.mrb[0].mxu0
      %v4090 = vadd.f32 %v3434, %v4089
      %v4091 = vpop.f32.mrb[0].mxu0
      %v4092 = vadd.f32 %v3438, %v4091
      %4093 = vmatprep.mubr.bf16.mxu0 %v3389
      %4094 = vmatmul.mubr.bf16.gmra.mrb[0].mxu0 %v3192
      %v4095 = vpop.f32.mrb[0].mxu0
      %v4096 = vadd.f32 %v3434, %v4095
      %v4097 = vpop.f32.mrb[0].mxu0
      %v4098 = vadd.f32 %v3438, %v4097
      %v4099 = vpop.f32.mrb[0].mxu0
      %v4100 = vadd.f32 %v3434, %v4099
      %v4101 = vpop.f32.mrb[0].mxu0
      %v4102 = vadd.f32 %v3438, %v4101
      %4103 = vmatprep.mubr.bf16.mxu0 %v3392
      %4104 = vmatmul.mubr.bf16.gmra.mrb[0].mxu0 %v3195
      %v4105 = vpop.f32.mrb[0].mxu0
      %v4106 = vadd.f32 %v3434, %v4105
      %v4107 = vpop.f32.mrb[0].mxu0
      %v4108 = vadd.f32 %v3438, %v4107
      %v4109 = vpop.f32.mrb[0].mxu0
      %v4110 = vadd.f32 %v3434, %v4109
      %v4111 = vpop.f32.mrb[0].mxu0
      %v4112 = vadd.f32 %v3438, %v4111
      %4113 = vmatprep.mubr.bf16.mxu0 %v3395
      %4114 = vmatmul.mubr.bf16.gmra.mrb[0].mxu0 %v3198
      %v4115 = vpop.f32.mrb[0].mxu0
      %v4116 = vadd.f32 %v3434, %v4115
      %v4117 = vpop.f32.mrb[0].mxu0
      %v4118 = vadd.f32 %v3438, %v4117
      %v4119 = vpop.f32.mrb[0].mxu0
      %v4120 = vadd.f32 %v3434, %v4119
      %v4121 = vpop.f32.mrb[0].mxu0
      %v4122 = vadd.f32 %v3438, %v4121
      %4123 = vmatprep.mubr.bf16.mxu0 %v3395
      %4124 = vmatmul.mubr.bf16.gmra.mrb[0].mxu0 %v3201
      %v4125 = vpop.f32.mrb[0].mxu0
      %v4126 = vadd.f32 %v3434, %v4125
      %v4127 = vpop.f32.mrb[0].mxu0
      %v4128 = vadd.f32 %v3438, %v4127
      %v4129 = vpop.f32.mrb[0].mxu0
      %v4130 = vadd.f32 %v3434, %v4129
      %v4131 = vpop.f32.mrb[0].mxu0
      %v4132 = vadd.f32 %v3438, %v4131
      %4133 = vdwg.mxu0
      %v4134 = vmax.f32 %v3636, 0.0
      %v4135 = vmax.f32 %v3638, 0.0
      %v4136 = vmax.f32 %v3640, 0.0
      %v4137 = vmax.f32 %v3642, 0.0
      %v4138 = vmax.f32 %v3646, 0.0
      %v4139 = vmax.f32 %v3648, 0.0
      %v4140 = vmax.f32 %v3650, 0.0
      %v4141 = vmax.f32 %v3652, 0.0
      %v4142 = vmax.f32 %v3656, 0.0
      %v4143 = vmax.f32 %v3658, 0.0
      %v4144 = vmax.f32 %v3660, 0.0
      %v4145 = vmax.f32 %v3662, 0.0
      %v4146 = vmax.f32 %v3666, 0.0
      %v4147 = vmax.f32 %v3668, 0.0
      %v4148 = vmax.f32 %v3670, 0.0
      %v4149 = vmax.f32 %v3672, 0.0
      %v4150 = vmax.f32 %v3676, 0.0
      %v4151 = vmax.f32 %v3678, 0.0
      %v4152 = vmax.f32 %v3680, 0.0
      %v4153 = vmax.f32 %v3682, 0.0
      %v4154 = vmax.f32 %v3686, 0.0
      %v4155 = vmax.f32 %v3688, 0.0
      %v4156 = vmax.f32 %v3690, 0.0
      %v4157 = vmax.f32 %v3692, 0.0
      %v4158 = vmax.f32 %v3696, 0.0
      %v4159 = vmax.f32 %v3698, 0.0
      %v4160 = vmax.f32 %v3700, 0.0
      %v4161 = vmax.f32 %v3702, 0.0
      %v4162 = vmax.f32 %v3706, 0.0
      %v4163 = vmax.f32 %v3708, 0.0
      %v4164 = vmax.f32 %v3710, 0.0
      %v4165 = vmax.f32 %v3712, 0.0
      %v4166 = vmax.f32 %v3716, 0.0
      %v4167 = vmax.f32 %v3718, 0.0
      %v4168 = vmax.f32 %v3720, 0.0
      %v4169 = vmax.f32 %v3722, 0.0
      %v4170 = vmax.f32 %v3726, 0.0
      %v4171 = vmax.f32 %v3728, 0.0
      %v4172 = vmax.f32 %v3730, 0.0
      %v4173 = vmax.f32 %v3732, 0.0
      %v4174 = vmax.f32 %v3736, 0.0
      %v4175 = vmax.f32 %v3738, 0.0
      %v4176 = vmax.f32 %v3740, 0.0
      %v4177 = vmax.f32 %v3742, 0.0
      %v4178 = vmax.f32 %v3746, 0.0
      %v4179 = vmax.f32 %v3748, 0.0
      %v4180 = vmax.f32 %v3750, 0.0
      %v4181 = vmax.f32 %v3752, 0.0
      %v4182 = vmax.f32 %v3756, 0.0
      %v4183 = vmax.f32 %v3758, 0.0
      %v4184 = vmax.f32 %v3760, 0.0
      %v4185 = vmax.f32 %v3762, 0.0
      %v4186 = vmax.f32 %v3766, 0.0
      %v4187 = vmax.f32 %v3768, 0.0
      %v4188 = vmax.f32 %v3770, 0.0
      %v4189 = vmax.f32 %v3772, 0.0
      %v4190 = vmax.f32 %v3776, 0.0
      %v4191 = vmax.f32 %v3778, 0.0
      %v4192 = vmax.f32 %v3780, 0.0
      %v4193 = vmax.f32 %v3782, 0.0
      %v4194 = vmax.f32 %v3786, 0.0
      %v4195 = vmax.f32 %v3788, 0.0
      %v4196 = vmax.f32 %v3790, 0.0
      %v4197 = vmax.f32 %v3792, 0.0
      %v4198 = vmax.f32 %v3796, 0.0
      %v4199 = vmax.f32 %v3798, 0.0
      %v4200 = vmax.f32 %v3800, 0.0
      %v4201 = vmax.f32 %v3802, 0.0
      %v4202 = vmax.f32 %v3806, 0.0
      %v4203 = vmax.f32 %v3808, 0.0
      %v4204 = vmax.f32 %v3810, 0.0
      %v4205 = vmax.f32 %v3812, 0.0
      %v4206 = vmax.f32 %v3816, 0.0
      %v4207 = vmax.f32 %v3818, 0.0
      %v4208 = vmax.f32 %v3820, 0.0
      %v4209 = vmax.f32 %v3822, 0.0
      %v4210 = vmax.f32 %v3826, 0.0
      %v4211 = vmax.f32 %v3828, 0.0
      %v4212 = vmax.f32 %v3830, 0.0
      %v4213 = vmax.f32 %v3832, 0.0
      %v4214 = vmax.f32 %v3836, 0.0
      %v4215 = vmax.f32 %v3838, 0.0
      %v4216 = vmax.f32 %v3840, 0.0
      %v4217 = vmax.f32 %v3842, 0.0
      %v4218 = vmax.f32 %v3846, 0.0
      %v4219 = vmax.f32 %v3848, 0.0
      %v4220 = vmax.f32 %v3850, 0.0
      %v4221 = vmax.f32 %v3852, 0.0
      %v4222 = vmax.f32 %v3856, 0.0
      %v4223 = vmax.f32 %v3858, 0.0
      %v4224 = vmax.f32 %v3860, 0.0
      %v4225 = vmax.f32 %v3862, 0.0
      %v4226 = vmax.f32 %v3866, 0.0
      %v4227 = vmax.f32 %v3868, 0.0
      %v4228 = vmax.f32 %v3870, 0.0
      %v4229 = vmax.f32 %v3872, 0.0
      %v4230 = vmax.f32 %v3876, 0.0
      %v4231 = vmax.f32 %v3878, 0.0
      %v4232 = vmax.f32 %v3880, 0.0
      %v4233 = vmax.f32 %v3882, 0.0
      %v4234 = vmax.f32 %v3886, 0.0
      %v4235 = vmax.f32 %v3888, 0.0
      %v4236 = vmax.f32 %v3890, 0.0
      %v4237 = vmax.f32 %v3892, 0.0
      %v4238 = vmax.f32 %v3896, 0.0
      %v4239 = vmax.f32 %v3898, 0.0
      %v4240 = vmax.f32 %v3900, 0.0
      %v4241 = vmax.f32 %v3902, 0.0
      %v4242 = vmax.f32 %v3906, 0.0
      %v4243 = vmax.f32 %v3908, 0.0
      %v4244 = vmax.f32 %v3910, 0.0
      %v4245 = vmax.f32 %v3912, 0.0
      %v4246 = vmax.f32 %v3916, 0.0
      %v4247 = vmax.f32 %v3918, 0.0
      %v4248 = vmax.f32 %v3920, 0.0
      %v4249 = vmax.f32 %v3922, 0.0
      %v4250 = vmax.f32 %v3926, 0.0
      %v4251 = vmax.f32 %v3928, 0.0
      %v4252 = vmax.f32 %v3930, 0.0
      %v4253 = vmax.f32 %v3932, 0.0
      %v4254 = vmax.f32 %v3936, 0.0
      %v4255 = vmax.f32 %v3938, 0.0
      %v4256 = vmax.f32 %v3940, 0.0
      %v4257 = vmax.f32 %v3942, 0.0
      %v4258 = vmax.f32 %v3946, 0.0
      %v4259 = vmax.f32 %v3948, 0.0
      %v4260 = vmax.f32 %v3950, 0.0
      %v4261 = vmax.f32 %v3952, 0.0
      %v4262 = vmax.f32 %v3956, 0.0
      %v4263 = vmax.f32 %v3958, 0.0
      %v4264 = vmax.f32 %v3960, 0.0
      %v4265 = vmax.f32 %v3962, 0.0
      %v4266 = vmax.f32 %v3966, 0.0
      %v4267 = vmax.f32 %v3968, 0.0
      %v4268 = vmax.f32 %v3970, 0.0
      %v4269 = vmax.f32 %v3972, 0.0
      %v4270 = vmax.f32 %v3976, 0.0
      %v4271 = vmax.f32 %v3978, 0.0
      %v4272 = vmax.f32 %v3980, 0.0
      %v4273 = vmax.f32 %v3982, 0.0
      %v4274 = vmax.f32 %v3986, 0.0
      %v4275 = vmax.f32 %v3988, 0.0
      %v4276 = vmax.f32 %v3990, 0.0
      %v4277 = vmax.f32 %v3992, 0.0
      %v4278 = vmax.f32 %v3996, 0.0
      %v4279 = vmax.f32 %v3998, 0.0
      %v4280 = vmax.f32 %v4000, 0.0
      %v4281 = vmax.f32 %v4002, 0.0
      %v4282 = vmax.f32 %v4006, 0.0
      %v4283 = vmax.f32 %v4008, 0.0
      %v4284 = vmax.f32 %v4010, 0.0
      %v4285 = vmax.f32 %v4012, 0.0
      %v4286 = vmax.f32 %v4016, 0.0
      %v4287 = vmax.f32 %v4018, 0.0
      %v4288 = vmax.f32 %v4020, 0.0
      %v4289 = vmax.f32 %v4022, 0.0
      %v4290 = vmax.f32 %v4026, 0.0
      %v4291 = vmax.f32 %v4028, 0.0
      %v4292 = vmax.f32 %v4030, 0.0
      %v4293 = vmax.f32 %v4032, 0.0
      %v4294 = vmax.f32 %v4036, 0.0
      %v4295 = vmax.f32 %v4038, 0.0
      %v4296 = vmax.f32 %v4040, 0.0
      %v4297 = vmax.f32 %v4042, 0.0
      %v4298 = vmax.f32 %v4046, 0.0
      %v4299 = vmax.f32 %v4048, 0.0
      %v4300 = vmax.f32 %v4050, 0.0
      %v4301 = vmax.f32 %v4052, 0.0
      %v4302 = vmax.f32 %v4056, 0.0
      %v4303 = vmax.f32 %v4058, 0.0
      %v4304 = vmax.f32 %v4060, 0.0
      %v4305 = vmax.f32 %v4062, 0.0
      %v4306 = vmax.f32 %v4066, 0.0
      %v4307 = vmax.f32 %v4068, 0.0
      %v4308 = vmax.f32 %v4070, 0.0
      %v4309 = vmax.f32 %v4072, 0.0
      %v4310 = vmax.f32 %v4076, 0.0
      %v4311 = vmax.f32 %v4078, 0.0
      %v4312 = vmax.f32 %v4080, 0.0
      %v4313 = vmax.f32 %v4082, 0.0
      %v4314 = vmax.f32 %v4086, 0.0
      %v4315 = vmax.f32 %v4088, 0.0
      %v4316 = vmax.f32 %v4090, 0.0
      %v4317 = vmax.f32 %v4092, 0.0
      %v4318 = vmax.f32 %v4096, 0.0
      %v4319 = vmax.f32 %v4098, 0.0
      %v4320 = vmax.f32 %v4100, 0.0
      %v4321 = vmax.f32 %v4102, 0.0
      %v4322 = vmax.f32 %v4106, 0.0
      %v4323 = vmax.f32 %v4108, 0.0
      %v4324 = vmax.f32 %v4110, 0.0
      %v4325 = vmax.f32 %v4112, 0.0
      %v4326 = vmax.f32 %v4116, 0.0
      %v4327 = vmax.f32 %v4118, 0.0
      %v4328 = vmax.f32 %v4120, 0.0
      %v4329 = vmax.f32 %v4122, 0.0
      %v4330 = vmax.f32 %v4126, 0.0
      %v4331 = vmax.f32 %v4128, 0.0
      %v4332 = vmax.f32 %v4130, 0.0
      %v4333 = vmax.f32 %v4132, 0.0
      %4334 = vst [vmem:[%s197] sm:$0xff] %v4134
      %4335 = vst [vmem:[%s197 + $0x8] sm:$0xff] %v4136
      %4336 = vst [vmem:[%s197 + $0x10] sm:$0xff] %v4138
      %4337 = vst [vmem:[%s197 + $0x18] sm:$0xff] %v4140
      %4338 = vst [vmem:[%s197 + $0x20] sm:$0xff] %v4142
      %4339 = vst [vmem:[%s197 + $0x28] sm:$0xff] %v4144
      %4340 = vst [vmem:[%s197 + $0x30] sm:$0xff] %v4146
      %4341 = vst [vmem:[%s197 + $0x38] sm:$0xff] %v4148
      %4342 = vst [vmem:[%s197 + $0x40] sm:$0xff] %v4150
      %4343 = vst [vmem:[%s197 + $0x48] sm:$0xff] %v4152
      %4344 = vst [vmem:[%s197 + $0x50] sm:$0xff] %v4154
      %4345 = vst [vmem:[%s197 + $0x58] sm:$0xff] %v4156
      %4346 = vst [vmem:[%s197 + $0x60] sm:$0xff] %v4158
      %4347 = vst [vmem:[%s197 + $0x68] sm:$0xff] %v4160
      %4348 = vst [vmem:[%s197 + $0x70] sm:$0xff] %v4162
      %4349 = vst [vmem:[%s197 + $0x78] sm:$0xff] %v4164
      %4350 = vst [vmem:[%s197 + $0x80] sm:$0xff] %v4166
      %4351 = vst [vmem:[%s197 + $0x88] sm:$0xff] %v4168
      %4352 = vst [vmem:[%s197 + $0x90] sm:$0xff] %v4170
      %4353 = vst [vmem:[%s197 + $0x98] sm:$0xff] %v4172
      %4354 = vst [vmem:[%s197 + $0xa0] sm:$0xff] %v4174
      %4355 = vst [vmem:[%s197 + $0xa8] sm:$0xff] %v4176
      %4356 = vst [vmem:[%s197 + $0xb0] sm:$0xff] %v4178
      %4357 = vst [vmem:[%s197 + $0xb8] sm:$0xff] %v4180
      %4358 = vst [vmem:[%s197 + $0xc0] sm:$0xff] %v4182
      %4359 = vst [vmem:[%s197 + $0xc8] sm:$0xff] %v4184
      %4360 = vst [vmem:[%s197 + $0xd0] sm:$0xff] %v4186
      %4361 = vst [vmem:[%s197 + $0xd8] sm:$0xff] %v4188
      %4362 = vst [vmem:[%s197 + $0xe0] sm:$0xff] %v4190
      %4363 = vst [vmem:[%s197 + $0xe8] sm:$0xff] %v4192
      %4364 = vst [vmem:[%s197 + $0xf0] sm:$0xff] %v4194
      %4365 = vst [vmem:[%s197 + $0xf8] sm:$0xff] %v4196
      %4366 = vst [vmem:[%s197 + $0x100] sm:$0xff] %v4198
      %4367 = vst [vmem:[%s197 + $0x108] sm:$0xff] %v4200
      %4368 = vst [vmem:[%s197 + $0x110] sm:$0xff] %v4202
      %4369 = vst [vmem:[%s197 + $0x118] sm:$0xff] %v4204
      %4370 = vst [vmem:[%s197 + $0x120] sm:$0xff] %v4206
      %4371 = vst [vmem:[%s197 + $0x128] sm:$0xff] %v4208
      %4372 = vst [vmem:[%s197 + $0x130] sm:$0xff] %v4210
      %4373 = vst [vmem:[%s197 + $0x138] sm:$0xff] %v4212
      %4374 = vst [vmem:[%s197 + $0x140] sm:$0xff] %v4214
      %4375 = vst [vmem:[%s197 + $0x148] sm:$0xff] %v4216
      %4376 = vst [vmem:[%s197 + $0x150] sm:$0xff] %v4218
      %4377 = vst [vmem:[%s197 + $0x158] sm:$0xff] %v4220
      %4378 = vst [vmem:[%s197 + $0x160] sm:$0xff] %v4222
      %4379 = vst [vmem:[%s197 + $0x168] sm:$0xff] %v4224
      %4380 = vst [vmem:[%s197 + $0x170] sm:$0xff] %v4226
      %4381 = vst [vmem:[%s197 + $0x178] sm:$0xff] %v4228
      %4382 = vst [vmem:[%s197 + $0x180] sm:$0xff] %v4230
      %4383 = vst [vmem:[%s197 + $0x188] sm:$0xff] %v4232
      %4384 = vst [vmem:[%s197 + $0x190] sm:$0xff] %v4234
      %4385 = vst [vmem:[%s197 + $0x198] sm:$0xff] %v4236
      %4386 = vst [vmem:[%s197 + $0x1a0] sm:$0xff] %v4238
      %4387 = vst [vmem:[%s197 + $0x1a8] sm:$0xff] %v4240
      %4388 = vst [vmem:[%s197 + $0x1b0] sm:$0xff] %v4242
      %4389 = vst [vmem:[%s197 + $0x1b8] sm:$0xff] %v4244
      %4390 = vst [vmem:[%s197 + $0x1c0] sm:$0xff] %v4246
      %4391 = vst [vmem:[%s197 + $0x1c8] sm:$0xff] %v4248
      %4392 = vst [vmem:[%s197 + $0x1d0] sm:$0xff] %v4250
      %4393 = vst [vmem:[%s197 + $0x1d8] sm:$0xff] %v4252
      %4394 = vst [vmem:[%s197 + $0x1e0] sm:$0xff] %v4254
      %4395 = vst [vmem:[%s197 + $0x1e8] sm:$0xff] %v4256
      %4396 = vst [vmem:[%s197 + $0x1f0] sm:$0xff] %v4258
      %4397 = vst [vmem:[%s197 + $0x1f8] sm:$0xff] %v4260
      %4398 = vst [vmem:[%s197 + $0x200] sm:$0xff] %v4262
      %4399 = vst [vmem:[%s197 + $0x208] sm:$0xff] %v4264
      %4400 = vst [vmem:[%s197 + $0x210] sm:$0xff] %v4266
      %4401 = vst [vmem:[%s197 + $0x218] sm:$0xff] %v4268
      %4402 = vst [vmem:[%s197 + $0x220] sm:$0xff] %v4270
      %4403 = vst [vmem:[%s197 + $0x228] sm:$0xff] %v4272
      %4404 = vst [vmem:[%s197 + $0x230] sm:$0xff] %v4274
      %4405 = vst [vmem:[%s197 + $0x238] sm:$0xff] %v4276
      %4406 = vst [vmem:[%s197 + $0x240] sm:$0xff] %v4278
      %4407 = vst [vmem:[%s197 + $0x248] sm:$0xff] %v4280
      %4408 = vst [vmem:[%s197 + $0x250] sm:$0xff] %v4282
      %4409 = vst [vmem:[%s197 + $0x258] sm:$0xff] %v4284
      %4410 = vst [vmem:[%s197 + $0x260] sm:$0xff] %v4286
      %4411 = vst [vmem:[%s197 + $0x268] sm:$0xff] %v4288
      %4412 = vst [vmem:[%s197 + $0x270] sm:$0xff] %v4290
      %4413 = vst [vmem:[%s197 + $0x278] sm:$0xff] %v4292
      %4414 = vst [vmem:[%s197 + $0x280] sm:$0xff] %v4294
      %4415 = vst [vmem:[%s197 + $0x288] sm:$0xff] %v4296
      %4416 = vst [vmem:[%s197 + $0x290] sm:$0xff] %v4298
      %4417 = vst [vmem:[%s197 + $0x298] sm:$0xff] %v4300
      %4418 = vst [vmem:[%s197 + $0x2a0] sm:$0xff] %v4302
      %4419 = vst [vmem:[%s197 + $0x2a8] sm:$0xff] %v4304
      %4420 = vst [vmem:[%s197 + $0x2b0] sm:$0xff] %v4306
      %4421 = vst [vmem:[%s197 + $0x2b8] sm:$0xff] %v4308
      %4422 = vst [vmem:[%s197 + $0x2c0] sm:$0xff] %v4310
      %4423 = vst [vmem:[%s197 + $0x2c8] sm:$0xff] %v4312
      %4424 = vst [vmem:[%s197 + $0x2d0] sm:$0xff] %v4314
      %4425 = vst [vmem:[%s197 + $0x2d8] sm:$0xff] %v4316
      %4426 = vst [vmem:[%s197 + $0x2e0] sm:$0xff] %v4318
      %4427 = vst [vmem:[%s197 + $0x2e8] sm:$0xff] %v4320
      %4428 = vst [vmem:[%s197 + $0x2f0] sm:$0xff] %v4322
      %4429 = vst [vmem:[%s197 + $0x2f8] sm:$0xff] %v4324
      %4430 = vst [vmem:[%s197 + $0x300] sm:$0xff] %v4326
      %4431 = vst [vmem:[%s197 + $0x308] sm:$0xff] %v4328
      %4432 = vst [vmem:[%s197 + $0x310] sm:$0xff] %v4330
      %4433 = vst [vmem:[%s197 + $0x318] sm:$0xff] %v4332
      %s4434 = scalar_lea.vmem %s197, 800
      %4435 = vst [vmem:[%s4434] sm:$0xff] %v4135
      %4436 = vst [vmem:[%s4434 + $0x8] sm:$0xff] %v4137
      %4437 = vst [vmem:[%s4434 + $0x10] sm:$0xff] %v4139
      %4438 = vst [vmem:[%s4434 + $0x18] sm:$0xff] %v4141
      %4439 = vst [vmem:[%s4434 + $0x20] sm:$0xff] %v4143
      %4440 = vst [vmem:[%s4434 + $0x28] sm:$0xff] %v4145
      %4441 = vst [vmem:[%s4434 + $0x30] sm:$0xff] %v4147
      %4442 = vst [vmem:[%s4434 + $0x38] sm:$0xff] %v4149
      %4443 = vst [vmem:[%s4434 + $0x40] sm:$0xff] %v4151
      %4444 = vst [vmem:[%s4434 + $0x48] sm:$0xff] %v4153
      %4445 = vst [vmem:[%s4434 + $0x50] sm:$0xff] %v4155
      %4446 = vst [vmem:[%s4434 + $0x58] sm:$0xff] %v4157
      %4447 = vst [vmem:[%s4434 + $0x60] sm:$0xff] %v4159
      %4448 = vst [vmem:[%s4434 + $0x68] sm:$0xff] %v4161
      %4449 = vst [vmem:[%s4434 + $0x70] sm:$0xff] %v4163
      %4450 = vst [vmem:[%s4434 + $0x78] sm:$0xff] %v4165
      %4451 = vst [vmem:[%s4434 + $0x80] sm:$0xff] %v4167
      %4452 = vst [vmem:[%s4434 + $0x88] sm:$0xff] %v4169
      %4453 = vst [vmem:[%s4434 + $0x90] sm:$0xff] %v4171
      %4454 = vst [vmem:[%s4434 + $0x98] sm:$0xff] %v4173
      %4455 = vst [vmem:[%s4434 + $0xa0] sm:$0xff] %v4175
      %4456 = vst [vmem:[%s4434 + $0xa8] sm:$0xff] %v4177
      %4457 = vst [vmem:[%s4434 + $0xb0] sm:$0xff] %v4179
      %4458 = vst [vmem:[%s4434 + $0xb8] sm:$0xff] %v4181
      %4459 = vst [vmem:[%s4434 + $0xc0] sm:$0xff] %v4183
      %4460 = vst [vmem:[%s4434 + $0xc8] sm:$0xff] %v4185
      %4461 = vst [vmem:[%s4434 + $0xd0] sm:$0xff] %v4187
      %4462 = vst [vmem:[%s4434 + $0xd8] sm:$0xff] %v4189
      %4463 = vst [vmem:[%s4434 + $0xe0] sm:$0xff] %v4191
      %4464 = vst [vmem:[%s4434 + $0xe8] sm:$0xff] %v4193
      %4465 = vst [vmem:[%s4434 + $0xf0] sm:$0xff] %v4195
      %4466 = vst [vmem:[%s4434 + $0xf8] sm:$0xff] %v4197
      %4467 = vst [vmem:[%s4434 + $0x100] sm:$0xff] %v4199
      %4468 = vst [vmem:[%s4434 + $0x108] sm:$0xff] %v4201
      %4469 = vst [vmem:[%s4434 + $0x110] sm:$0xff] %v4203
      %4470 = vst [vmem:[%s4434 + $0x118] sm:$0xff] %v4205
      %4471 = vst [vmem:[%s4434 + $0x120] sm:$0xff] %v4207
      %4472 = vst [vmem:[%s4434 + $0x128] sm:$0xff] %v4209
      %4473 = vst [vmem:[%s4434 + $0x130] sm:$0xff] %v4211
      %4474 = vst [vmem:[%s4434 + $0x138] sm:$0xff] %v4213
      %4475 = vst [vmem:[%s4434 + $0x140] sm:$0xff] %v4215
      %4476 = vst [vmem:[%s4434 + $0x148] sm:$0xff] %v4217
      %4477 = vst [vmem:[%s4434 + $0x150] sm:$0xff] %v4219
      %4478 = vst [vmem:[%s4434 + $0x158] sm:$0xff] %v4221
      %4479 = vst [vmem:[%s4434 + $0x160] sm:$0xff] %v4223
      %4480 = vst [vmem:[%s4434 + $0x168] sm:$0xff] %v4225
      %4481 = vst [vmem:[%s4434 + $0x170] sm:$0xff] %v4227
      %4482 = vst [vmem:[%s4434 + $0x178] sm:$0xff] %v4229
      %4483 = vst [vmem:[%s4434 + $0x180] sm:$0xff] %v4231
      %4484 = vst [vmem:[%s4434 + $0x188] sm:$0xff] %v4233
      %4485 = vst [vmem:[%s4434 + $0x190] sm:$0xff] %v4235
      %4486 = vst [vmem:[%s4434 + $0x198] sm:$0xff] %v4237
      %4487 = vst [vmem:[%s4434 + $0x1a0] sm:$0xff] %v4239
      %4488 = vst [vmem:[%s4434 + $0x1a8] sm:$0xff] %v4241
      %4489 = vst [vmem:[%s4434 + $0x1b0] sm:$0xff] %v4243
      %4490 = vst [vmem:[%s4434 + $0x1b8] sm:$0xff] %v4245
      %4491 = vst [vmem:[%s4434 + $0x1c0] sm:$0xff] %v4247
      %4492 = vst [vmem:[%s4434 + $0x1c8] sm:$0xff] %v4249
      %4493 = vst [vmem:[%s4434 + $0x1d0] sm:$0xff] %v4251
      %4494 = vst [vmem:[%s4434 + $0x1d8] sm:$0xff] %v4253
      %4495 = vst [vmem:[%s4434 + $0x1e0] sm:$0xff] %v4255
      %4496 = vst [vmem:[%s4434 + $0x1e8] sm:$0xff] %v4257
      %4497 = vst [vmem:[%s4434 + $0x1f0] sm:$0xff] %v4259
      %4498 = vst [vmem:[%s4434 + $0x1f8] sm:$0xff] %v4261
      %4499 = vst [vmem:[%s4434 + $0x200] sm:$0xff] %v4263
      %4500 = vst [vmem:[%s4434 + $0x208] sm:$0xff] %v4265
      %4501 = vst [vmem:[%s4434 + $0x210] sm:$0xff] %v4267
      %4502 = vst [vmem:[%s4434 + $0x218] sm:$0xff] %v4269
      %4503 = vst [vmem:[%s4434 + $0x220] sm:$0xff] %v4271
      %4504 = vst [vmem:[%s4434 + $0x228] sm:$0xff] %v4273
      %4505 = vst [vmem:[%s4434 + $0x230] sm:$0xff] %v4275
      %4506 = vst [vmem:[%s4434 + $0x238] sm:$0xff] %v4277
      %4507 = vst [vmem:[%s4434 + $0x240] sm:$0xff] %v4279
      %4508 = vst [vmem:[%s4434 + $0x248] sm:$0xff] %v4281
      %4509 = vst [vmem:[%s4434 + $0x250] sm:$0xff] %v4283
      %4510 = vst [vmem:[%s4434 + $0x258] sm:$0xff] %v4285
      %4511 = vst [vmem:[%s4434 + $0x260] sm:$0xff] %v4287
      %4512 = vst [vmem:[%s4434 + $0x268] sm:$0xff] %v4289
      %4513 = vst [vmem:[%s4434 + $0x270] sm:$0xff] %v4291
      %4514 = vst [vmem:[%s4434 + $0x278] sm:$0xff] %v4293
      %4515 = vst [vmem:[%s4434 + $0x280] sm:$0xff] %v4295
      %4516 = vst [vmem:[%s4434 + $0x288] sm:$0xff] %v4297
      %4517 = vst [vmem:[%s4434 + $0x290] sm:$0xff] %v4299
      %4518 = vst [vmem:[%s4434 + $0x298] sm:$0xff] %v4301
      %4519 = vst [vmem:[%s4434 + $0x2a0] sm:$0xff] %v4303
      %4520 = vst [vmem:[%s4434 + $0x2a8] sm:$0xff] %v4305
      %4521 = vst [vmem:[%s4434 + $0x2b0] sm:$0xff] %v4307
      %4522 = vst [vmem:[%s4434 + $0x2b8] sm:$0xff] %v4309
      %4523 = vst [vmem:[%s4434 + $0x2c0] sm:$0xff] %v4311
      %4524 = vst [vmem:[%s4434 + $0x2c8] sm:$0xff] %v4313
      %4525 = vst [vmem:[%s4434 + $0x2d0] sm:$0xff] %v4315
      %4526 = vst [vmem:[%s4434 + $0x2d8] sm:$0xff] %v4317
      %4527 = vst [vmem:[%s4434 + $0x2e0] sm:$0xff] %v4319
      %4528 = vst [vmem:[%s4434 + $0x2e8] sm:$0xff] %v4321
      %4529 = vst [vmem:[%s4434 + $0x2f0] sm:$0xff] %v4323
      %4530 = vst [vmem:[%s4434 + $0x2f8] sm:$0xff] %v4325
      %4531 = vst [vmem:[%s4434 + $0x300] sm:$0xff] %v4327
      %4532 = vst [vmem:[%s4434 + $0x308] sm:$0xff] %v4329
      %4533 = vst [vmem:[%s4434 + $0x310] sm:$0xff] %v4331
      %4534 = vst [vmem:[%s4434 + $0x318] sm:$0xff] %v4333
      %p4535 = scmp.lt.s32.totalorder %s15, 1
      %s4536 = scalar_select %p4535, %s15, 1
      %s4537 = smul.addr %s4536, 200
      %s4538 = smul.addr %s4537, 8
      %s4539 = scalar_lea.vmem %s4, %s4538
      // Predicated region
      $region37: #{upconv_neck_forward.3} parent=35 // pred_check
        %p4540 = pneg %p122
      $region38: #{upconv_neck_forward.3} parent=35 // pred_check_branch
        %4542 = sbr.rel (%p4540) target = $region40
      $region39: #{upconv_neck_forward.3} parent=35 // pred_region
        _
      $region40: #{upconv_neck_forward.3} parent=35 // pred_fallthru
        _
    $region36: #{upconv_neck_forward.3} parent=5 // pred_fallthru
      _
    %p4543 = scmp.le.s32.totalorder 2, %s10
    // Predicated region
    $region41: #{upconv_neck_forward.3} parent=5 // pred_check
      %p4544 = pneg %p4543
    $region42: #{upconv_neck_forward.3} parent=5 // pred_check_branch
      %4546 = sbr.rel (%p4544) target = $region44
    $region43: #{upconv_neck_forward.3} parent=5 // pred_region
      %s4547 = ssub.s32 %s10, 2
      // Predicated region
      $region45: #{upconv_neck_forward.3} parent=43 // pred_check
        %p4548 = pneg %p128
      $region46: #{upconv_neck_forward.3} parent=43 // pred_check_branch
        %4550 = sbr.rel (%p4548) target = $region48
      $region47: #{upconv_neck_forward.3} parent=43 // pred_region
        %p4551 = scmp.lt.s32.totalorder %s16, 1
        %s4552 = scalar_select %p4551, %s16, 1
        %s4553 = smul.addr %s4552, 200
        %s4554 = smul.addr %s4553, 8
        %s4555 = scalar_lea.vmem %s4, %s4554
      $region48: #{upconv_neck_forward.3} parent=43 // pred_fallthru
        _
    $region44: #{upconv_neck_forward.3} parent=5 // pred_fallthru
      _
  $region6: #{upconv_neck_forward.3} parent=0 // loop_footer
    %s14 = sadd.s32 1, %s10
  $region7: #{upconv_neck_forward.3} parent=0 // loop_footer_branch
    %9 = sbr.rel target = $region3
  $region8: #{upconv_neck_forward.3} parent=0 // loop_exit
    _

</llo_original>
